<compile_context>
chip_gen: v6e
topology: v6e:2x2x1
jax: 0.10.0
libtpu: 0.0.40
codegen_flags: <defaults>
</compile_context>

<pallas_src>
import math

import jax
import jax.numpy as jnp
from jax.experimental import pallas as pl
from jax.experimental.pallas import tpu as pltpu

EPS = 1e-5
F32 = jnp.float32
BF16 = jnp.bfloat16


def _layernorm(x, gamma, beta):
    mu = jnp.mean(x, axis=-1, keepdims=True)
    xc = x - mu
    var = jnp.mean(xc * xc, axis=-1, keepdims=True)
    return xc * jax.lax.rsqrt(var + EPS) * gamma + beta


def _dot(a, b):
    return jnp.dot(a, b, preferred_element_type=jnp.float32)


def _dot_t(a, b):
    # Contract axis 0 of both operands: [E, N] x [E, X] -> [N, X].
    # Transposed-LHS matmul (scatter-add) without materializing onehot^T.
    return jax.lax.dot_general(a, b, (((0,), (0,)), ((), ())),
                               preferred_element_type=jnp.float32)


# --------------------------------------------------------------------------------------
# Fused kernel: grid = (phase, edge_block)
# --------------------------------------------------------------------------------------
def fused_layer_kernel(
        # edge-tiled inputs (streamed once per phase)
        i_col_ref, j_col_ref, edge_attr_ref, edge_len_ref,
        # node-resident inputs
        h_ref, v_ref,
        # constant 0/1 matrices (exact)
        head_pool_ref, head_expand_ref, head_expand3_ref, fold3_ref, rep3_ref,
        # layernorm params
        g1_ref, b1_ref, g2_ref, b2_ref, gn_ref, bn_ref,
        # attention params
        wq_ref, bq_ref, wk_ref, bk_ref, wvh_ref, bvh_ref,
        wvv3_ref, woh_ref, wov3_ref,
        we1_ref, be1_ref, we2_ref, be2_ref,
        # feedforward params
        w1_3_ref, w2_3_ref,
        wf1ah_ref, wf1av_ref, bf1a_ref, wf1b_ref, bf1b_ref,
        wf2ah_ref, wf2av_ref, bf2a_ref, wf2b_ref, bf2b_ref,
        # outputs
        h_out_ref, v_out_ref,
        # scratch (persists across the whole grid)
        qn_s, kn_s, vhn_s, vvn_s, m_s, denom_s, acch_s, accv_s, score_s):

    phase = pl.program_id(0)
    eb = pl.program_id(1)
    n_eb = pl.num_programs(1)

    N, dim = h_ref.shape
    EB = i_col_ref.shape[0]
    H = denom_s.shape[1]
    d_k = dim // H

    # One-hot gather/scatter matrices for this edge block (exact in bf16).
    iota_en = jax.lax.broadcasted_iota(jnp.int32, (EB, N), 1)
    onehot_i_b = (iota_en == i_col_ref[...]).astype(BF16)        # gather by source i
    onehot_j_bool = iota_en == j_col_ref[...]                    # gather/scatter by dest j
    onehot_j_b = onehot_j_bool.astype(BF16)
    onehot_j_f = onehot_j_bool.astype(F32)

    off = pl.multiple_of(eb * EB, EB)

    # ---------------- one-time node projections + accumulator init --------------------
    @pl.when(jnp.logical_and(phase == 0, eb == 0))
    def _init():
        hn = _layernorm(h_ref[...], g1_ref[...], b1_ref[...])
        hn_b = hn.astype(BF16)
        qn_s[...] = (_dot(hn_b, wq_ref[...]) + bq_ref[...]).astype(BF16)
        kn_s[...] = (_dot(hn_b, wk_ref[...]) + bk_ref[...]).astype(BF16)
        vhn_s[...] = (_dot(hn_b, wvh_ref[...]) + bvh_ref[...]).astype(BF16)
        vvn_s[...] = _dot(v_ref[...].astype(BF16), wvv3_ref[...]).astype(BF16)
        m_s[...] = jnp.full(m_s.shape, -1e30, F32)
        denom_s[...] = jnp.zeros(denom_s.shape, F32)
        acch_s[...] = jnp.zeros(acch_s.shape, F32)
        accv_s[...] = jnp.zeros(accv_s.shape, F32)

    # ---------------- phase 0: per-head scores (cached) + shared per-node max ---------
    @pl.when(phase == 0)
    def _max_pass():
        q_e = _dot(onehot_j_b, qn_s[...])                        # [EB, dim]  f32
        k_e = _dot(onehot_i_b, kn_s[...])                        # [EB, dim]  f32
        z = jax.nn.silu(_dot(edge_attr_ref[...].astype(BF16), we1_ref[...]) + be1_ref[...])
        ebias = _dot(z.astype(BF16), we2_ref[...]) + be2_ref[...]            # [EB, H]
        scores = _dot(q_e * k_e, head_pool_ref[...]) * (1.0 / math.sqrt(d_k))
        scores = scores - edge_len_ref[...] + ebias                          # [EB, H]
        score_s[pl.ds(off, EB), :] = scores

        smax_e = jnp.max(scores, axis=1, keepdims=True)                      # [EB, 1]
        masked = jnp.where(onehot_j_bool, jnp.broadcast_to(smax_e, (EB, N)), -1e30)
        m_s[...] = jnp.maximum(m_s[...], jnp.max(masked, axis=0, keepdims=True))

    # ---------------- phase 1: exp-weighted scatter sums + denominators ---------------
    @pl.when(phase == 1)
    def _acc_pass():
        scores = score_s[pl.ds(off, EB), :]                                  # [EB, H]
        m_e = jnp.sum(onehot_j_f * m_s[...], axis=1, keepdims=True)          # [EB, 1]
        pexp = jnp.exp(scores - m_e)                                         # [EB, H] f32

        denom_s[...] += _dot_t(onehot_j_f, pexp)                             # [N, H] f32

        vh_e = _dot(onehot_i_b, vhn_s[...])                                  # [EB, dim]
        vv_e = _dot(onehot_i_b, vvn_s[...])                                  # [EB, 3*dim]
        p_d = _dot(pexp, head_expand_ref[...])                               # [EB, dim]
        p_3d = _dot(pexp, head_expand3_ref[...])                             # [EB, 3*dim]

        acch_s[...] += _dot_t(onehot_j_b, (p_d * vh_e).astype(BF16))         # [N, dim]
        accv_s[...] += _dot_t(onehot_j_b, (p_3d * vv_e).astype(BF16))        # [N, 3*dim]

    # ---------------- finalize: normalize, project, residual, feedforward -------------
    @pl.when(jnp.logical_and(phase == 1, eb == n_eb - 1))
    def _finalize():
        h = h_ref[...]
        v = v_ref[...]

        denom = denom_s[...]
        inv = pl.reciprocal(jnp.where(denom > 0.0, denom, 1.0), approx=True)  # [N, H]
        h_agg = acch_s[...] * _dot(inv, head_expand_ref[...])                 # [N, dim]
        v_agg = accv_s[...] * _dot(inv, head_expand3_ref[...])                # [N, 3*dim]

        h1 = h + _dot(h_agg.astype(BF16), woh_ref[...])
        v1 = v + _dot(v_agg.astype(BF16), wov3_ref[...])

        # equivariant feedforward
        hn2 = _layernorm(h1, g2_ref[...], b2_ref[...])
        hn2_b = hn2.astype(BF16)
        v1_b = v1.astype(BF16)
        v1p = _dot(v1_b, w1_3_ref[...])                                       # [N, 3*dim]
        v2p = _dot(v1_b, w2_3_ref[...])                                       # [N, 3*dim]
        v1n = jnp.sqrt(_dot(v1p * v1p, fold3_ref[...]))                       # [N, dim]
        v1n_b = v1n.astype(BF16)

        z1 = jax.nn.silu(_dot(hn2_b, wf1ah_ref[...]) + _dot(v1n_b, wf1av_ref[...])
                         + bf1a_ref[...])
        dh2 = _dot(z1.astype(BF16), wf1b_ref[...]) + bf1b_ref[...]
        z2 = jax.nn.silu(_dot(hn2_b, wf2ah_ref[...]) + _dot(v1n_b, wf2av_ref[...])
                         + bf2a_ref[...])
        u = _dot(z2.astype(BF16), wf2b_ref[...]) + bf2b_ref[...]
        un3 = _dot(_layernorm(u, gn_ref[...], bn_ref[...]), rep3_ref[...])    # [N, 3*dim]

        h_out_ref[...] = h1 + dh2
        v_out_ref[...] = v1 + un3 * v2p


# --------------------------------------------------------------------------------------
# Wrapper
# --------------------------------------------------------------------------------------
def equivariant_transformer_layer(h, v3, edge_i, edge_j, edge_attr, edge_len, params,
                                  *, edge_block=32):
    N, dim = h.shape
    H = params["we2"].shape[1]
    edge_dim = params["we1"].shape[0]
    ff_dim = params["wf1b"].shape[0]
    d_k = dim // H
    E = edge_i.shape[0]

    EB = edge_block
    n_eb = max(1, -(-E // EB))
    E_pad = n_eb * EB
    pad = E_pad - E

    # Padded edges: destination index N (out of range -> all-zero one-hot row,
    # contributes nothing) and a huge edge length so exp(score) underflows to 0.
    i_col = jnp.pad(edge_i.astype(jnp.int32), (0, pad)).reshape(E_pad, 1)
    j_col = jnp.pad(edge_j.astype(jnp.int32), (0, pad), constant_values=N).reshape(E_pad, 1)
    ea = jnp.pad(edge_attr.astype(F32), ((0, pad), (0, 0)))
    el = jnp.pad(edge_len.reshape(E, 1).astype(F32), ((0, pad), (0, 0)),
                 constant_values=1e9)

    # vector features -> lane-dense [N, 3*dim], component-major blocks
    vflat = jnp.transpose(v3, (1, 0, 2)).reshape(N, 3 * dim).astype(F32)

    # constant 0/1 matrices (exact)
    head_expand = (jnp.arange(dim)[None, :] // d_k == jnp.arange(H)[:, None]).astype(F32)
    head_pool = head_expand.T                       # [dim, H]
    head_expand3 = jnp.tile(head_expand, (1, 3))    # [H, 3*dim]
    eye_d = jnp.eye(dim, dtype=F32)
    fold3 = jnp.tile(eye_d, (3, 1))                 # [3*dim, dim] : sum over components
    rep3 = jnp.tile(eye_d, (1, 3))                  # [dim, 3*dim] : replicate over components

    eye3 = jnp.eye(3, dtype=F32)
    bd = lambda w: jnp.kron(eye3, w.astype(F32)).astype(BF16)   # block-diag [3dim, 3dim]

    p = params
    inputs = (
        i_col, j_col, ea, el,
        h.astype(F32), vflat,
        head_pool, head_expand, head_expand3, fold3, rep3,
        p["g1"], p["b1"], p["g2"], p["b2"], p["gn"], p["bn"],
        p["wq"].astype(BF16), p["bq"], p["wk"].astype(BF16), p["bk"],
        p["wvh"].astype(BF16), p["bvh"],
        bd(p["wvv"]), p["woh"].astype(BF16), bd(p["wov"]),
        p["we1"].astype(BF16), p["be1"], p["we2"].astype(BF16), p["be2"],
        bd(p["w1"]), bd(p["w2"]),
        p["wf1ah"].astype(BF16), p["wf1av"].astype(BF16), p["bf1a"],
        p["wf1b"].astype(BF16), p["bf1b"],
        p["wf2ah"].astype(BF16), p["wf2av"].astype(BF16), p["bf2a"],
        p["wf2b"].astype(BF16), p["bf2b"],
    )

    def edge_spec(width):
        return pl.BlockSpec((EB, width), lambda ph, e: (e, 0))

    def full_spec(arr):
        return pl.BlockSpec(arr.shape, lambda ph, e: (0,) * arr.ndim)

    in_specs = [edge_spec(1), edge_spec(1), edge_spec(edge_dim), edge_spec(1)]
    in_specs += [full_spec(x) for x in inputs[4:]]

    out_shape = (jax.ShapeDtypeStruct((N, dim), F32),
                 jax.ShapeDtypeStruct((N, 3 * dim), F32))
    out_specs = (pl.BlockSpec((N, dim), lambda ph, e: (0, 0)),
                 pl.BlockSpec((N, 3 * dim), lambda ph, e: (0, 0)))

    scratch_shapes = [
        pltpu.VMEM((N, dim), BF16),        # q_n
        pltpu.VMEM((N, dim), BF16),        # k_n
        pltpu.VMEM((N, dim), BF16),        # vh_n
        pltpu.VMEM((N, 3 * dim), BF16),    # vv_n
        pltpu.VMEM((1, N), F32),           # running per-node max (shared over heads)
        pltpu.VMEM((N, H), F32),           # softmax denominators
        pltpu.VMEM((N, dim), F32),         # scalar-channel accumulator
        pltpu.VMEM((N, 3 * dim), F32),     # vector-channel accumulator
        pltpu.VMEM((E_pad, H), F32),       # cached per-edge, per-head scores
    ]

    grid_spec = pltpu.PrefetchScalarGridSpec(
        num_scalar_prefetch=0,
        grid=(2, n_eb),                    # (phase: max / accumulate, edge block)
        in_specs=in_specs,
        out_specs=out_specs,
        scratch_shapes=scratch_shapes,
    )

    flops = int(2 * E_pad * N * (10 * dim + H)
                + 2 * E_pad * (dim * H + edge_dim * (edge_dim + H) + 4 * dim * H)
                + 8 * N * dim * dim + 72 * N * dim * dim
                + 12 * N * dim * ff_dim)
    bytes_accessed = int(sum(x.size * x.dtype.itemsize for x in inputs)
                         + E_pad * (edge_dim + 3) * 4        # edges streamed twice
                         + N * dim * 4 + N * 3 * dim * 4)
    transcendentals = int(E_pad * H + 2 * N * ff_dim + E_pad * edge_dim)

    fused = pl.pallas_call(
        fused_layer_kernel,
        out_shape=out_shape,
        grid_spec=grid_spec,
        compiler_params=pltpu.CompilerParams(
            dimension_semantics=("arbitrary", "arbitrary"),
            vmem_limit_bytes=48 * 1024 * 1024),   # sized for v7x's 64 MiB / TensorCore
        cost_estimate=pl.CostEstimate(flops=flops,
                                      transcendentals=transcendentals,
                                      bytes_accessed=bytes_accessed),
    )
    h_out, v_out_flat = fused(*inputs)
    v_out = jnp.transpose(v_out_flat.reshape(N, 3, dim), (1, 0, 2))
    return h_out, v_out


# --------------------------------------------------------------------------------------
# Parameters
# --------------------------------------------------------------------------------------
def make_params(key, dim, num_heads, ff_dim, edge_dim):
    ks = iter(jax.random.split(key, 32))

    def w(shape, scale=0.2):
        return (scale * jax.random.normal(next(ks), shape)).astype(jnp.float32)

    f32 = jnp.float32
    return {
        # norm1 / norm2 / ff-internal norm
        "g1": jnp.ones((1, dim), f32), "b1": jnp.zeros((1, dim), f32),
        "g2": jnp.ones((1, dim), f32), "b2": jnp.zeros((1, dim), f32),
        "gn": jnp.ones((1, dim), f32), "bn": jnp.zeros((1, dim), f32),
        # attention projections (stored as [in, out])
        "wq": w((dim, dim)), "bq": w((1, dim), 0.05),
        "wk": w((dim, dim)), "bk": w((1, dim), 0.05),
        "wvh": w((dim, dim)), "bvh": w((1, dim), 0.05),
        "wvv": w((dim, dim)), "woh": w((dim, dim)), "wov": w((dim, dim)),
        # edge bias MLP: edge_dim -> edge_dim -> num_heads
        "we1": w((edge_dim, edge_dim)), "be1": w((1, edge_dim), 0.05),
        "we2": w((edge_dim, num_heads)), "be2": w((1, num_heads), 0.05),
        # feedforward
        "w1": w((dim, dim)), "w2": w((dim, dim)),
        "wf1ah": w((dim, ff_dim)), "wf1av": w((dim, ff_dim)),
        "bf1a": w((1, ff_dim), 0.05),
        "wf1b": w((ff_dim, dim)), "bf1b": w((1, dim), 0.05),
        "wf2ah": w((dim, ff_dim)), "wf2av": w((dim, ff_dim)),
        "bf2a": w((1, ff_dim), 0.05),
        "wf2b": w((ff_dim, dim)), "bf2b": w((1, dim), 0.05),
    }


if __name__ == "__main__":
    dim, num_heads, ff_dim, edge_dim = 32, 4, 64, 16
    N, E = 8, 64

    key = jax.random.PRNGKey(0)
    k_h, k_v, k_ea, k_el, k_i, k_j, k_p = jax.random.split(key, 7)

    h = jax.random.normal(k_h, (N, dim), jnp.float32)
    v3 = jax.random.normal(k_v, (3, N, dim), jnp.float32)      # [3, N, dim]
    edge_attr = jax.random.normal(k_ea, (E, edge_dim), jnp.float32)
    edge_len = jax.random.uniform(k_el, (E, 1), jnp.float32, 0.5, 3.0)
    edge_i = jax.random.randint(k_i, (E,), 0, N, jnp.int32)    # source nodes
    edge_j = jax.random.randint(k_j, (E,), 0, N, jnp.int32)    # destination nodes

    params = make_params(k_p, dim, num_heads, ff_dim, edge_dim)

    fn = jax.jit(lambda *a: equivariant_transformer_layer(*a, params))
    h_out, v_out = fn(h, v3, edge_i, edge_j, edge_attr, edge_len)
    jax.block_until_ready((h_out, v_out))

    assert h_out.shape == (N, dim) and v_out.shape == (3, N, dim)
    assert bool(jnp.all(jnp.isfinite(h_out))) and bool(jnp.all(jnp.isfinite(v_out)))
    print("KERNEL_OK")
</pallas_src>

<mosaic_0001>
module attributes {stable_mosaic.version = 11 : i64} {
  func.func @fused_layer_kernel(%arg0: i32, %arg1: i32, %arg2: memref<32x1xi32, #tpu.memory_space<vmem>>, %arg3: memref<32x1xi32, #tpu.memory_space<vmem>>, %arg4: memref<32x16xf32, #tpu.memory_space<vmem>>, %arg5: memref<32x1xf32, #tpu.memory_space<vmem>>, %arg6: memref<8x32xf32, #tpu.memory_space<vmem>>, %arg7: memref<8x96xf32, #tpu.memory_space<vmem>>, %arg8: memref<32x4xf32, #tpu.memory_space<vmem>>, %arg9: memref<4x32xf32, #tpu.memory_space<vmem>>, %arg10: memref<4x96xf32, #tpu.memory_space<vmem>>, %arg11: memref<96x32xf32, #tpu.memory_space<vmem>>, %arg12: memref<32x96xf32, #tpu.memory_space<vmem>>, %arg13: memref<1x32xf32, #tpu.memory_space<vmem>>, %arg14: memref<1x32xf32, #tpu.memory_space<vmem>>, %arg15: memref<1x32xf32, #tpu.memory_space<vmem>>, %arg16: memref<1x32xf32, #tpu.memory_space<vmem>>, %arg17: memref<1x32xf32, #tpu.memory_space<vmem>>, %arg18: memref<1x32xf32, #tpu.memory_space<vmem>>, %arg19: memref<32x32xbf16, #tpu.memory_space<vmem>>, %arg20: memref<1x32xf32, #tpu.memory_space<vmem>>, %arg21: memref<32x32xbf16, #tpu.memory_space<vmem>>, %arg22: memref<1x32xf32, #tpu.memory_space<vmem>>, %arg23: memref<32x32xbf16, #tpu.memory_space<vmem>>, %arg24: memref<1x32xf32, #tpu.memory_space<vmem>>, %arg25: memref<96x96xbf16, #tpu.memory_space<vmem>>, %arg26: memref<32x32xbf16, #tpu.memory_space<vmem>>, %arg27: memref<96x96xbf16, #tpu.memory_space<vmem>>, %arg28: memref<16x16xbf16, #tpu.memory_space<vmem>>, %arg29: memref<1x16xf32, #tpu.memory_space<vmem>>, %arg30: memref<16x4xbf16, #tpu.memory_space<vmem>>, %arg31: memref<1x4xf32, #tpu.memory_space<vmem>>, %arg32: memref<96x96xbf16, #tpu.memory_space<vmem>>, %arg33: memref<96x96xbf16, #tpu.memory_space<vmem>>, %arg34: memref<32x64xbf16, #tpu.memory_space<vmem>>, %arg35: memref<32x64xbf16, #tpu.memory_space<vmem>>, %arg36: memref<1x64xf32, #tpu.memory_space<vmem>>, %arg37: memref<64x32xbf16, #tpu.memory_space<vmem>>, %arg38: memref<1x32xf32, #tpu.memory_space<vmem>>, %arg39: memref<32x64xbf16, #tpu.memory_space<vmem>>, %arg40: memref<32x64xbf16, #tpu.memory_space<vmem>>, %arg41: memref<1x64xf32, #tpu.memory_space<vmem>>, %arg42: memref<64x32xbf16, #tpu.memory_space<vmem>>, %arg43: memref<1x32xf32, #tpu.memory_space<vmem>>, %arg44: memref<8x32xf32, #tpu.memory_space<vmem>>, %arg45: memref<8x96xf32, #tpu.memory_space<vmem>>, %arg46: memref<8x32xbf16, #tpu.memory_space<vmem>>, %arg47: memref<8x32xbf16, #tpu.memory_space<vmem>>, %arg48: memref<8x32xbf16, #tpu.memory_space<vmem>>, %arg49: memref<8x96xbf16, #tpu.memory_space<vmem>>, %arg50: memref<1x8xf32, #tpu.memory_space<vmem>>, %arg51: memref<8x4xf32, #tpu.memory_space<vmem>>, %arg52: memref<8x32xf32, #tpu.memory_space<vmem>>, %arg53: memref<8x96xf32, #tpu.memory_space<vmem>>, %arg54: memref<64x4xf32, #tpu.memory_space<vmem>>) attributes {dimension_semantics = [#tpu.dimension_semantics<arbitrary>, #tpu.dimension_semantics<arbitrary>], iteration_bounds = array<i64: 2, 2>, scalar_prefetch = 0 : i64, scratch_operands = 9 : i64, tpu.core_type = #tpu.core_type<tc>, window_params = [{transform_indices = @transform_0, window_bounds = array<i64: 32, 1>}, {transform_indices = @transform_1, window_bounds = array<i64: 32, 1>}, {transform_indices = @transform_2, window_bounds = array<i64: 32, 16>}, {transform_indices = @transform_3, window_bounds = array<i64: 32, 1>}, {pipeline_mode = #tpu.pipeline_mode<synchronous>, transform_indices = @transform_4, window_bounds = array<i64: 8, 32>}, {pipeline_mode = #tpu.pipeline_mode<synchronous>, transform_indices = @transform_5, window_bounds = array<i64: 8, 96>}, {pipeline_mode = #tpu.pipeline_mode<synchronous>, transform_indices = @transform_6, window_bounds = array<i64: 32, 4>}, {pipeline_mode = #tpu.pipeline_mode<synchronous>, transform_indices = @transform_7, window_bounds = array<i64: 4, 32>}, {pipeline_mode = #tpu.pipeline_mode<synchronous>, transform_indices = @transform_8, window_bounds = array<i64: 4, 96>}, {pipeline_mode = #tpu.pipeline_mode<synchronous>, transform_indices = @transform_9, window_bounds = array<i64: 96, 32>}, {pipeline_mode = #tpu.pipeline_mode<synchronous>, transform_indices = @transform_10, window_bounds = array<i64: 32, 96>}, {pipeline_mode = #tpu.pipeline_mode<synchronous>, transform_indices = @transform_11, window_bounds = array<i64: 1, 32>}, {pipeline_mode = #tpu.pipeline_mode<synchronous>, transform_indices = @transform_12, window_bounds = array<i64: 1, 32>}, {pipeline_mode = #tpu.pipeline_mode<synchronous>, transform_indices = @transform_13, window_bounds = array<i64: 1, 32>}, {pipeline_mode = #tpu.pipeline_mode<synchronous>, transform_indices = @transform_14, window_bounds = array<i64: 1, 32>}, {pipeline_mode = #tpu.pipeline_mode<synchronous>, transform_indices = @transform_15, window_bounds = array<i64: 1, 32>}, {pipeline_mode = #tpu.pipeline_mode<synchronous>, transform_indices = @transform_16, window_bounds = array<i64: 1, 32>}, {pipeline_mode = #tpu.pipeline_mode<synchronous>, transform_indices = @transform_17, window_bounds = array<i64: 32, 32>}, {pipeline_mode = #tpu.pipeline_mode<synchronous>, transform_indices = @transform_18, window_bounds = array<i64: 1, 32>}, {pipeline_mode = #tpu.pipeline_mode<synchronous>, transform_indices = @transform_19, window_bounds = array<i64: 32, 32>}, {pipeline_mode = #tpu.pipeline_mode<synchronous>, transform_indices = @transform_20, window_bounds = array<i64: 1, 32>}, {pipeline_mode = #tpu.pipeline_mode<synchronous>, transform_indices = @transform_21, window_bounds = array<i64: 32, 32>}, {pipeline_mode = #tpu.pipeline_mode<synchronous>, transform_indices = @transform_22, window_bounds = array<i64: 1, 32>}, {pipeline_mode = #tpu.pipeline_mode<synchronous>, transform_indices = @transform_23, window_bounds = array<i64: 96, 96>}, {pipeline_mode = #tpu.pipeline_mode<synchronous>, transform_indices = @transform_24, window_bounds = array<i64: 32, 32>}, {pipeline_mode = #tpu.pipeline_mode<synchronous>, transform_indices = @transform_25, window_bounds = array<i64: 96, 96>}, {pipeline_mode = #tpu.pipeline_mode<synchronous>, transform_indices = @transform_26, window_bounds = array<i64: 16, 16>}, {pipeline_mode = #tpu.pipeline_mode<synchronous>, transform_indices = @transform_27, window_bounds = array<i64: 1, 16>}, {pipeline_mode = #tpu.pipeline_mode<synchronous>, transform_indices = @transform_28, window_bounds = array<i64: 16, 4>}, {pipeline_mode = #tpu.pipeline_mode<synchronous>, transform_indices = @transform_29, window_bounds = array<i64: 1, 4>}, {pipeline_mode = #tpu.pipeline_mode<synchronous>, transform_indices = @transform_30, window_bounds = array<i64: 96, 96>}, {pipeline_mode = #tpu.pipeline_mode<synchronous>, transform_indices = @transform_31, window_bounds = array<i64: 96, 96>}, {pipeline_mode = #tpu.pipeline_mode<synchronous>, transform_indices = @transform_32, window_bounds = array<i64: 32, 64>}, {pipeline_mode = #tpu.pipeline_mode<synchronous>, transform_indices = @transform_33, window_bounds = array<i64: 32, 64>}, {pipeline_mode = #tpu.pipeline_mode<synchronous>, transform_indices = @transform_34, window_bounds = array<i64: 1, 64>}, {pipeline_mode = #tpu.pipeline_mode<synchronous>, transform_indices = @transform_35, window_bounds = array<i64: 64, 32>}, {pipeline_mode = #tpu.pipeline_mode<synchronous>, transform_indices = @transform_36, window_bounds = array<i64: 1, 32>}, {pipeline_mode = #tpu.pipeline_mode<synchronous>, transform_indices = @transform_37, window_bounds = array<i64: 32, 64>}, {pipeline_mode = #tpu.pipeline_mode<synchronous>, transform_indices = @transform_38, window_bounds = array<i64: 32, 64>}, {pipeline_mode = #tpu.pipeline_mode<synchronous>, transform_indices = @transform_39, window_bounds = array<i64: 1, 64>}, {pipeline_mode = #tpu.pipeline_mode<synchronous>, transform_indices = @transform_40, window_bounds = array<i64: 64, 32>}, {pipeline_mode = #tpu.pipeline_mode<synchronous>, transform_indices = @transform_41, window_bounds = array<i64: 1, 32>}, {pipeline_mode = #tpu.pipeline_mode<synchronous>, transform_indices = @transform_42, window_bounds = array<i64: 8, 32>}, {pipeline_mode = #tpu.pipeline_mode<synchronous>, transform_indices = @transform_43, window_bounds = array<i64: 8, 96>}]} {
    %0 = tpu.iota {dimensions = array<i32: 1>} : vector<32x8xi32>
    %c0 = arith.constant 0 : index
    %c0_0 = arith.constant 0 : index
    %1 = vector.load %arg2[%c0, %c0_0] : memref<32x1xi32, #tpu.memory_space<vmem>>, vector<32x1xi32>
    %2 = vector.broadcast %1 : vector<32x1xi32> to vector<32x8xi32>
    %3 = arith.cmpi eq, %0, %2 : vector<32x8xi32>
    %4 = arith.extui %3 : vector<32x8xi1> to vector<32x8xi32>
    %5 = arith.sitofp %4 : vector<32x8xi32> to vector<32x8xf32>
    %6 = arith.truncf %5 : vector<32x8xf32> to vector<32x8xbf16>
    %c0_1 = arith.constant 0 : index
    %c0_2 = arith.constant 0 : index
    %7 = vector.load %arg3[%c0_1, %c0_2] : memref<32x1xi32, #tpu.memory_space<vmem>>, vector<32x1xi32>
    %8 = vector.broadcast %7 : vector<32x1xi32> to vector<32x8xi32>
    %9 = arith.cmpi eq, %0, %8 : vector<32x8xi32>
    %10 = arith.extui %9 : vector<32x8xi1> to vector<32x8xi32>
    %11 = arith.sitofp %10 : vector<32x8xi32> to vector<32x8xf32>
    %12 = arith.truncf %11 : vector<32x8xf32> to vector<32x8xbf16>
    %13 = arith.extui %9 : vector<32x8xi1> to vector<32x8xi32>
    %14 = arith.sitofp %13 : vector<32x8xi32> to vector<32x8xf32>
    %c32_i32 = arith.constant 32 : i32
    %15 = arith.muli %arg1, %c32_i32 : i32
    %16 = tpu.assume_multiple %15, 32 : i32
    %c0_i32 = arith.constant 0 : i32
    %17 = arith.cmpi eq, %arg0, %c0_i32 : i32
    %c0_i32_3 = arith.constant 0 : i32
    %18 = arith.cmpi eq, %arg1, %c0_i32_3 : i32
    %19 = arith.andi %17, %18 : i1
    %20 = arith.extui %19 : i1 to i32
    %c0_i32_4 = arith.constant 0 : i32
    %21 = arith.cmpi ne, %20, %c0_i32_4 : i32
    scf.if %21 {
      %c0_11 = arith.constant 0 : index
      %c0_12 = arith.constant 0 : index
      %33 = vector.load %arg6[%c0_11, %c0_12] : memref<8x32xf32, #tpu.memory_space<vmem>>, vector<8x32xf32>
      %c0_13 = arith.constant 0 : index
      %c0_14 = arith.constant 0 : index
      %34 = vector.load %arg13[%c0_13, %c0_14] : memref<1x32xf32, #tpu.memory_space<vmem>>, vector<1x32xf32>
      %c0_15 = arith.constant 0 : index
      %c0_16 = arith.constant 0 : index
      %35 = vector.load %arg14[%c0_15, %c0_16] : memref<1x32xf32, #tpu.memory_space<vmem>>, vector<1x32xf32>
      %cst = arith.constant dense<0.000000e+00> : vector<8xf32>
      %36 = vector.multi_reduction <add>, %33, %cst [1] : vector<8x32xf32> to vector<8xf32>
      %37 = vector.shape_cast %36 : vector<8xf32> to vector<8x1xf32>
      %cst_17 = arith.constant 3.200000e+01 : f32
      %38 = vector.broadcast %cst_17 : f32 to vector<8x1xf32>
      %39 = arith.divf %37, %38 : vector<8x1xf32>
      %40 = vector.broadcast %39 : vector<8x1xf32> to vector<8x32xf32>
      %41 = arith.subf %33, %40 : vector<8x32xf32>
      %42 = arith.mulf %41, %41 : vector<8x32xf32>
      %cst_18 = arith.constant dense<0.000000e+00> : vector<8xf32>
      %43 = vector.multi_reduction <add>, %42, %cst_18 [1] : vector<8x32xf32> to vector<8xf32>
      %44 = vector.shape_cast %43 : vector<8xf32> to vector<8x1xf32>
      %cst_19 = arith.constant 3.200000e+01 : f32
      %45 = vector.broadcast %cst_19 : f32 to vector<8x1xf32>
      %46 = arith.divf %44, %45 : vector<8x1xf32>
      %cst_20 = arith.constant 9.99999974E-6 : f32
      %47 = vector.broadcast %cst_20 : f32 to vector<8x1xf32>
      %48 = arith.addf %46, %47 : vector<8x1xf32>
      %49 = math.rsqrt %48 : vector<8x1xf32>
      %50 = vector.broadcast %49 : vector<8x1xf32> to vector<8x32xf32>
      %51 = arith.mulf %41, %50 : vector<8x32xf32>
      %52 = vector.broadcast %34 : vector<1x32xf32> to vector<8x32xf32>
      %53 = arith.mulf %51, %52 : vector<8x32xf32>
      %54 = vector.broadcast %35 : vector<1x32xf32> to vector<8x32xf32>
      %55 = arith.addf %53, %54 : vector<8x32xf32>
      %56 = arith.truncf %55 : vector<8x32xf32> to vector<8x32xbf16>
      %c0_21 = arith.constant 0 : index
      %c0_22 = arith.constant 0 : index
      %57 = vector.load %arg19[%c0_21, %c0_22] : memref<32x32xbf16, #tpu.memory_space<vmem>>, vector<32x32xbf16>
      %cst_23 = arith.constant dense<0.000000e+00> : vector<8x32xf32>
      %58 = tpu.matmul %56, %57, %cst_23 {dimension_numbers = #tpu.dot_dimension_numbers<[1], [0], [0], [1], [0, 0, 1, 1], [], []>} : vector<8x32xbf16>, vector<32x32xbf16>, vector<8x32xf32> -> vector<8x32xf32>
      %c0_24 = arith.constant 0 : index
      %c0_25 = arith.constant 0 : index
      %59 = vector.load %arg20[%c0_24, %c0_25] : memref<1x32xf32, #tpu.memory_space<vmem>>, vector<1x32xf32>
      %60 = vector.broadcast %59 : vector<1x32xf32> to vector<8x32xf32>
      %61 = arith.addf %58, %60 : vector<8x32xf32>
      %62 = arith.truncf %61 : vector<8x32xf32> to vector<8x32xbf16>
      %c0_26 = arith.constant 0 : index
      %c0_27 = arith.constant 0 : index
      %63 = vector.load %arg46[%c0_26, %c0_27] : memref<8x32xbf16, #tpu.memory_space<vmem>>, vector<8x32xbf16>
      tpu.vector_store %arg46[%c0_26, %c0_27], %62 {strides = array<i32>} : memref<8x32xbf16, #tpu.memory_space<vmem>>, vector<8x32xbf16>,
      %c0_28 = arith.constant 0 : index
      %c0_29 = arith.constant 0 : index
      %64 = vector.load %arg21[%c0_28, %c0_29] : memref<32x32xbf16, #tpu.memory_space<vmem>>, vector<32x32xbf16>
      %cst_30 = arith.constant dense<0.000000e+00> : vector<8x32xf32>
      %65 = tpu.matmul %56, %64, %cst_30 {dimension_numbers = #tpu.dot_dimension_numbers<[1], [0], [0], [1], [0, 0, 1, 1], [], []>} : vector<8x32xbf16>, vector<32x32xbf16>, vector<8x32xf32> -> vector<8x32xf32>
      %c0_31 = arith.constant 0 : index
      %c0_32 = arith.constant 0 : index
      %66 = vector.load %arg22[%c0_31, %c0_32] : memref<1x32xf32, #tpu.memory_space<vmem>>, vector<1x32xf32>
      %67 = vector.broadcast %66 : vector<1x32xf32> to vector<8x32xf32>
      %68 = arith.addf %65, %67 : vector<8x32xf32>
      %69 = arith.truncf %68 : vector<8x32xf32> to vector<8x32xbf16>
      %c0_33 = arith.constant 0 : index
      %c0_34 = arith.constant 0 : index
      %70 = vector.load %arg47[%c0_33, %c0_34] : memref<8x32xbf16, #tpu.memory_space<vmem>>, vector<8x32xbf16>
      tpu.vector_store %arg47[%c0_33, %c0_34], %69 {strides = array<i32>} : memref<8x32xbf16, #tpu.memory_space<vmem>>, vector<8x32xbf16>,
      %c0_35 = arith.constant 0 : index
      %c0_36 = arith.constant 0 : index
      %71 = vector.load %arg23[%c0_35, %c0_36] : memref<32x32xbf16, #tpu.memory_space<vmem>>, vector<32x32xbf16>
      %cst_37 = arith.constant dense<0.000000e+00> : vector<8x32xf32>
      %72 = tpu.matmul %56, %71, %cst_37 {dimension_numbers = #tpu.dot_dimension_numbers<[1], [0], [0], [1], [0, 0, 1, 1], [], []>} : vector<8x32xbf16>, vector<32x32xbf16>, vector<8x32xf32> -> vector<8x32xf32>
      %c0_38 = arith.constant 0 : index
      %c0_39 = arith.constant 0 : index
      %73 = vector.load %arg24[%c0_38, %c0_39] : memref<1x32xf32, #tpu.memory_space<vmem>>, vector<1x32xf32>
      %74 = vector.broadcast %73 : vector<1x32xf32> to vector<8x32xf32>
      %75 = arith.addf %72, %74 : vector<8x32xf32>
      %76 = arith.truncf %75 : vector<8x32xf32> to vector<8x32xbf16>
      %c0_40 = arith.constant 0 : index
      %c0_41 = arith.constant 0 : index
      %77 = vector.load %arg48[%c0_40, %c0_41] : memref<8x32xbf16, #tpu.memory_space<vmem>>, vector<8x32xbf16>
      tpu.vector_store %arg48[%c0_40, %c0_41], %76 {strides = array<i32>} : memref<8x32xbf16, #tpu.memory_space<vmem>>, vector<8x32xbf16>,
      %c0_42 = arith.constant 0 : index
      %c0_43 = arith.constant 0 : index
      %78 = vector.load %arg7[%c0_42, %c0_43] : memref<8x96xf32, #tpu.memory_space<vmem>>, vector<8x96xf32>
      %79 = arith.truncf %78 : vector<8x96xf32> to vector<8x96xbf16>
      %c0_44 = arith.constant 0 : index
      %c0_45 = arith.constant 0 : index
      %80 = vector.load %arg25[%c0_44, %c0_45] : memref<96x96xbf16, #tpu.memory_space<vmem>>, vector<96x96xbf16>
      %cst_46 = arith.constant dense<0.000000e+00> : vector<8x96xf32>
      %81 = tpu.matmul %79, %80, %cst_46 {dimension_numbers = #tpu.dot_dimension_numbers<[1], [0], [0], [1], [0, 0, 1, 1], [], []>} : vector<8x96xbf16>, vector<96x96xbf16>, vector<8x96xf32> -> vector<8x96xf32>
      %82 = arith.truncf %81 : vector<8x96xf32> to vector<8x96xbf16>
      %c0_47 = arith.constant 0 : index
      %c0_48 = arith.constant 0 : index
      %83 = vector.load %arg49[%c0_47, %c0_48] : memref<8x96xbf16, #tpu.memory_space<vmem>>, vector<8x96xbf16>
      tpu.vector_store %arg49[%c0_47, %c0_48], %82 {strides = array<i32>} : memref<8x96xbf16, #tpu.memory_space<vmem>>, vector<8x96xbf16>,
      %cst_49 = arith.constant -1.000000e+30 : f32
      %84 = vector.broadcast %cst_49 : f32 to vector<1x8xf32>
      %c0_50 = arith.constant 0 : index
      %c0_51 = arith.constant 0 : index
      %85 = vector.load %arg50[%c0_50, %c0_51] : memref<1x8xf32, #tpu.memory_space<vmem>>, vector<1x8xf32>
      tpu.vector_store %arg50[%c0_50, %c0_51], %84 {strides = array<i32>} : memref<1x8xf32, #tpu.memory_space<vmem>>, vector<1x8xf32>,
      %cst_52 = arith.constant 0.000000e+00 : f32
      %86 = vector.broadcast %cst_52 : f32 to vector<8x4xf32>
      %c0_53 = arith.constant 0 : index
      %c0_54 = arith.constant 0 : index
      %87 = vector.load %arg51[%c0_53, %c0_54] : memref<8x4xf32, #tpu.memory_space<vmem>>, vector<8x4xf32>
      tpu.vector_store %arg51[%c0_53, %c0_54], %86 {strides = array<i32>} : memref<8x4xf32, #tpu.memory_space<vmem>>, vector<8x4xf32>,
      %cst_55 = arith.constant 0.000000e+00 : f32
      %88 = vector.broadcast %cst_55 : f32 to vector<8x32xf32>
      %c0_56 = arith.constant 0 : index
      %c0_57 = arith.constant 0 : index
      %89 = vector.load %arg52[%c0_56, %c0_57] : memref<8x32xf32, #tpu.memory_space<vmem>>, vector<8x32xf32>
      tpu.vector_store %arg52[%c0_56, %c0_57], %88 {strides = array<i32>} : memref<8x32xf32, #tpu.memory_space<vmem>>, vector<8x32xf32>,
      %cst_58 = arith.constant 0.000000e+00 : f32
      %90 = vector.broadcast %cst_58 : f32 to vector<8x96xf32>
      %c0_59 = arith.constant 0 : index
      %c0_60 = arith.constant 0 : index
      %91 = vector.load %arg53[%c0_59, %c0_60] : memref<8x96xf32, #tpu.memory_space<vmem>>, vector<8x96xf32>
      tpu.vector_store %arg53[%c0_59, %c0_60], %90 {strides = array<i32>} : memref<8x96xf32, #tpu.memory_space<vmem>>, vector<8x96xf32>,
    } else {
    }
    %c0_i32_5 = arith.constant 0 : i32
    %22 = arith.cmpi eq, %arg0, %c0_i32_5 : i32
    %23 = arith.extui %22 : i1 to i32
    %c0_i32_6 = arith.constant 0 : i32
    %24 = arith.cmpi ne, %23, %c0_i32_6 : i32
    scf.if %24 {
      %c0_11 = arith.constant 0 : index
      %c0_12 = arith.constant 0 : index
      %33 = vector.load %arg46[%c0_11, %c0_12] : memref<8x32xbf16, #tpu.memory_space<vmem>>, vector<8x32xbf16>
      %cst = arith.constant dense<0.000000e+00> : vector<32x32xf32>
      %34 = tpu.matmul %12, %33, %cst {dimension_numbers = #tpu.dot_dimension_numbers<[1], [0], [0], [1], [0, 0, 1, 1], [], []>} : vector<32x8xbf16>, vector<8x32xbf16>, vector<32x32xf32> -> vector<32x32xf32>
      %c0_13 = arith.constant 0 : index
      %c0_14 = arith.constant 0 : index
      %35 = vector.load %arg47[%c0_13, %c0_14] : memref<8x32xbf16, #tpu.memory_space<vmem>>, vector<8x32xbf16>
      %cst_15 = arith.constant dense<0.000000e+00> : vector<32x32xf32>
      %36 = tpu.matmul %6, %35, %cst_15 {dimension_numbers = #tpu.dot_dimension_numbers<[1], [0], [0], [1], [0, 0, 1, 1], [], []>} : vector<32x8xbf16>, vector<8x32xbf16>, vector<32x32xf32> -> vector<32x32xf32>
      %c0_16 = arith.constant 0 : index
      %c0_17 = arith.constant 0 : index
      %37 = vector.load %arg4[%c0_16, %c0_17] : memref<32x16xf32, #tpu.memory_space<vmem>>, vector<32x16xf32>
      %38 = arith.truncf %37 : vector<32x16xf32> to vector<32x16xbf16>
      %c0_18 = arith.constant 0 : index
      %c0_19 = arith.constant 0 : index
      %39 = vector.load %arg28[%c0_18, %c0_19] : memref<16x16xbf16, #tpu.memory_space<vmem>>, vector<16x16xbf16>
      %cst_20 = arith.constant dense<0.000000e+00> : vector<32x16xf32>
      %40 = tpu.matmul %38, %39, %cst_20 {dimension_numbers = #tpu.dot_dimension_numbers<[1], [0], [0], [1], [0, 0, 1, 1], [], []>} : vector<32x16xbf16>, vector<16x16xbf16>, vector<32x16xf32> -> vector<32x16xf32>
      %c0_21 = arith.constant 0 : index
      %c0_22 = arith.constant 0 : index
      %41 = vector.load %arg29[%c0_21, %c0_22] : memref<1x16xf32, #tpu.memory_space<vmem>>, vector<1x16xf32>
      %42 = vector.broadcast %41 : vector<1x16xf32> to vector<32x16xf32>
      %43 = arith.addf %40, %42 : vector<32x16xf32>
      %44 = arith.negf %43 : vector<32x16xf32>
      %45 = math.exp %44 : vector<32x16xf32>
      %cst_23 = arith.constant 1.000000e+00 : f32
      %46 = vector.broadcast %cst_23 : f32 to vector<32x16xf32>
      %47 = arith.addf %46, %45 : vector<32x16xf32>
      %48 = arith.divf %46, %47 : vector<32x16xf32>
      %49 = arith.mulf %43, %48 : vector<32x16xf32>
      %50 = arith.truncf %49 : vector<32x16xf32> to vector<32x16xbf16>
      %c0_24 = arith.constant 0 : index
      %c0_25 = arith.constant 0 : index
      %51 = vector.load %arg30[%c0_24, %c0_25] : memref<16x4xbf16, #tpu.memory_space<vmem>>, vector<16x4xbf16>
      %cst_26 = arith.constant dense<0.000000e+00> : vector<32x4xf32>
      %52 = tpu.matmul %50, %51, %cst_26 {dimension_numbers = #tpu.dot_dimension_numbers<[1], [0], [0], [1], [0, 0, 1, 1], [], []>} : vector<32x16xbf16>, vector<16x4xbf16>, vector<32x4xf32> -> vector<32x4xf32>
      %c0_27 = arith.constant 0 : index
      %c0_28 = arith.constant 0 : index
      %53 = vector.load %arg31[%c0_27, %c0_28] : memref<1x4xf32, #tpu.memory_space<vmem>>, vector<1x4xf32>
      %54 = vector.broadcast %53 : vector<1x4xf32> to vector<32x4xf32>
      %55 = arith.addf %52, %54 : vector<32x4xf32>
      %56 = arith.mulf %34, %36 : vector<32x32xf32>
      %c0_29 = arith.constant 0 : index
      %c0_30 = arith.constant 0 : index
      %57 = vector.load %arg8[%c0_29, %c0_30] : memref<32x4xf32, #tpu.memory_space<vmem>>, vector<32x4xf32>
      %cst_31 = arith.constant dense<0.000000e+00> : vector<32x4xf32>
      %58 = tpu.matmul %56, %57, %cst_31 {dimension_numbers = #tpu.dot_dimension_numbers<[1], [0], [0], [1], [0, 0, 1, 1], [], []>} : vector<32x32xf32>, vector<32x4xf32>, vector<32x4xf32> -> vector<32x4xf32>
      %cst_32 = arith.constant 0.353553385 : f32
      %59 = vector.broadcast %cst_32 : f32 to vector<32x4xf32>
      %60 = arith.mulf %58, %59 : vector<32x4xf32>
      %c0_33 = arith.constant 0 : index
      %c0_34 = arith.constant 0 : index
      %61 = vector.load %arg5[%c0_33, %c0_34] : memref<32x1xf32, #tpu.memory_space<vmem>>, vector<32x1xf32>
      %62 = vector.broadcast %61 : vector<32x1xf32> to vector<32x4xf32>
      %63 = arith.subf %60, %62 : vector<32x4xf32>
      %64 = arith.addf %63, %55 : vector<32x4xf32>
      %65 = arith.index_cast %16 : i32 to index
      %c0_35 = arith.constant 0 : index
      %66 = vector.load %arg54[%65, %c0_35] : memref<64x4xf32, #tpu.memory_space<vmem>>, vector<32x4xf32>
      tpu.vector_store %arg54[%65, %c0_35], %64 {strides = array<i32>} : memref<64x4xf32, #tpu.memory_space<vmem>>, vector<32x4xf32>,
      %cst_36 = arith.constant dense<0xFF800000> : vector<32xf32>
      %67 = vector.multi_reduction <maximumf>, %64, %cst_36 [1] : vector<32x4xf32> to vector<32xf32>
      %68 = vector.shape_cast %67 : vector<32xf32> to vector<32x1xf32>
      %69 = vector.shape_cast %68 : vector<32x1xf32> to vector<32x1xf32>
      %70 = vector.broadcast %69 : vector<32x1xf32> to vector<32x8xf32>
      %cst_37 = arith.constant -1.000000e+30 : f32
      %71 = vector.broadcast %cst_37 : f32 to vector<32x8xf32>
      %72 = arith.select %9, %70, %71 : vector<32x8xi1>, vector<32x8xf32>
      %c0_38 = arith.constant 0 : index
      %c0_39 = arith.constant 0 : index
      %73 = vector.load %arg50[%c0_38, %c0_39] : memref<1x8xf32, #tpu.memory_space<vmem>>, vector<1x8xf32>
      %cst_40 = arith.constant dense<0xFF800000> : vector<8xf32>
      %74 = vector.multi_reduction <maximumf>, %72, %cst_40 [0] : vector<32x8xf32> to vector<8xf32>
      %75 = vector.shape_cast %74 : vector<8xf32> to vector<1x8xf32>
      %76 = arith.maximumf %73, %75 : vector<1x8xf32>
      %c0_41 = arith.constant 0 : index
      %c0_42 = arith.constant 0 : index
      %77 = vector.load %arg50[%c0_41, %c0_42] : memref<1x8xf32, #tpu.memory_space<vmem>>, vector<1x8xf32>
      tpu.vector_store %arg50[%c0_41, %c0_42], %76 {strides = array<i32>} : memref<1x8xf32, #tpu.memory_space<vmem>>, vector<1x8xf32>,
    } else {
    }
    %c1_i32 = arith.constant 1 : i32
    %25 = arith.cmpi eq, %arg0, %c1_i32 : i32
    %26 = arith.extui %25 : i1 to i32
    %c0_i32_7 = arith.constant 0 : i32
    %27 = arith.cmpi ne, %26, %c0_i32_7 : i32
    scf.if %27 {
      %33 = arith.index_cast %16 : i32 to index
      %c0_11 = arith.constant 0 : index
      %34 = vector.load %arg54[%33, %c0_11] : memref<64x4xf32, #tpu.memory_space<vmem>>, vector<32x4xf32>
      %c0_12 = arith.constant 0 : index
      %c0_13 = arith.constant 0 : index
      %35 = vector.load %arg50[%c0_12, %c0_13] : memref<1x8xf32, #tpu.memory_space<vmem>>, vector<1x8xf32>
      %36 = vector.broadcast %35 : vector<1x8xf32> to vector<32x8xf32>
      %37 = arith.mulf %14, %36 : vector<32x8xf32>
      %cst = arith.constant dense<0.000000e+00> : vector<32xf32>
      %38 = vector.multi_reduction <add>, %37, %cst [1] : vector<32x8xf32> to vector<32xf32>
      %39 = vector.shape_cast %38 : vector<32xf32> to vector<32x1xf32>
      %40 = vector.broadcast %39 : vector<32x1xf32> to vector<32x4xf32>
      %41 = arith.subf %34, %40 : vector<32x4xf32>
      %42 = math.exp %41 : vector<32x4xf32>
      %c0_14 = arith.constant 0 : index
      %c0_15 = arith.constant 0 : index
      %43 = vector.load %arg51[%c0_14, %c0_15] : memref<8x4xf32, #tpu.memory_space<vmem>>, vector<8x4xf32>
      %cst_16 = arith.constant dense<0.000000e+00> : vector<8x4xf32>
      %44 = tpu.matmul %14, %42, %cst_16 {dimension_numbers = #tpu.dot_dimension_numbers<[0], [0], [1], [1], [0, 1, 1, 1], [], []>} : vector<32x8xf32>, vector<32x4xf32>, vector<8x4xf32> -> vector<8x4xf32>
      %45 = arith.addf %43, %44 : vector<8x4xf32>
      %c0_17 = arith.constant 0 : index
      %c0_18 = arith.constant 0 : index
      %46 = vector.load %arg51[%c0_17, %c0_18] : memref<8x4xf32, #tpu.memory_space<vmem>>, vector<8x4xf32>
      tpu.vector_store %arg51[%c0_17, %c0_18], %45 {strides = array<i32>} : memref<8x4xf32, #tpu.memory_space<vmem>>, vector<8x4xf32>,
      %c0_19 = arith.constant 0 : index
      %c0_20 = arith.constant 0 : index
      %47 = vector.load %arg48[%c0_19, %c0_20] : memref<8x32xbf16, #tpu.memory_space<vmem>>, vector<8x32xbf16>
      %cst_21 = arith.constant dense<0.000000e+00> : vector<32x32xf32>
      %48 = tpu.matmul %6, %47, %cst_21 {dimension_numbers = #tpu.dot_dimension_numbers<[1], [0], [0], [1], [0, 0, 1, 1], [], []>} : vector<32x8xbf16>, vector<8x32xbf16>, vector<32x32xf32> -> vector<32x32xf32>
      %c0_22 = arith.constant 0 : index
      %c0_23 = arith.constant 0 : index
      %49 = vector.load %arg49[%c0_22, %c0_23] : memref<8x96xbf16, #tpu.memory_space<vmem>>, vector<8x96xbf16>
      %cst_24 = arith.constant dense<0.000000e+00> : vector<32x96xf32>
      %50 = tpu.matmul %6, %49, %cst_24 {dimension_numbers = #tpu.dot_dimension_numbers<[1], [0], [0], [1], [0, 0, 1, 1], [], []>} : vector<32x8xbf16>, vector<8x96xbf16>, vector<32x96xf32> -> vector<32x96xf32>
      %c0_25 = arith.constant 0 : index
      %c0_26 = arith.constant 0 : index
      %51 = vector.load %arg9[%c0_25, %c0_26] : memref<4x32xf32, #tpu.memory_space<vmem>>, vector<4x32xf32>
      %cst_27 = arith.constant dense<0.000000e+00> : vector<32x32xf32>
      %52 = tpu.matmul %42, %51, %cst_27 {dimension_numbers = #tpu.dot_dimension_numbers<[1], [0], [0], [1], [0, 0, 1, 1], [], []>} : vector<32x4xf32>, vector<4x32xf32>, vector<32x32xf32> -> vector<32x32xf32>
      %c0_28 = arith.constant 0 : index
      %c0_29 = arith.constant 0 : index
      %53 = vector.load %arg10[%c0_28, %c0_29] : memref<4x96xf32, #tpu.memory_space<vmem>>, vector<4x96xf32>
      %cst_30 = arith.constant dense<0.000000e+00> : vector<32x96xf32>
      %54 = tpu.matmul %42, %53, %cst_30 {dimension_numbers = #tpu.dot_dimension_numbers<[1], [0], [0], [1], [0, 0, 1, 1], [], []>} : vector<32x4xf32>, vector<4x96xf32>, vector<32x96xf32> -> vector<32x96xf32>
      %c0_31 = arith.constant 0 : index
      %c0_32 = arith.constant 0 : index
      %55 = vector.load %arg52[%c0_31, %c0_32] : memref<8x32xf32, #tpu.memory_space<vmem>>, vector<8x32xf32>
      %56 = arith.mulf %52, %48 : vector<32x32xf32>
      %57 = arith.truncf %56 : vector<32x32xf32> to vector<32x32xbf16>
      %cst_33 = arith.constant dense<0.000000e+00> : vector<8x32xf32>
      %58 = tpu.matmul %12, %57, %cst_33 {dimension_numbers = #tpu.dot_dimension_numbers<[0], [0], [1], [1], [0, 1, 1, 1], [], []>} : vector<32x8xbf16>, vector<32x32xbf16>, vector<8x32xf32> -> vector<8x32xf32>
      %59 = arith.addf %55, %58 : vector<8x32xf32>
      %c0_34 = arith.constant 0 : index
      %c0_35 = arith.constant 0 : index
      %60 = vector.load %arg52[%c0_34, %c0_35] : memref<8x32xf32, #tpu.memory_space<vmem>>, vector<8x32xf32>
      tpu.vector_store %arg52[%c0_34, %c0_35], %59 {strides = array<i32>} : memref<8x32xf32, #tpu.memory_space<vmem>>, vector<8x32xf32>,
      %c0_36 = arith.constant 0 : index
      %c0_37 = arith.constant 0 : index
      %61 = vector.load %arg53[%c0_36, %c0_37] : memref<8x96xf32, #tpu.memory_space<vmem>>, vector<8x96xf32>
      %62 = arith.mulf %54, %50 : vector<32x96xf32>
      %63 = arith.truncf %62 : vector<32x96xf32> to vector<32x96xbf16>
      %cst_38 = arith.constant dense<0.000000e+00> : vector<8x96xf32>
      %64 = tpu.matmul %12, %63, %cst_38 {dimension_numbers = #tpu.dot_dimension_numbers<[0], [0], [1], [1], [0, 1, 1, 1], [], []>} : vector<32x8xbf16>, vector<32x96xbf16>, vector<8x96xf32> -> vector<8x96xf32>
      %65 = arith.addf %61, %64 : vector<8x96xf32>
      %c0_39 = arith.constant 0 : index
      %c0_40 = arith.constant 0 : index
      %66 = vector.load %arg53[%c0_39, %c0_40] : memref<8x96xf32, #tpu.memory_space<vmem>>, vector<8x96xf32>
      tpu.vector_store %arg53[%c0_39, %c0_40], %65 {strides = array<i32>} : memref<8x96xf32, #tpu.memory_space<vmem>>, vector<8x96xf32>,
    } else {
    }
    %c1_i32_8 = arith.constant 1 : i32
    %28 = arith.cmpi eq, %arg0, %c1_i32_8 : i32
    %c1_i32_9 = arith.constant 1 : i32
    %29 = arith.cmpi eq, %arg1, %c1_i32_9 : i32
    %30 = arith.andi %28, %29 : i1
    %31 = arith.extui %30 : i1 to i32
    %c0_i32_10 = arith.constant 0 : i32
    %32 = arith.cmpi ne, %31, %c0_i32_10 : i32
    scf.if %32 {
      %c0_11 = arith.constant 0 : index
      %c0_12 = arith.constant 0 : index
      %33 = vector.load %arg6[%c0_11, %c0_12] : memref<8x32xf32, #tpu.memory_space<vmem>>, vector<8x32xf32>
      %c0_13 = arith.constant 0 : index
      %c0_14 = arith.constant 0 : index
      %34 = vector.load %arg7[%c0_13, %c0_14] : memref<8x96xf32, #tpu.memory_space<vmem>>, vector<8x96xf32>
      %c0_15 = arith.constant 0 : index
      %c0_16 = arith.constant 0 : index
      %35 = vector.load %arg51[%c0_15, %c0_16] : memref<8x4xf32, #tpu.memory_space<vmem>>, vector<8x4xf32>
      %cst = arith.constant 0.000000e+00 : f32
      %36 = vector.broadcast %cst : f32 to vector<8x4xf32>
      %37 = arith.cmpf ogt, %35, %36 : vector<8x4xf32>
      %cst_17 = arith.constant 1.000000e+00 : f32
      %38 = vector.broadcast %cst_17 : f32 to vector<8x4xf32>
      %39 = arith.select %37, %35, %38 : vector<8x4xi1>, vector<8x4xf32>
      %40 = tpu.reciprocal %39 {approx = true} : vector<8x4xf32> -> vector<8x4xf32>
      %c0_18 = arith.constant 0 : index
      %c0_19 = arith.constant 0 : index
      %41 = vector.load %arg52[%c0_18, %c0_19] : memref<8x32xf32, #tpu.memory_space<vmem>>, vector<8x32xf32>
      %c0_20 = arith.constant 0 : index
      %c0_21 = arith.constant 0 : index
      %42 = vector.load %arg9[%c0_20, %c0_21] : memref<4x32xf32, #tpu.memory_space<vmem>>, vector<4x32xf32>
      %cst_22 = arith.constant dense<0.000000e+00> : vector<8x32xf32>
      %43 = tpu.matmul %40, %42, %cst_22 {dimension_numbers = #tpu.dot_dimension_numbers<[1], [0], [0], [1], [0, 0, 1, 1], [], []>} : vector<8x4xf32>, vector<4x32xf32>, vector<8x32xf32> -> vector<8x32xf32>
      %44 = arith.mulf %41, %43 : vector<8x32xf32>
      %c0_23 = arith.constant 0 : index
      %c0_24 = arith.constant 0 : index
      %45 = vector.load %arg53[%c0_23, %c0_24] : memref<8x96xf32, #tpu.memory_space<vmem>>, vector<8x96xf32>
      %c0_25 = arith.constant 0 : index
      %c0_26 = arith.constant 0 : index
      %46 = vector.load %arg10[%c0_25, %c0_26] : memref<4x96xf32, #tpu.memory_space<vmem>>, vector<4x96xf32>
      %cst_27 = arith.constant dense<0.000000e+00> : vector<8x96xf32>
      %47 = tpu.matmul %40, %46, %cst_27 {dimension_numbers = #tpu.dot_dimension_numbers<[1], [0], [0], [1], [0, 0, 1, 1], [], []>} : vector<8x4xf32>, vector<4x96xf32>, vector<8x96xf32> -> vector<8x96xf32>
      %48 = arith.mulf %45, %47 : vector<8x96xf32>
      %49 = arith.truncf %44 : vector<8x32xf32> to vector<8x32xbf16>
      %c0_28 = arith.constant 0 : index
      %c0_29 = arith.constant 0 : index
      %50 = vector.load %arg26[%c0_28, %c0_29] : memref<32x32xbf16, #tpu.memory_space<vmem>>, vector<32x32xbf16>
      %cst_30 = arith.constant dense<0.000000e+00> : vector<8x32xf32>
      %51 = tpu.matmul %49, %50, %cst_30 {dimension_numbers = #tpu.dot_dimension_numbers<[1], [0], [0], [1], [0, 0, 1, 1], [], []>} : vector<8x32xbf16>, vector<32x32xbf16>, vector<8x32xf32> -> vector<8x32xf32>
      %52 = arith.addf %33, %51 : vector<8x32xf32>
      %53 = arith.truncf %48 : vector<8x96xf32> to vector<8x96xbf16>
      %c0_31 = arith.constant 0 : index
      %c0_32 = arith.constant 0 : index
      %54 = vector.load %arg27[%c0_31, %c0_32] : memref<96x96xbf16, #tpu.memory_space<vmem>>, vector<96x96xbf16>
      %cst_33 = arith.constant dense<0.000000e+00> : vector<8x96xf32>
      %55 = tpu.matmul %53, %54, %cst_33 {dimension_numbers = #tpu.dot_dimension_numbers<[1], [0], [0], [1], [0, 0, 1, 1], [], []>} : vector<8x96xbf16>, vector<96x96xbf16>, vector<8x96xf32> -> vector<8x96xf32>
      %56 = arith.addf %34, %55 : vector<8x96xf32>
      %c0_34 = arith.constant 0 : index
      %c0_35 = arith.constant 0 : index
      %57 = vector.load %arg15[%c0_34, %c0_35] : memref<1x32xf32, #tpu.memory_space<vmem>>, vector<1x32xf32>
      %c0_36 = arith.constant 0 : index
      %c0_37 = arith.constant 0 : index
      %58 = vector.load %arg16[%c0_36, %c0_37] : memref<1x32xf32, #tpu.memory_space<vmem>>, vector<1x32xf32>
      %cst_38 = arith.constant dense<0.000000e+00> : vector<8xf32>
      %59 = vector.multi_reduction <add>, %52, %cst_38 [1] : vector<8x32xf32> to vector<8xf32>
      %60 = vector.shape_cast %59 : vector<8xf32> to vector<8x1xf32>
      %cst_39 = arith.constant 3.200000e+01 : f32
      %61 = vector.broadcast %cst_39 : f32 to vector<8x1xf32>
      %62 = arith.divf %60, %61 : vector<8x1xf32>
      %63 = vector.broadcast %62 : vector<8x1xf32> to vector<8x32xf32>
      %64 = arith.subf %52, %63 : vector<8x32xf32>
      %65 = arith.mulf %64, %64 : vector<8x32xf32>
      %cst_40 = arith.constant dense<0.000000e+00> : vector<8xf32>
      %66 = vector.multi_reduction <add>, %65, %cst_40 [1] : vector<8x32xf32> to vector<8xf32>
      %67 = vector.shape_cast %66 : vector<8xf32> to vector<8x1xf32>
      %cst_41 = arith.constant 3.200000e+01 : f32
      %68 = vector.broadcast %cst_41 : f32 to vector<8x1xf32>
      %69 = arith.divf %67, %68 : vector<8x1xf32>
      %cst_42 = arith.constant 9.99999974E-6 : f32
      %70 = vector.broadcast %cst_42 : f32 to vector<8x1xf32>
      %71 = arith.addf %69, %70 : vector<8x1xf32>
      %72 = math.rsqrt %71 : vector<8x1xf32>
      %73 = vector.broadcast %72 : vector<8x1xf32> to vector<8x32xf32>
      %74 = arith.mulf %64, %73 : vector<8x32xf32>
      %75 = vector.broadcast %57 : vector<1x32xf32> to vector<8x32xf32>
      %76 = arith.mulf %74, %75 : vector<8x32xf32>
      %77 = vector.broadcast %58 : vector<1x32xf32> to vector<8x32xf32>
      %78 = arith.addf %76, %77 : vector<8x32xf32>
      %79 = arith.truncf %78 : vector<8x32xf32> to vector<8x32xbf16>
      %80 = arith.truncf %56 : vector<8x96xf32> to vector<8x96xbf16>
      %c0_43 = arith.constant 0 : index
      %c0_44 = arith.constant 0 : index
      %81 = vector.load %arg32[%c0_43, %c0_44] : memref<96x96xbf16, #tpu.memory_space<vmem>>, vector<96x96xbf16>
      %cst_45 = arith.constant dense<0.000000e+00> : vector<8x96xf32>
      %82 = tpu.matmul %80, %81, %cst_45 {dimension_numbers = #tpu.dot_dimension_numbers<[1], [0], [0], [1], [0, 0, 1, 1], [], []>} : vector<8x96xbf16>, vector<96x96xbf16>, vector<8x96xf32> -> vector<8x96xf32>
      %c0_46 = arith.constant 0 : index
      %c0_47 = arith.constant 0 : index
      %83 = vector.load %arg33[%c0_46, %c0_47] : memref<96x96xbf16, #tpu.memory_space<vmem>>, vector<96x96xbf16>
      %cst_48 = arith.constant dense<0.000000e+00> : vector<8x96xf32>
      %84 = tpu.matmul %80, %83, %cst_48 {dimension_numbers = #tpu.dot_dimension_numbers<[1], [0], [0], [1], [0, 0, 1, 1], [], []>} : vector<8x96xbf16>, vector<96x96xbf16>, vector<8x96xf32> -> vector<8x96xf32>
      %85 = arith.mulf %82, %82 : vector<8x96xf32>
      %c0_49 = arith.constant 0 : index
      %c0_50 = arith.constant 0 : index
      %86 = vector.load %arg11[%c0_49, %c0_50] : memref<96x32xf32, #tpu.memory_space<vmem>>, vector<96x32xf32>
      %cst_51 = arith.constant dense<0.000000e+00> : vector<8x32xf32>
      %87 = tpu.matmul %85, %86, %cst_51 {dimension_numbers = #tpu.dot_dimension_numbers<[1], [0], [0], [1], [0, 0, 1, 1], [], []>} : vector<8x96xf32>, vector<96x32xf32>, vector<8x32xf32> -> vector<8x32xf32>
      %88 = math.sqrt %87 : vector<8x32xf32>
      %89 = arith.truncf %88 : vector<8x32xf32> to vector<8x32xbf16>
      %c0_52 = arith.constant 0 : index
      %c0_53 = arith.constant 0 : index
      %90 = vector.load %arg34[%c0_52, %c0_53] : memref<32x64xbf16, #tpu.memory_space<vmem>>, vector<32x64xbf16>
      %cst_54 = arith.constant dense<0.000000e+00> : vector<8x64xf32>
      %91 = tpu.matmul %79, %90, %cst_54 {dimension_numbers = #tpu.dot_dimension_numbers<[1], [0], [0], [1], [0, 0, 1, 1], [], []>} : vector<8x32xbf16>, vector<32x64xbf16>, vector<8x64xf32> -> vector<8x64xf32>
      %c0_55 = arith.constant 0 : index
      %c0_56 = arith.constant 0 : index
      %92 = vector.load %arg35[%c0_55, %c0_56] : memref<32x64xbf16, #tpu.memory_space<vmem>>, vector<32x64xbf16>
      %cst_57 = arith.constant dense<0.000000e+00> : vector<8x64xf32>
      %93 = tpu.matmul %89, %92, %cst_57 {dimension_numbers = #tpu.dot_dimension_numbers<[1], [0], [0], [1], [0, 0, 1, 1], [], []>} : vector<8x32xbf16>, vector<32x64xbf16>, vector<8x64xf32> -> vector<8x64xf32>
      %94 = arith.addf %91, %93 : vector<8x64xf32>
      %c0_58 = arith.constant 0 : index
      %c0_59 = arith.constant 0 : index
      %95 = vector.load %arg36[%c0_58, %c0_59] : memref<1x64xf32, #tpu.memory_space<vmem>>, vector<1x64xf32>
      %96 = vector.broadcast %95 : vector<1x64xf32> to vector<8x64xf32>
      %97 = arith.addf %94, %96 : vector<8x64xf32>
      %98 = arith.negf %97 : vector<8x64xf32>
      %99 = math.exp %98 : vector<8x64xf32>
      %cst_60 = arith.constant 1.000000e+00 : f32
      %100 = vector.broadcast %cst_60 : f32 to vector<8x64xf32>
      %101 = arith.addf %100, %99 : vector<8x64xf32>
      %102 = arith.divf %100, %101 : vector<8x64xf32>
      %103 = arith.mulf %97, %102 : vector<8x64xf32>
      %104 = arith.truncf %103 : vector<8x64xf32> to vector<8x64xbf16>
      %c0_61 = arith.constant 0 : index
      %c0_62 = arith.constant 0 : index
      %105 = vector.load %arg37[%c0_61, %c0_62] : memref<64x32xbf16, #tpu.memory_space<vmem>>, vector<64x32xbf16>
      %cst_63 = arith.constant dense<0.000000e+00> : vector<8x32xf32>
      %106 = tpu.matmul %104, %105, %cst_63 {dimension_numbers = #tpu.dot_dimension_numbers<[1], [0], [0], [1], [0, 0, 1, 1], [], []>} : vector<8x64xbf16>, vector<64x32xbf16>, vector<8x32xf32> -> vector<8x32xf32>
      %c0_64 = arith.constant 0 : index
      %c0_65 = arith.constant 0 : index
      %107 = vector.load %arg38[%c0_64, %c0_65] : memref<1x32xf32, #tpu.memory_space<vmem>>, vector<1x32xf32>
      %108 = vector.broadcast %107 : vector<1x32xf32> to vector<8x32xf32>
      %109 = arith.addf %106, %108 : vector<8x32xf32>
      %c0_66 = arith.constant 0 : index
      %c0_67 = arith.constant 0 : index
      %110 = vector.load %arg39[%c0_66, %c0_67] : memref<32x64xbf16, #tpu.memory_space<vmem>>, vector<32x64xbf16>
      %cst_68 = arith.constant dense<0.000000e+00> : vector<8x64xf32>
      %111 = tpu.matmul %79, %110, %cst_68 {dimension_numbers = #tpu.dot_dimension_numbers<[1], [0], [0], [1], [0, 0, 1, 1], [], []>} : vector<8x32xbf16>, vector<32x64xbf16>, vector<8x64xf32> -> vector<8x64xf32>
      %c0_69 = arith.constant 0 : index
      %c0_70 = arith.constant 0 : index
      %112 = vector.load %arg40[%c0_69, %c0_70] : memref<32x64xbf16, #tpu.memory_space<vmem>>, vector<32x64xbf16>
      %cst_71 = arith.constant dense<0.000000e+00> : vector<8x64xf32>
      %113 = tpu.matmul %89, %112, %cst_71 {dimension_numbers = #tpu.dot_dimension_numbers<[1], [0], [0], [1], [0, 0, 1, 1], [], []>} : vector<8x32xbf16>, vector<32x64xbf16>, vector<8x64xf32> -> vector<8x64xf32>
      %114 = arith.addf %111, %113 : vector<8x64xf32>
      %c0_72 = arith.constant 0 : index
      %c0_73 = arith.constant 0 : index
      %115 = vector.load %arg41[%c0_72, %c0_73] : memref<1x64xf32, #tpu.memory_space<vmem>>, vector<1x64xf32>
      %116 = vector.broadcast %115 : vector<1x64xf32> to vector<8x64xf32>
      %117 = arith.addf %114, %116 : vector<8x64xf32>
      %118 = arith.negf %117 : vector<8x64xf32>
      %119 = math.exp %118 : vector<8x64xf32>
      %cst_74 = arith.constant 1.000000e+00 : f32
      %120 = vector.broadcast %cst_74 : f32 to vector<8x64xf32>
      %121 = arith.addf %120, %119 : vector<8x64xf32>
      %122 = arith.divf %120, %121 : vector<8x64xf32>
      %123 = arith.mulf %117, %122 : vector<8x64xf32>
      %124 = arith.truncf %123 : vector<8x64xf32> to vector<8x64xbf16>
      %c0_75 = arith.constant 0 : index
      %c0_76 = arith.constant 0 : index
      %125 = vector.load %arg42[%c0_75, %c0_76] : memref<64x32xbf16, #tpu.memory_space<vmem>>, vector<64x32xbf16>
      %cst_77 = arith.constant dense<0.000000e+00> : vector<8x32xf32>
      %126 = tpu.matmul %124, %125, %cst_77 {dimension_numbers = #tpu.dot_dimension_numbers<[1], [0], [0], [1], [0, 0, 1, 1], [], []>} : vector<8x64xbf16>, vector<64x32xbf16>, vector<8x32xf32> -> vector<8x32xf32>
      %c0_78 = arith.constant 0 : index
      %c0_79 = arith.constant 0 : index
      %127 = vector.load %arg43[%c0_78, %c0_79] : memref<1x32xf32, #tpu.memory_space<vmem>>, vector<1x32xf32>
      %128 = vector.broadcast %127 : vector<1x32xf32> to vector<8x32xf32>
      %129 = arith.addf %126, %128 : vector<8x32xf32>
      %c0_80 = arith.constant 0 : index
      %c0_81 = arith.constant 0 : index
      %130 = vector.load %arg17[%c0_80, %c0_81] : memref<1x32xf32, #tpu.memory_space<vmem>>, vector<1x32xf32>
      %c0_82 = arith.constant 0 : index
      %c0_83 = arith.constant 0 : index
      %131 = vector.load %arg18[%c0_82, %c0_83] : memref<1x32xf32, #tpu.memory_space<vmem>>, vector<1x32xf32>
      %cst_84 = arith.constant dense<0.000000e+00> : vector<8xf32>
      %132 = vector.multi_reduction <add>, %129, %cst_84 [1] : vector<8x32xf32> to vector<8xf32>
      %133 = vector.shape_cast %132 : vector<8xf32> to vector<8x1xf32>
      %cst_85 = arith.constant 3.200000e+01 : f32
      %134 = vector.broadcast %cst_85 : f32 to vector<8x1xf32>
      %135 = arith.divf %133, %134 : vector<8x1xf32>
      %136 = vector.broadcast %135 : vector<8x1xf32> to vector<8x32xf32>
      %137 = arith.subf %129, %136 : vector<8x32xf32>
      %138 = arith.mulf %137, %137 : vector<8x32xf32>
      %cst_86 = arith.constant dense<0.000000e+00> : vector<8xf32>
      %139 = vector.multi_reduction <add>, %138, %cst_86 [1] : vector<8x32xf32> to vector<8xf32>
      %140 = vector.shape_cast %139 : vector<8xf32> to vector<8x1xf32>
      %cst_87 = arith.constant 3.200000e+01 : f32
      %141 = vector.broadcast %cst_87 : f32 to vector<8x1xf32>
      %142 = arith.divf %140, %141 : vector<8x1xf32>
      %cst_88 = arith.constant 9.99999974E-6 : f32
      %143 = vector.broadcast %cst_88 : f32 to vector<8x1xf32>
      %144 = arith.addf %142, %143 : vector<8x1xf32>
      %145 = math.rsqrt %144 : vector<8x1xf32>
      %146 = vector.broadcast %145 : vector<8x1xf32> to vector<8x32xf32>
      %147 = arith.mulf %137, %146 : vector<8x32xf32>
      %148 = vector.broadcast %130 : vector<1x32xf32> to vector<8x32xf32>
      %149 = arith.mulf %147, %148 : vector<8x32xf32>
      %150 = vector.broadcast %131 : vector<1x32xf32> to vector<8x32xf32>
      %151 = arith.addf %149, %150 : vector<8x32xf32>
      %c0_89 = arith.constant 0 : index
      %c0_90 = arith.constant 0 : index
      %152 = vector.load %arg12[%c0_89, %c0_90] : memref<32x96xf32, #tpu.memory_space<vmem>>, vector<32x96xf32>
      %cst_91 = arith.constant dense<0.000000e+00> : vector<8x96xf32>
      %153 = tpu.matmul %151, %152, %cst_91 {dimension_numbers = #tpu.dot_dimension_numbers<[1], [0], [0], [1], [0, 0, 1, 1], [], []>} : vector<8x32xf32>, vector<32x96xf32>, vector<8x96xf32> -> vector<8x96xf32>
      %154 = arith.addf %52, %109 : vector<8x32xf32>
      %c0_92 = arith.constant 0 : index
      %c0_93 = arith.constant 0 : index
      %155 = vector.load %arg44[%c0_92, %c0_93] : memref<8x32xf32, #tpu.memory_space<vmem>>, vector<8x32xf32>
      tpu.vector_store %arg44[%c0_92, %c0_93], %154 {strides = array<i32>} : memref<8x32xf32, #tpu.memory_space<vmem>>, vector<8x32xf32>,
      %156 = arith.mulf %153, %84 : vector<8x96xf32>
      %157 = arith.addf %56, %156 : vector<8x96xf32>
      %c0_94 = arith.constant 0 : index
      %c0_95 = arith.constant 0 : index
      %158 = vector.load %arg45[%c0_94, %c0_95] : memref<8x96xf32, #tpu.memory_space<vmem>>, vector<8x96xf32>
      tpu.vector_store %arg45[%c0_94, %c0_95], %157 {strides = array<i32>} : memref<8x96xf32, #tpu.memory_space<vmem>>, vector<8x96xf32>,
    } else {
    }
    return
  }
  func.func @transform_0(%arg0: i32, %arg1: i32) -> (i32, i32) {
    %c0_i32 = arith.constant 0 : i32
    %c0_i32_0 = arith.constant 0 : i32
    return %arg1, %c0_i32 : i32, i32
  }
  func.func @transform_1(%arg0: i32, %arg1: i32) -> (i32, i32) {
    %c0_i32 = arith.constant 0 : i32
    %c0_i32_0 = arith.constant 0 : i32
    return %arg1, %c0_i32 : i32, i32
  }
  func.func @transform_2(%arg0: i32, %arg1: i32) -> (i32, i32) {
    %c0_i32 = arith.constant 0 : i32
    %c0_i32_0 = arith.constant 0 : i32
    return %arg1, %c0_i32 : i32, i32
  }
  func.func @transform_3(%arg0: i32, %arg1: i32) -> (i32, i32) {
    %c0_i32 = arith.constant 0 : i32
    %c0_i32_0 = arith.constant 0 : i32
    return %arg1, %c0_i32 : i32, i32
  }
  func.func @transform_4(%arg0: i32, %arg1: i32) -> (i32, i32) {
    %c0_i32 = arith.constant 0 : i32
    %c0_i32_0 = arith.constant 0 : i32
    %c0_i32_1 = arith.constant 0 : i32
    return %c0_i32, %c0_i32_0 : i32, i32
  }
  func.func @transform_5(%arg0: i32, %arg1: i32) -> (i32, i32) {
    %c0_i32 = arith.constant 0 : i32
    %c0_i32_0 = arith.constant 0 : i32
    %c0_i32_1 = arith.constant 0 : i32
    return %c0_i32, %c0_i32_0 : i32, i32
  }
  func.func @transform_6(%arg0: i32, %arg1: i32) -> (i32, i32) {
    %c0_i32 = arith.constant 0 : i32
    %c0_i32_0 = arith.constant 0 : i32
    %c0_i32_1 = arith.constant 0 : i32
    return %c0_i32, %c0_i32_0 : i32, i32
  }
  func.func @transform_7(%arg0: i32, %arg1: i32) -> (i32, i32) {
    %c0_i32 = arith.constant 0 : i32
    %c0_i32_0 = arith.constant 0 : i32
    %c0_i32_1 = arith.constant 0 : i32
    return %c0_i32, %c0_i32_0 : i32, i32
  }
  func.func @transform_8(%arg0: i32, %arg1: i32) -> (i32, i32) {
    %c0_i32 = arith.constant 0 : i32
    %c0_i32_0 = arith.constant 0 : i32
    %c0_i32_1 = arith.constant 0 : i32
    return %c0_i32, %c0_i32_0 : i32, i32
  }
  func.func @transform_9(%arg0: i32, %arg1: i32) -> (i32, i32) {
    %c0_i32 = arith.constant 0 : i32
    %c0_i32_0 = arith.constant 0 : i32
    %c0_i32_1 = arith.constant 0 : i32
    return %c0_i32, %c0_i32_0 : i32, i32
  }
  func.func @transform_10(%arg0: i32, %arg1: i32) -> (i32, i32) {
    %c0_i32 = arith.constant 0 : i32
    %c0_i32_0 = arith.constant 0 : i32
    %c0_i32_1 = arith.constant 0 : i32
    return %c0_i32, %c0_i32_0 : i32, i32
  }
  func.func @transform_11(%arg0: i32, %arg1: i32) -> (i32, i32) {
    %c0_i32 = arith.constant 0 : i32
    %c0_i32_0 = arith.constant 0 : i32
    %c0_i32_1 = arith.constant 0 : i32
    return %c0_i32, %c0_i32_0 : i32, i32
  }
  func.func @transform_12(%arg0: i32, %arg1: i32) -> (i32, i32) {
    %c0_i32 = arith.constant 0 : i32
    %c0_i32_0 = arith.constant 0 : i32
    %c0_i32_1 = arith.constant 0 : i32
    return %c0_i32, %c0_i32_0 : i32, i32
  }
  func.func @transform_13(%arg0: i32, %arg1: i32) -> (i32, i32) {
    %c0_i32 = arith.constant 0 : i32
    %c0_i32_0 = arith.constant 0 : i32
    %c0_i32_1 = arith.constant 0 : i32
    return %c0_i32, %c0_i32_0 : i32, i32
  }
  func.func @transform_14(%arg0: i32, %arg1: i32) -> (i32, i32) {
    %c0_i32 = arith.constant 0 : i32
    %c0_i32_0 = arith.constant 0 : i32
    %c0_i32_1 = arith.constant 0 : i32
    return %c0_i32, %c0_i32_0 : i32, i32
  }
  func.func @transform_15(%arg0: i32, %arg1: i32) -> (i32, i32) {
    %c0_i32 = arith.constant 0 : i32
    %c0_i32_0 = arith.constant 0 : i32
    %c0_i32_1 = arith.constant 0 : i32
    return %c0_i32, %c0_i32_0 : i32, i32
  }
  func.func @transform_16(%arg0: i32, %arg1: i32) -> (i32, i32) {
    %c0_i32 = arith.constant 0 : i32
    %c0_i32_0 = arith.constant 0 : i32
    %c0_i32_1 = arith.constant 0 : i32
    return %c0_i32, %c0_i32_0 : i32, i32
  }
  func.func @transform_17(%arg0: i32, %arg1: i32) -> (i32, i32) {
    %c0_i32 = arith.constant 0 : i32
    %c0_i32_0 = arith.constant 0 : i32
    %c0_i32_1 = arith.constant 0 : i32
    return %c0_i32, %c0_i32_0 : i32, i32
  }
  func.func @transform_18(%arg0: i32, %arg1: i32) -> (i32, i32) {
    %c0_i32 = arith.constant 0 : i32
    %c0_i32_0 = arith.constant 0 : i32
    %c0_i32_1 = arith.constant 0 : i32
    return %c0_i32, %c0_i32_0 : i32, i32
  }
  func.func @transform_19(%arg0: i32, %arg1: i32) -> (i32, i32) {
    %c0_i32 = arith.constant 0 : i32
    %c0_i32_0 = arith.constant 0 : i32
    %c0_i32_1 = arith.constant 0 : i32
    return %c0_i32, %c0_i32_0 : i32, i32
  }
  func.func @transform_20(%arg0: i32, %arg1: i32) -> (i32, i32) {
    %c0_i32 = arith.constant 0 : i32
    %c0_i32_0 = arith.constant 0 : i32
    %c0_i32_1 = arith.constant 0 : i32
    return %c0_i32, %c0_i32_0 : i32, i32
  }
  func.func @transform_21(%arg0: i32, %arg1: i32) -> (i32, i32) {
    %c0_i32 = arith.constant 0 : i32
    %c0_i32_0 = arith.constant 0 : i32
    %c0_i32_1 = arith.constant 0 : i32
    return %c0_i32, %c0_i32_0 : i32, i32
  }
  func.func @transform_22(%arg0: i32, %arg1: i32) -> (i32, i32) {
    %c0_i32 = arith.constant 0 : i32
    %c0_i32_0 = arith.constant 0 : i32
    %c0_i32_1 = arith.constant 0 : i32
    return %c0_i32, %c0_i32_0 : i32, i32
  }
  func.func @transform_23(%arg0: i32, %arg1: i32) -> (i32, i32) {
    %c0_i32 = arith.constant 0 : i32
    %c0_i32_0 = arith.constant 0 : i32
    %c0_i32_1 = arith.constant 0 : i32
    return %c0_i32, %c0_i32_0 : i32, i32
  }
  func.func @transform_24(%arg0: i32, %arg1: i32) -> (i32, i32) {
    %c0_i32 = arith.constant 0 : i32
    %c0_i32_0 = arith.constant 0 : i32
    %c0_i32_1 = arith.constant 0 : i32
    return %c0_i32, %c0_i32_0 : i32, i32
  }
  func.func @transform_25(%arg0: i32, %arg1: i32) -> (i32, i32) {
    %c0_i32 = arith.constant 0 : i32
    %c0_i32_0 = arith.constant 0 : i32
    %c0_i32_1 = arith.constant 0 : i32
    return %c0_i32, %c0_i32_0 : i32, i32
  }
  func.func @transform_26(%arg0: i32, %arg1: i32) -> (i32, i32) {
    %c0_i32 = arith.constant 0 : i32
    %c0_i32_0 = arith.constant 0 : i32
    %c0_i32_1 = arith.constant 0 : i32
    return %c0_i32, %c0_i32_0 : i32, i32
  }
  func.func @transform_27(%arg0: i32, %arg1: i32) -> (i32, i32) {
    %c0_i32 = arith.constant 0 : i32
    %c0_i32_0 = arith.constant 0 : i32
    %c0_i32_1 = arith.constant 0 : i32
    return %c0_i32, %c0_i32_0 : i32, i32
  }
  func.func @transform_28(%arg0: i32, %arg1: i32) -> (i32, i32) {
    %c0_i32 = arith.constant 0 : i32
    %c0_i32_0 = arith.constant 0 : i32
    %c0_i32_1 = arith.constant 0 : i32
    return %c0_i32, %c0_i32_0 : i32, i32
  }
  func.func @transform_29(%arg0: i32, %arg1: i32) -> (i32, i32) {
    %c0_i32 = arith.constant 0 : i32
    %c0_i32_0 = arith.constant 0 : i32
    %c0_i32_1 = arith.constant 0 : i32
    return %c0_i32, %c0_i32_0 : i32, i32
  }
  func.func @transform_30(%arg0: i32, %arg1: i32) -> (i32, i32) {
    %c0_i32 = arith.constant 0 : i32
    %c0_i32_0 = arith.constant 0 : i32
    %c0_i32_1 = arith.constant 0 : i32
    return %c0_i32, %c0_i32_0 : i32, i32
  }
  func.func @transform_31(%arg0: i32, %arg1: i32) -> (i32, i32) {
    %c0_i32 = arith.constant 0 : i32
    %c0_i32_0 = arith.constant 0 : i32
    %c0_i32_1 = arith.constant 0 : i32
    return %c0_i32, %c0_i32_0 : i32, i32
  }
  func.func @transform_32(%arg0: i32, %arg1: i32) -> (i32, i32) {
    %c0_i32 = arith.constant 0 : i32
    %c0_i32_0 = arith.constant 0 : i32
    %c0_i32_1 = arith.constant 0 : i32
    return %c0_i32, %c0_i32_0 : i32, i32
  }
  func.func @transform_33(%arg0: i32, %arg1: i32) -> (i32, i32) {
    %c0_i32 = arith.constant 0 : i32
    %c0_i32_0 = arith.constant 0 : i32
    %c0_i32_1 = arith.constant 0 : i32
    return %c0_i32, %c0_i32_0 : i32, i32
  }
  func.func @transform_34(%arg0: i32, %arg1: i32) -> (i32, i32) {
    %c0_i32 = arith.constant 0 : i32
    %c0_i32_0 = arith.constant 0 : i32
    %c0_i32_1 = arith.constant 0 : i32
    return %c0_i32, %c0_i32_0 : i32, i32
  }
  func.func @transform_35(%arg0: i32, %arg1: i32) -> (i32, i32) {
    %c0_i32 = arith.constant 0 : i32
    %c0_i32_0 = arith.constant 0 : i32
    %c0_i32_1 = arith.constant 0 : i32
    return %c0_i32, %c0_i32_0 : i32, i32
  }
  func.func @transform_36(%arg0: i32, %arg1: i32) -> (i32, i32) {
    %c0_i32 = arith.constant 0 : i32
    %c0_i32_0 = arith.constant 0 : i32
    %c0_i32_1 = arith.constant 0 : i32
    return %c0_i32, %c0_i32_0 : i32, i32
  }
  func.func @transform_37(%arg0: i32, %arg1: i32) -> (i32, i32) {
    %c0_i32 = arith.constant 0 : i32
    %c0_i32_0 = arith.constant 0 : i32
    %c0_i32_1 = arith.constant 0 : i32
    return %c0_i32, %c0_i32_0 : i32, i32
  }
  func.func @transform_38(%arg0: i32, %arg1: i32) -> (i32, i32) {
    %c0_i32 = arith.constant 0 : i32
    %c0_i32_0 = arith.constant 0 : i32
    %c0_i32_1 = arith.constant 0 : i32
    return %c0_i32, %c0_i32_0 : i32, i32
  }
  func.func @transform_39(%arg0: i32, %arg1: i32) -> (i32, i32) {
    %c0_i32 = arith.constant 0 : i32
    %c0_i32_0 = arith.constant 0 : i32
    %c0_i32_1 = arith.constant 0 : i32
    return %c0_i32, %c0_i32_0 : i32, i32
  }
  func.func @transform_40(%arg0: i32, %arg1: i32) -> (i32, i32) {
    %c0_i32 = arith.constant 0 : i32
    %c0_i32_0 = arith.constant 0 : i32
    %c0_i32_1 = arith.constant 0 : i32
    return %c0_i32, %c0_i32_0 : i32, i32
  }
  func.func @transform_41(%arg0: i32, %arg1: i32) -> (i32, i32) {
    %c0_i32 = arith.constant 0 : i32
    %c0_i32_0 = arith.constant 0 : i32
    %c0_i32_1 = arith.constant 0 : i32
    return %c0_i32, %c0_i32_0 : i32, i32
  }
  func.func @transform_42(%arg0: i32, %arg1: i32) -> (i32, i32) {
    %c0_i32 = arith.constant 0 : i32
    %c0_i32_0 = arith.constant 0 : i32
    %c0_i32_1 = arith.constant 0 : i32
    return %c0_i32, %c0_i32_0 : i32, i32
  }
  func.func @transform_43(%arg0: i32, %arg1: i32) -> (i32, i32) {
    %c0_i32 = arith.constant 0 : i32
    %c0_i32_0 = arith.constant 0 : i32
    %c0_i32_1 = arith.constant 0 : i32
    return %c0_i32, %c0_i32_0 : i32, i32
  }
}

</mosaic_0001>

<llo_original>
// kernel: tile.19
$region0: #{tile.19}
  %s0 = inlined_call_operand.vmem [shape: f32[4,3,32], index: 0, kind: input, shape index: {}]
  %s1 = inlined_call_operand.vmem [shape: f32[4,96], index: 1, kind: output, shape index: {}]
  $region1: #{tile.19} parent=0
    #allocation0 [shape = 'u8[4096]{0}', space=vmem, size = 0x1000, scoped, tag = 'scoped mem for output reshape']
    #allocation1 [shape = 'u8[16384]{0}', space=vmem, size = 0x4000, scoped, tag = 'scoped mem for input reshape']
    %s3 = sshll.u32 1, 4
    %s4 = ssub.s32 %s3, 1
    %s5 = smul.addr 4, 3
    %s6 = scalar_lea.vmem %s0, %s5
    %v7 = vld [vmem:[%s6] sm:%s4]
    %s8 = scalar_lea.vmem [#allocation1], 24
    %9 = vst [vmem:[%s8] sm:%s4] %v7
    %s10 = smul.addr 4, 2
    %s11 = scalar_lea.vmem %s0, %s10
    %v12 = vld [vmem:[%s11] sm:%s4]
    %s13 = scalar_lea.vmem [#allocation1], 16
    %14 = vst [vmem:[%s13] sm:%s4] %v12
    %s15 = scalar_lea.vmem %s0, 4
    %v16 = vld [vmem:[%s15] sm:%s4]
    %s17 = scalar_lea.vmem [#allocation1], 8
    %18 = vst [vmem:[%s17] sm:%s4] %v16
    %v19 = vld [vmem:[%s0] sm:%s4]
    %20 = vst [vmem:[#allocation1] sm:%s4] %v19
    %v21 = vld [vmem:[#allocation1] ss:$8 sm:$0xf]
    %vm22 = vcmask 261120
    %23 = vst.msk [vmem:[#allocation0] sm:$0xf] %vm22, %v21
    %s24 = scalar_lea.vmem [#allocation1], 2
    %v25 = vld [vmem:[%s24] ss:$8 sm:$0xf]
    %26 = vrot.lane.b32.xlu0 %v25, 64
    %v27 = vpop.permute.xlu0 %26
    %vm28 = vcmask 785920
    %29 = vst.msk [vmem:[#allocation0] sm:$0xf] %vm28, %v27
    %s30 = scalar_lea.vmem [#allocation1], 1
    %v31 = vld [vmem:[%s30] ss:$8 sm:$0xf]
    %32 = vrot.lane.b32.xlu0 %v31, 32
    %v33 = vpop.permute.xlu0 %32
    %vm34 = vcmask 523520
    %35 = vst.msk [vmem:[#allocation0] sm:$0xf] %vm34, %v33
    %s37 = sshll.u32 1, 4
    %s38 = ssub.s32 %s37, 1
    %v40 = vld [vmem:[#allocation0] sm:%s38]
    %s41 = sshll.u32 1, 4
    %s42 = ssub.s32 %s41, 1
    %43 = vst [vmem:[%s1] sm:%s42] %v40

// kernel: tile.29
$region0: #{tile.29}
  %s0 = inlined_call_operand.vmem [shape: f32[32,3,32], index: 0, kind: input, shape index: {}]
  %s1 = inlined_call_operand.vmem [shape: f32[32,96], index: 1, kind: output, shape index: {}]
  $region1: #{tile.29} parent=0
    #allocation0 [shape = 'u8[131072]{0}', space=vmem, size = 0x20000, scoped, tag = 'scoped mem for input reshape']
    %s3 = sshll.u32 1, 4
    %s4 = ssub.s32 %s3, 1
    %s5 = smul.addr 4, 31
    %s6 = scalar_lea.vmem %s0, %s5
    %v7 = vld [vmem:[%s6] sm:%s4]
    %s8 = scalar_lea.vmem [#allocation0], 248
    %9 = vst [vmem:[%s8] sm:%s4] %v7
    %s10 = smul.addr 4, 30
    %s11 = scalar_lea.vmem %s0, %s10
    %v12 = vld [vmem:[%s11] sm:%s4]
    %s13 = scalar_lea.vmem [#allocation0], 240
    %14 = vst [vmem:[%s13] sm:%s4] %v12
    %s15 = smul.addr 4, 29
    %s16 = scalar_lea.vmem %s0, %s15
    %v17 = vld [vmem:[%s16] sm:%s4]
    %s18 = scalar_lea.vmem [#allocation0], 232
    %19 = vst [vmem:[%s18] sm:%s4] %v17
    %s20 = smul.addr 4, 28
    %s21 = scalar_lea.vmem %s0, %s20
    %v22 = vld [vmem:[%s21] sm:%s4]
    %s23 = scalar_lea.vmem [#allocation0], 224
    %24 = vst [vmem:[%s23] sm:%s4] %v22
    %s25 = smul.addr 4, 27
    %s26 = scalar_lea.vmem %s0, %s25
    %v27 = vld [vmem:[%s26] sm:%s4]
    %s28 = scalar_lea.vmem [#allocation0], 216
    %29 = vst [vmem:[%s28] sm:%s4] %v27
    %s30 = smul.addr 4, 26
    %s31 = scalar_lea.vmem %s0, %s30
    %v32 = vld [vmem:[%s31] sm:%s4]
    %s33 = scalar_lea.vmem [#allocation0], 208
    %34 = vst [vmem:[%s33] sm:%s4] %v32
    %s35 = smul.addr 4, 25
    %s36 = scalar_lea.vmem %s0, %s35
    %v37 = vld [vmem:[%s36] sm:%s4]
    %s38 = scalar_lea.vmem [#allocation0], 200
    %39 = vst [vmem:[%s38] sm:%s4] %v37
    %s40 = smul.addr 4, 24
    %s41 = scalar_lea.vmem %s0, %s40
    %v42 = vld [vmem:[%s41] sm:%s4]
    %s43 = scalar_lea.vmem [#allocation0], 192
    %44 = vst [vmem:[%s43] sm:%s4] %v42
    %s45 = smul.addr 4, 23
    %s46 = scalar_lea.vmem %s0, %s45
    %v47 = vld [vmem:[%s46] sm:%s4]
    %s48 = scalar_lea.vmem [#allocation0], 184
    %49 = vst [vmem:[%s48] sm:%s4] %v47
    %s50 = smul.addr 4, 22
    %s51 = scalar_lea.vmem %s0, %s50
    %v52 = vld [vmem:[%s51] sm:%s4]
    %s53 = scalar_lea.vmem [#allocation0], 176
    %54 = vst [vmem:[%s53] sm:%s4] %v52
    %s55 = smul.addr 4, 21
    %s56 = scalar_lea.vmem %s0, %s55
    %v57 = vld [vmem:[%s56] sm:%s4]
    %s58 = scalar_lea.vmem [#allocation0], 168
    %59 = vst [vmem:[%s58] sm:%s4] %v57
    %s60 = smul.addr 4, 20
    %s61 = scalar_lea.vmem %s0, %s60
    %v62 = vld [vmem:[%s61] sm:%s4]
    %s63 = scalar_lea.vmem [#allocation0], 160
    %64 = vst [vmem:[%s63] sm:%s4] %v62
    %s65 = smul.addr 4, 19
    %s66 = scalar_lea.vmem %s0, %s65
    %v67 = vld [vmem:[%s66] sm:%s4]
    %s68 = scalar_lea.vmem [#allocation0], 152
    %69 = vst [vmem:[%s68] sm:%s4] %v67
    %s70 = smul.addr 4, 18
    %s71 = scalar_lea.vmem %s0, %s70
    %v72 = vld [vmem:[%s71] sm:%s4]
    %s73 = scalar_lea.vmem [#allocation0], 144
    %74 = vst [vmem:[%s73] sm:%s4] %v72
    %s75 = smul.addr 4, 17
    %s76 = scalar_lea.vmem %s0, %s75
    %v77 = vld [vmem:[%s76] sm:%s4]
    %s78 = scalar_lea.vmem [#allocation0], 136
    %79 = vst [vmem:[%s78] sm:%s4] %v77
    %s80 = smul.addr 4, 16
    %s81 = scalar_lea.vmem %s0, %s80
    %v82 = vld [vmem:[%s81] sm:%s4]
    %s83 = scalar_lea.vmem [#allocation0], 128
    %84 = vst [vmem:[%s83] sm:%s4] %v82
    %s85 = smul.addr 4, 15
    %s86 = scalar_lea.vmem %s0, %s85
    %v87 = vld [vmem:[%s86] sm:%s4]
    %s88 = scalar_lea.vmem [#allocation0], 120
    %89 = vst [vmem:[%s88] sm:%s4] %v87
    %s90 = smul.addr 4, 14
    %s91 = scalar_lea.vmem %s0, %s90
    %v92 = vld [vmem:[%s91] sm:%s4]
    %s93 = scalar_lea.vmem [#allocation0], 112
    %94 = vst [vmem:[%s93] sm:%s4] %v92
    %s95 = smul.addr 4, 13
    %s96 = scalar_lea.vmem %s0, %s95
    %v97 = vld [vmem:[%s96] sm:%s4]
    %s98 = scalar_lea.vmem [#allocation0], 104
    %99 = vst [vmem:[%s98] sm:%s4] %v97
    %s100 = smul.addr 4, 12
    %s101 = scalar_lea.vmem %s0, %s100
    %v102 = vld [vmem:[%s101] sm:%s4]
    %s103 = scalar_lea.vmem [#allocation0], 96
    %104 = vst [vmem:[%s103] sm:%s4] %v102
    %s105 = smul.addr 4, 11
    %s106 = scalar_lea.vmem %s0, %s105
    %v107 = vld [vmem:[%s106] sm:%s4]
    %s108 = scalar_lea.vmem [#allocation0], 88
    %109 = vst [vmem:[%s108] sm:%s4] %v107
    %s110 = smul.addr 4, 10
    %s111 = scalar_lea.vmem %s0, %s110
    %v112 = vld [vmem:[%s111] sm:%s4]
    %s113 = scalar_lea.vmem [#allocation0], 80
    %114 = vst [vmem:[%s113] sm:%s4] %v112
    %s115 = smul.addr 4, 9
    %s116 = scalar_lea.vmem %s0, %s115
    %v117 = vld [vmem:[%s116] sm:%s4]
    %s118 = scalar_lea.vmem [#allocation0], 72
    %119 = vst [vmem:[%s118] sm:%s4] %v117
    %s120 = smul.addr 4, 8
    %s121 = scalar_lea.vmem %s0, %s120
    %v122 = vld [vmem:[%s121] sm:%s4]
    %s123 = scalar_lea.vmem [#allocation0], 64
    %124 = vst [vmem:[%s123] sm:%s4] %v122
    %s125 = smul.addr 4, 7
    %s126 = scalar_lea.vmem %s0, %s125
    %v127 = vld [vmem:[%s126] sm:%s4]
    %s128 = scalar_lea.vmem [#allocation0], 56
    %129 = vst [vmem:[%s128] sm:%s4] %v127
    %s130 = smul.addr 4, 6
    %s131 = scalar_lea.vmem %s0, %s130
    %v132 = vld [vmem:[%s131] sm:%s4]
    %s133 = scalar_lea.vmem [#allocation0], 48
    %134 = vst [vmem:[%s133] sm:%s4] %v132
    %s135 = smul.addr 4, 5
    %s136 = scalar_lea.vmem %s0, %s135
    %v137 = vld [vmem:[%s136] sm:%s4]
    %s138 = scalar_lea.vmem [#allocation0], 40
    %139 = vst [vmem:[%s138] sm:%s4] %v137
    %s140 = smul.addr 4, 4
    %s141 = scalar_lea.vmem %s0, %s140
    %v142 = vld [vmem:[%s141] sm:%s4]
    %s143 = scalar_lea.vmem [#allocation0], 32
    %144 = vst [vmem:[%s143] sm:%s4] %v142
    %s145 = smul.addr 4, 3
    %s146 = scalar_lea.vmem %s0, %s145
    %v147 = vld [vmem:[%s146] sm:%s4]
    %s148 = scalar_lea.vmem [#allocation0], 24
    %149 = vst [vmem:[%s148] sm:%s4] %v147
    %s150 = smul.addr 4, 2
    %s151 = scalar_lea.vmem %s0, %s150
    %v152 = vld [vmem:[%s151] sm:%s4]
    %s153 = scalar_lea.vmem [#allocation0], 16
    %154 = vst [vmem:[%s153] sm:%s4] %v152
    %s155 = scalar_lea.vmem %s0, 4
    %v156 = vld [vmem:[%s155] sm:%s4]
    %s157 = scalar_lea.vmem [#allocation0], 8
    %158 = vst [vmem:[%s157] sm:%s4] %v156
    %v159 = vld [vmem:[%s0] sm:%s4]
    %160 = vst [vmem:[#allocation0] sm:%s4] %v159
    %v161 = vld [vmem:[#allocation0] ss:$8 sm:$0xf]
    %v162 = vld [vmem:[#allocation0] ss:$8 sm:$0xf0]
    %vm163 = vcmask 1047556
    %v164 = vsel %vm163, %v162, %v161
    %vm165 = vcmask 261120
    %166 = vst.msk [vmem:[%s1] sm:$0xff] %vm165, %v164
    %s167 = scalar_lea.vmem [#allocation0], 64
    %v168 = vld [vmem:[%s167] ss:$8 sm:$0xf]
    %s169 = scalar_lea.vmem [#allocation0], 64
    %v170 = vld [vmem:[%s169] ss:$8 sm:$0xf0]
    %vm171 = vcmask 1047556
    %v172 = vsel %vm171, %v170, %v168
    %vm173 = vcmask 261120
    %s174 = scalar_lea.vmem %s1, 8
    %175 = vst.msk [vmem:[%s174] sm:$0xff] %vm173, %v172
    %s176 = scalar_lea.vmem [#allocation0], 128
    %v177 = vld [vmem:[%s176] ss:$8 sm:$0xf]
    %s178 = scalar_lea.vmem [#allocation0], 128
    %v179 = vld [vmem:[%s178] ss:$8 sm:$0xf0]
    %vm180 = vcmask 1047556
    %v181 = vsel %vm180, %v179, %v177
    %vm182 = vcmask 261120
    %s183 = scalar_lea.vmem %s1, 16
    %184 = vst.msk [vmem:[%s183] sm:$0xff] %vm182, %v181
    %s185 = scalar_lea.vmem [#allocation0], 192
    %v186 = vld [vmem:[%s185] ss:$8 sm:$0xf]
    %s187 = scalar_lea.vmem [#allocation0], 192
    %v188 = vld [vmem:[%s187] ss:$8 sm:$0xf0]
    %vm189 = vcmask 1047556
    %v190 = vsel %vm189, %v188, %v186
    %vm191 = vcmask 261120
    %s192 = scalar_lea.vmem %s1, 24
    %193 = vst.msk [vmem:[%s192] sm:$0xff] %vm191, %v190
    %s194 = scalar_lea.vmem [#allocation0], 2
    %v195 = vld [vmem:[%s194] ss:$8 sm:$0xf]
    %s196 = scalar_lea.vmem [#allocation0], 2
    %v197 = vld [vmem:[%s196] ss:$8 sm:$0xf0]
    %vm198 = vcmask 1047556
    %v199 = vsel %vm198, %v197, %v195
    %200 = vrot.lane.b32.xlu0 %v199, 64
    %v201 = vpop.permute.xlu0 %200
    %vm202 = vcmask 785920
    %203 = vst.msk [vmem:[%s1] sm:$0xff] %vm202, %v201
    %s204 = scalar_lea.vmem [#allocation0], 66
    %v205 = vld [vmem:[%s204] ss:$8 sm:$0xf]
    %s206 = scalar_lea.vmem [#allocation0], 66
    %v207 = vld [vmem:[%s206] ss:$8 sm:$0xf0]
    %vm208 = vcmask 1047556
    %v209 = vsel %vm208, %v207, %v205
    %210 = vrot.lane.b32.xlu0 %v209, 64
    %v211 = vpop.permute.xlu0 %210
    %vm212 = vcmask 785920
    %s213 = scalar_lea.vmem %s1, 8
    %214 = vst.msk [vmem:[%s213] sm:$0xff] %vm212, %v211
    %s215 = scalar_lea.vmem [#allocation0], 130
    %v216 = vld [vmem:[%s215] ss:$8 sm:$0xf]
    %s217 = scalar_lea.vmem [#allocation0], 130
    %v218 = vld [vmem:[%s217] ss:$8 sm:$0xf0]
    %vm219 = vcmask 1047556
    %v220 = vsel %vm219, %v218, %v216
    %221 = vrot.lane.b32.xlu0 %v220, 64
    %v222 = vpop.permute.xlu0 %221
    %vm223 = vcmask 785920
    %s224 = scalar_lea.vmem %s1, 16
    %225 = vst.msk [vmem:[%s224] sm:$0xff] %vm223, %v222
    %s226 = scalar_lea.vmem [#allocation0], 194
    %v227 = vld [vmem:[%s226] ss:$8 sm:$0xf]
    %s228 = scalar_lea.vmem [#allocation0], 194
    %v229 = vld [vmem:[%s228] ss:$8 sm:$0xf0]
    %vm230 = vcmask 1047556
    %v231 = vsel %vm230, %v229, %v227
    %232 = vrot.lane.b32.xlu0 %v231, 64
    %v233 = vpop.permute.xlu0 %232
    %vm234 = vcmask 785920
    %s235 = scalar_lea.vmem %s1, 24
    %236 = vst.msk [vmem:[%s235] sm:$0xff] %vm234, %v233
    %s237 = scalar_lea.vmem [#allocation0], 1
    %v238 = vld [vmem:[%s237] ss:$8 sm:$0xf]
    %s239 = scalar_lea.vmem [#allocation0], 1
    %v240 = vld [vmem:[%s239] ss:$8 sm:$0xf0]
    %vm241 = vcmask 1047556
    %v242 = vsel %vm241, %v240, %v238
    %243 = vrot.lane.b32.xlu0 %v242, 32
    %v244 = vpop.permute.xlu0 %243
    %vm245 = vcmask 523520
    %246 = vst.msk [vmem:[%s1] sm:$0xff] %vm245, %v244
    %s247 = scalar_lea.vmem [#allocation0], 65
    %v248 = vld [vmem:[%s247] ss:$8 sm:$0xf]
    %s249 = scalar_lea.vmem [#allocation0], 65
    %v250 = vld [vmem:[%s249] ss:$8 sm:$0xf0]
    %vm251 = vcmask 1047556
    %v252 = vsel %vm251, %v250, %v248
    %253 = vrot.lane.b32.xlu0 %v252, 32
    %v254 = vpop.permute.xlu0 %253
    %vm255 = vcmask 523520
    %s256 = scalar_lea.vmem %s1, 8
    %257 = vst.msk [vmem:[%s256] sm:$0xff] %vm255, %v254
    %s258 = scalar_lea.vmem [#allocation0], 129
    %v259 = vld [vmem:[%s258] ss:$8 sm:$0xf]
    %s260 = scalar_lea.vmem [#allocation0], 129
    %v261 = vld [vmem:[%s260] ss:$8 sm:$0xf0]
    %vm262 = vcmask 1047556
    %v263 = vsel %vm262, %v261, %v259
    %264 = vrot.lane.b32.xlu0 %v263, 32
    %v265 = vpop.permute.xlu0 %264
    %vm266 = vcmask 523520
    %s267 = scalar_lea.vmem %s1, 16
    %268 = vst.msk [vmem:[%s267] sm:$0xff] %vm266, %v265
    %s269 = scalar_lea.vmem [#allocation0], 193
    %v270 = vld [vmem:[%s269] ss:$8 sm:$0xf]
    %s271 = scalar_lea.vmem [#allocation0], 193
    %v272 = vld [vmem:[%s271] ss:$8 sm:$0xf0]
    %vm273 = vcmask 1047556
    %v274 = vsel %vm273, %v272, %v270
    %275 = vrot.lane.b32.xlu0 %v274, 32
    %v276 = vpop.permute.xlu0 %275
    %vm277 = vcmask 523520
    %s278 = scalar_lea.vmem %s1, 24
    %279 = vst.msk [vmem:[%s278] sm:$0xff] %vm277, %v276

// kernel: _lambda_.1
$region0: #{_lambda_.1}
  #allocation0 [shape = 'u32[]', space=smem, size = 0x4, offset = 0x4, fixed_abs, tag = 'smem constant byte address 0x4 - core index']
  #allocation1 [shape = 'u32[144,128]{1,0:T(1,128)}', space=vmem, size = 0x12000, scoped, tag = 'internal scratch']
  #allocation2 [shape = 'bf16[8,32]{1,0:T(8,128)(2,1)}', space=vmem, size = 0x800, scoped, tag = 'scratch operand']
  #allocation3 [shape = 'bf16[8,32]{1,0:T(8,128)(2,1)}', space=vmem, size = 0x800, scoped, tag = 'scratch operand']
  #allocation4 [shape = 'bf16[8,32]{1,0:T(8,128)(2,1)}', space=vmem, size = 0x800, scoped, tag = 'scratch operand']
  #allocation5 [shape = 'bf16[8,96]{1,0:T(8,128)(2,1)}', space=vmem, size = 0x800, scoped, tag = 'scratch operand']
  #allocation6 [shape = 'f32[1,8]{1,0:T(1,128)}', space=vmem, size = 0x200, scoped, tag = 'scratch operand']
  #allocation7 [shape = 'f32[8,4]{1,0:T(8,128)}', space=vmem, size = 0x1000, scoped, tag = 'scratch operand']
  #allocation8 [shape = 'f32[8,32]{1,0:T(8,128)}', space=vmem, size = 0x1000, scoped, tag = 'scratch operand']
  #allocation9 [shape = 'f32[8,96]{1,0:T(8,128)}', space=vmem, size = 0x1000, scoped, tag = 'scratch operand']
  #allocation10 [shape = 'f32[64,4]{1,0:T(8,128)}', space=vmem, size = 0x8000, scoped, tag = 'scratch operand']
  %s0 = inlined_call_operand.smem [shape: u32[44], index: -1, kind: input, shape index: {}]
  %s1 = sld [smem:[%s0]]
  %s2 = scalar_lea.smem %s0, 1
  %s3 = sld [smem:[%s2]]
  %s4 = scalar_lea.smem %s0, 2
  %s5 = sld [smem:[%s4]]
  %s6 = scalar_lea.smem %s0, 3
  %s7 = sld [smem:[%s6]]
  %s8 = scalar_lea.smem %s0, 4
  %s9 = sld [smem:[%s8]]
  %s10 = scalar_lea.smem %s0, 5
  %s11 = sld [smem:[%s10]]
  %s12 = scalar_lea.smem %s0, 6
  %s13 = sld [smem:[%s12]]
  %s14 = scalar_lea.smem %s0, 7
  %s15 = sld [smem:[%s14]]
  %s16 = scalar_lea.smem %s0, 8
  %s17 = sld [smem:[%s16]]
  %s18 = scalar_lea.smem %s0, 9
  %s19 = sld [smem:[%s18]]
  %s20 = scalar_lea.smem %s0, 10
  %s21 = sld [smem:[%s20]]
  %s22 = scalar_lea.smem %s0, 11
  %s23 = sld [smem:[%s22]]
  %s24 = scalar_lea.smem %s0, 12
  %s25 = sld [smem:[%s24]]
  %s26 = scalar_lea.smem %s0, 13
  %s27 = sld [smem:[%s26]]
  %s28 = scalar_lea.smem %s0, 14
  %s29 = sld [smem:[%s28]]
  %s30 = scalar_lea.smem %s0, 15
  %s31 = sld [smem:[%s30]]
  %s32 = scalar_lea.smem %s0, 16
  %s33 = sld [smem:[%s32]]
  %s34 = scalar_lea.smem %s0, 17
  %s35 = sld [smem:[%s34]]
  %s36 = scalar_lea.smem %s0, 18
  %s37 = sld [smem:[%s36]]
  %s38 = scalar_lea.smem %s0, 19
  %s39 = sld [smem:[%s38]]
  %s40 = scalar_lea.smem %s0, 20
  %s41 = sld [smem:[%s40]]
  %s42 = scalar_lea.smem %s0, 21
  %s43 = sld [smem:[%s42]]
  %s44 = scalar_lea.smem %s0, 22
  %s45 = sld [smem:[%s44]]
  %s46 = scalar_lea.smem %s0, 23
  %s47 = sld [smem:[%s46]]
  %s48 = scalar_lea.smem %s0, 24
  %s49 = sld [smem:[%s48]]
  %s50 = scalar_lea.smem %s0, 25
  %s51 = sld [smem:[%s50]]
  %s52 = scalar_lea.smem %s0, 26
  %s53 = sld [smem:[%s52]]
  %s54 = scalar_lea.smem %s0, 27
  %s55 = sld [smem:[%s54]]
  %s56 = scalar_lea.smem %s0, 28
  %s57 = sld [smem:[%s56]]
  %s58 = scalar_lea.smem %s0, 29
  %s59 = sld [smem:[%s58]]
  %s60 = scalar_lea.smem %s0, 30
  %s61 = sld [smem:[%s60]]
  %s62 = scalar_lea.smem %s0, 31
  %s63 = sld [smem:[%s62]]
  %s64 = scalar_lea.smem %s0, 32
  %s65 = sld [smem:[%s64]]
  %s66 = scalar_lea.smem %s0, 33
  %s67 = sld [smem:[%s66]]
  %s68 = scalar_lea.smem %s0, 34
  %s69 = sld [smem:[%s68]]
  %s70 = scalar_lea.smem %s0, 35
  %s71 = sld [smem:[%s70]]
  %s72 = scalar_lea.smem %s0, 36
  %s73 = sld [smem:[%s72]]
  %s74 = scalar_lea.smem %s0, 37
  %s75 = sld [smem:[%s74]]
  %s76 = scalar_lea.smem %s0, 38
  %s77 = sld [smem:[%s76]]
  %s78 = scalar_lea.smem %s0, 39
  %s79 = sld [smem:[%s78]]
  %s80 = scalar_lea.smem %s0, 40
  %s81 = sld [smem:[%s80]]
  %s82 = scalar_lea.smem %s0, 41
  %s83 = sld [smem:[%s82]]
  %s84 = scalar_lea.smem %s0, 42
  %s85 = sld [smem:[%s84]]
  %s86 = scalar_lea.smem %s0, 43
  %s87 = sld [smem:[%s86]]
  %88 = xla_tuple %s85, %s87
  %s89 = sld [smem:[#allocation0]]
  $region225: #{_lambda_.1} parent=0
    _
  %s91 = ssub.s32 1, %s89
  %s92 = scalar_select 0, %s91, %s89
  $region1: #{_lambda_.1} parent=0
    #allocation11 [shape = 'u8[4096]{0}', space=vmem, size = 0x1000, scoped, tag = 'output window, operand 0, single buffered']
    #allocation12 [shape = 's32[2]{0}', space=sflag, size = 0x8, scoped, tag = 'scoped memory for _lambda_.1']
    %93 = vsyncpa [#allocation12], 0
    loop: start=0, step=1, limit=6
    $region2: #{_lambda_.1} parent=1 // loop_pre_header
      _
    $region3: #{_lambda_.1} parent=1 // loop_header
      %s95 = sphi 0, %s99
      %p96 = scmp.ge.s32.totalorder %s95, 6
      %s102 = sphi 0, %s114
      %s103 = sphi 0, %s110
      %s104 = sphi 0, %s102
      %s105 = sphi 0, %s103
      %s106 = sphi 0, %s104
      %s107 = sphi 0, %s105
      %s117 = sphi 0, %s119
      %s120 = sphi 0, %s117
      %s121 = sphi 0, %s120
      %s137 = sphi 0, %s121
      %s143 = sphi 0, %s145
      %s146 = sphi 0, %s143
      %s147 = sphi 0, %s146
      %s163 = sphi 0, %s147
      %s169 = sphi 0, %s171
      %s172 = sphi 0, %s169
      %s173 = sphi 0, %s172
      %s189 = sphi 0, %s173
      %s195 = sphi 0, %s197
      %s198 = sphi 0, %s195
      %s199 = sphi 0, %s198
      %s215 = sphi 0, %s199
      %s219 = sphi 0, %s219
      %s221 = sphi 0, %s219
      %s222 = sphi 0, %s221
      %s236 = sphi 0, %s222
      %s240 = sphi 0, %s240
      %s242 = sphi 0, %s240
      %s243 = sphi 0, %s242
      %s257 = sphi 0, %s243
      %s261 = sphi 0, %s261
      %s263 = sphi 0, %s261
      %s264 = sphi 0, %s263
      %s278 = sphi 0, %s264
      %s282 = sphi 0, %s282
      %s284 = sphi 0, %s282
      %s285 = sphi 0, %s284
      %s299 = sphi 0, %s285
      %s303 = sphi 0, %s303
      %s305 = sphi 0, %s303
      %s306 = sphi 0, %s305
      %s320 = sphi 0, %s306
      %s324 = sphi 0, %s324
      %s326 = sphi 0, %s324
      %s327 = sphi 0, %s326
      %s341 = sphi 0, %s327
      %s345 = sphi 0, %s345
      %s347 = sphi 0, %s345
      %s348 = sphi 0, %s347
      %s362 = sphi 0, %s348
      %s366 = sphi 0, %s366
      %s368 = sphi 0, %s366
      %s369 = sphi 0, %s368
      %s383 = sphi 0, %s369
      %s387 = sphi 0, %s387
      %s389 = sphi 0, %s387
      %s390 = sphi 0, %s389
      %s404 = sphi 0, %s390
      %s408 = sphi 0, %s408
      %s410 = sphi 0, %s408
      %s411 = sphi 0, %s410
      %s425 = sphi 0, %s411
      %s429 = sphi 0, %s429
      %s431 = sphi 0, %s429
      %s432 = sphi 0, %s431
      %s446 = sphi 0, %s432
      %s450 = sphi 0, %s450
      %s452 = sphi 0, %s450
      %s453 = sphi 0, %s452
      %s467 = sphi 0, %s453
      %s471 = sphi 0, %s471
      %s473 = sphi 0, %s471
      %s474 = sphi 0, %s473
      %s488 = sphi 0, %s474
      %s492 = sphi 0, %s492
      %s494 = sphi 0, %s492
      %s495 = sphi 0, %s494
      %s509 = sphi 0, %s495
      %s513 = sphi 0, %s513
      %s515 = sphi 0, %s513
      %s516 = sphi 0, %s515
      %s530 = sphi 0, %s516
      %s534 = sphi 0, %s534
      %s536 = sphi 0, %s534
      %s537 = sphi 0, %s536
      %s551 = sphi 0, %s537
      %s555 = sphi 0, %s555
      %s557 = sphi 0, %s555
      %s558 = sphi 0, %s557
      %s572 = sphi 0, %s558
      %s576 = sphi 0, %s576
      %s578 = sphi 0, %s576
      %s579 = sphi 0, %s578
      %s593 = sphi 0, %s579
      %s597 = sphi 0, %s597
      %s599 = sphi 0, %s597
      %s600 = sphi 0, %s599
      %s614 = sphi 0, %s600
      %s618 = sphi 0, %s618
      %s620 = sphi 0, %s618
      %s621 = sphi 0, %s620
      %s635 = sphi 0, %s621
      %s639 = sphi 0, %s639
      %s641 = sphi 0, %s639
      %s642 = sphi 0, %s641
      %s656 = sphi 0, %s642
      %s660 = sphi 0, %s660
      %s662 = sphi 0, %s660
      %s663 = sphi 0, %s662
      %s677 = sphi 0, %s663
      %s681 = sphi 0, %s681
      %s683 = sphi 0, %s681
      %s684 = sphi 0, %s683
      %s698 = sphi 0, %s684
      %s702 = sphi 0, %s702
      %s704 = sphi 0, %s702
      %s705 = sphi 0, %s704
      %s719 = sphi 0, %s705
      %s723 = sphi 0, %s723
      %s725 = sphi 0, %s723
      %s726 = sphi 0, %s725
      %s740 = sphi 0, %s726
      %s744 = sphi 0, %s744
      %s746 = sphi 0, %s744
      %s747 = sphi 0, %s746
      %s761 = sphi 0, %s747
      %s765 = sphi 0, %s765
      %s767 = sphi 0, %s765
      %s768 = sphi 0, %s767
      %s782 = sphi 0, %s768
      %s786 = sphi 0, %s786
      %s788 = sphi 0, %s786
      %s789 = sphi 0, %s788
      %s803 = sphi 0, %s789
      %s807 = sphi 0, %s807
      %s809 = sphi 0, %s807
      %s810 = sphi 0, %s809
      %s824 = sphi 0, %s810
      %s828 = sphi 0, %s828
      %s830 = sphi 0, %s828
      %s831 = sphi 0, %s830
      %s845 = sphi 0, %s831
      %s849 = sphi 0, %s849
      %s851 = sphi 0, %s849
      %s852 = sphi 0, %s851
      %s866 = sphi 0, %s852
      %s870 = sphi 0, %s870
      %s872 = sphi 0, %s870
      %s873 = sphi 0, %s872
      %s887 = sphi 0, %s873
      %s891 = sphi 0, %s891
      %s893 = sphi 0, %s891
      %s894 = sphi 0, %s893
      %s908 = sphi 0, %s894
      %s912 = sphi 0, %s912
      %s914 = sphi 0, %s912
      %s915 = sphi 0, %s914
      %s929 = sphi 0, %s915
      %s933 = sphi 0, %s933
      %s935 = sphi 0, %s933
      %s936 = sphi 0, %s935
      %s950 = sphi 0, %s936
      %s954 = sphi 0, %s954
      %s956 = sphi 0, %s954
      %s957 = sphi 0, %s956
      %s971 = sphi 0, %s957
      %s975 = sphi 0, %s975
      %s977 = sphi 0, %s975
      %s978 = sphi 0, %s977
      %s992 = sphi 0, %s978
      %s996 = sphi 0, %s996
      %s998 = sphi 0, %s996
      %s999 = sphi 0, %s998
      %s1013 = sphi 0, %s999
      %s1017 = sphi 0, %s1017
      %s1019 = sphi 0, %s1017
      %s1020 = sphi 0, %s1019
      %s1034 = sphi 0, %s1020
      %s1038 = sphi 0, %s1038
      %s1040 = sphi 0, %s1038
      %s1041 = sphi 0, %s1040
      %s1055 = sphi 0, %s1041
    $region4: #{_lambda_.1} parent=1 // loop_header_branch
      %98 = sbr.rel (%p96) target = $region8
    $region5: #{_lambda_.1} parent=1 // loop_body
      %s100 = ssub.s32 %s95, 1
      %s101 = ssub.s32 %s95, 2
      %s108 = sadd.s32 1, %s103
      %p109 = scmp.ge.s32.totalorder %s108, 2
      %s110 = scalar_select %p109, 0, %s108
      %s111 = sadd.s32 1, %s102
      %s112 = scalar_select %p109, %s111, %s102
      %p113 = scmp.ge.s32.totalorder %s112, 2
      %s114 = scalar_select %p113, 0, %s112
      %s115 = ssub.s32 %s103, %s110
      %p116 = scmp.eq.s32.totalorder %s115, 0
      %s118 = sadd.s32 %s117, 1
      %s119 = scalar_select %p116, %s117, %s118
      %p122 = pneg %p116
      %p123 = scmp.eq.s32.totalorder %s95, 3
      %p124 = por %p122, %p123
      %p125 = scmp.ne.s32.totalorder %s117, %s120
      %p126 = scmp.eq.s32.totalorder %s95, 0
      %p127 = por %p125, %p126
      %p128 = scmp.ne.s32.totalorder %s117, %s120
      %p129 = scmp.eq.s32.totalorder %s100, 3
      %p130 = por %p128, %p129
      %p131 = scmp.ne.s32.totalorder %s120, %s121
      %p132 = scmp.eq.s32.totalorder %s100, 0
      %p133 = por %p131, %p132
      %p134 = scmp.ne.s32.totalorder %s120, %s121
      %p135 = scmp.eq.s32.totalorder %s101, 3
      %p136 = por %p134, %p135
      %p138 = scmp.ne.s32.totalorder %s121, %s137
      %p139 = scmp.eq.s32.totalorder %s101, 0
      %p140 = por %p138, %p139
      %s141 = ssub.s32 %s103, %s110
      %p142 = scmp.eq.s32.totalorder %s141, 0
      %s144 = sadd.s32 %s143, 1
      %s145 = scalar_select %p142, %s143, %s144
      %p148 = pneg %p142
      %p149 = scmp.eq.s32.totalorder %s95, 3
      %p150 = por %p148, %p149
      %p151 = scmp.ne.s32.totalorder %s143, %s146
      %p152 = scmp.eq.s32.totalorder %s95, 0
      %p153 = por %p151, %p152
      %p154 = scmp.ne.s32.totalorder %s143, %s146
      %p155 = scmp.eq.s32.totalorder %s100, 3
      %p156 = por %p154, %p155
      %p157 = scmp.ne.s32.totalorder %s146, %s147
      %p158 = scmp.eq.s32.totalorder %s100, 0
      %p159 = por %p157, %p158
      %p160 = scmp.ne.s32.totalorder %s146, %s147
      %p161 = scmp.eq.s32.totalorder %s101, 3
      %p162 = por %p160, %p161
      %p164 = scmp.ne.s32.totalorder %s147, %s163
      %p165 = scmp.eq.s32.totalorder %s101, 0
      %p166 = por %p164, %p165
      %s167 = ssub.s32 %s103, %s110
      %p168 = scmp.eq.s32.totalorder %s167, 0
      %s170 = sadd.s32 %s169, 1
      %s171 = scalar_select %p168, %s169, %s170
      %p174 = pneg %p168
      %p175 = scmp.eq.s32.totalorder %s95, 3
      %p176 = por %p174, %p175
      %p177 = scmp.ne.s32.totalorder %s169, %s172
      %p178 = scmp.eq.s32.totalorder %s95, 0
      %p179 = por %p177, %p178
      %p180 = scmp.ne.s32.totalorder %s169, %s172
      %p181 = scmp.eq.s32.totalorder %s100, 3
      %p182 = por %p180, %p181
      %p183 = scmp.ne.s32.totalorder %s172, %s173
      %p184 = scmp.eq.s32.totalorder %s100, 0
      %p185 = por %p183, %p184
      %p186 = scmp.ne.s32.totalorder %s172, %s173
      %p187 = scmp.eq.s32.totalorder %s101, 3
      %p188 = por %p186, %p187
      %p190 = scmp.ne.s32.totalorder %s173, %s189
      %p191 = scmp.eq.s32.totalorder %s101, 0
      %p192 = por %p190, %p191
      %s193 = ssub.s32 %s103, %s110
      %p194 = scmp.eq.s32.totalorder %s193, 0
      %s196 = sadd.s32 %s195, 1
      %s197 = scalar_select %p194, %s195, %s196
      %p200 = pneg %p194
      %p201 = scmp.eq.s32.totalorder %s95, 3
      %p202 = por %p200, %p201
      %p203 = scmp.ne.s32.totalorder %s195, %s198
      %p204 = scmp.eq.s32.totalorder %s95, 0
      %p205 = por %p203, %p204
      %p206 = scmp.ne.s32.totalorder %s195, %s198
      %p207 = scmp.eq.s32.totalorder %s100, 3
      %p208 = por %p206, %p207
      %p209 = scmp.ne.s32.totalorder %s198, %s199
      %p210 = scmp.eq.s32.totalorder %s100, 0
      %p211 = por %p209, %p210
      %p212 = scmp.ne.s32.totalorder %s198, %s199
      %p213 = scmp.eq.s32.totalorder %s101, 3
      %p214 = por %p212, %p213
      %p216 = scmp.ne.s32.totalorder %s199, %s215
      %p217 = scmp.eq.s32.totalorder %s101, 0
      %p218 = por %p216, %p217
      %s220 = sadd.s32 %s219, 1
      %p223 = scmp.eq.s32.totalorder %s95, 3
      %p224 = scmp.ne.s32.totalorder %s219, %s221
      %p225 = scmp.eq.s32.totalorder %s95, 0
      %p226 = por %p224, %p225
      %p227 = scmp.ne.s32.totalorder %s219, %s221
      %p228 = scmp.eq.s32.totalorder %s100, 3
      %p229 = por %p227, %p228
      %p230 = scmp.ne.s32.totalorder %s221, %s222
      %p231 = scmp.eq.s32.totalorder %s100, 0
      %p232 = por %p230, %p231
      %p233 = scmp.ne.s32.totalorder %s221, %s222
      %p234 = scmp.eq.s32.totalorder %s101, 3
      %p235 = por %p233, %p234
      %p237 = scmp.ne.s32.totalorder %s222, %s236
      %p238 = scmp.eq.s32.totalorder %s101, 0
      %p239 = por %p237, %p238
      %s241 = sadd.s32 %s240, 1
      %p244 = scmp.eq.s32.totalorder %s95, 3
      %p245 = scmp.ne.s32.totalorder %s240, %s242
      %p246 = scmp.eq.s32.totalorder %s95, 0
      %p247 = por %p245, %p246
      %p248 = scmp.ne.s32.totalorder %s240, %s242
      %p249 = scmp.eq.s32.totalorder %s100, 3
      %p250 = por %p248, %p249
      %p251 = scmp.ne.s32.totalorder %s242, %s243
      %p252 = scmp.eq.s32.totalorder %s100, 0
      %p253 = por %p251, %p252
      %p254 = scmp.ne.s32.totalorder %s242, %s243
      %p255 = scmp.eq.s32.totalorder %s101, 3
      %p256 = por %p254, %p255
      %p258 = scmp.ne.s32.totalorder %s243, %s257
      %p259 = scmp.eq.s32.totalorder %s101, 0
      %p260 = por %p258, %p259
      %s262 = sadd.s32 %s261, 1
      %p265 = scmp.eq.s32.totalorder %s95, 3
      %p266 = scmp.ne.s32.totalorder %s261, %s263
      %p267 = scmp.eq.s32.totalorder %s95, 0
      %p268 = por %p266, %p267
      %p269 = scmp.ne.s32.totalorder %s261, %s263
      %p270 = scmp.eq.s32.totalorder %s100, 3
      %p271 = por %p269, %p270
      %p272 = scmp.ne.s32.totalorder %s263, %s264
      %p273 = scmp.eq.s32.totalorder %s100, 0
      %p274 = por %p272, %p273
      %p275 = scmp.ne.s32.totalorder %s263, %s264
      %p276 = scmp.eq.s32.totalorder %s101, 3
      %p277 = por %p275, %p276
      %p279 = scmp.ne.s32.totalorder %s264, %s278
      %p280 = scmp.eq.s32.totalorder %s101, 0
      %p281 = por %p279, %p280
      %s283 = sadd.s32 %s282, 1
      %p286 = scmp.eq.s32.totalorder %s95, 3
      %p287 = scmp.ne.s32.totalorder %s282, %s284
      %p288 = scmp.eq.s32.totalorder %s95, 0
      %p289 = por %p287, %p288
      %p290 = scmp.ne.s32.totalorder %s282, %s284
      %p291 = scmp.eq.s32.totalorder %s100, 3
      %p292 = por %p290, %p291
      %p293 = scmp.ne.s32.totalorder %s284, %s285
      %p294 = scmp.eq.s32.totalorder %s100, 0
      %p295 = por %p293, %p294
      %p296 = scmp.ne.s32.totalorder %s284, %s285
      %p297 = scmp.eq.s32.totalorder %s101, 3
      %p298 = por %p296, %p297
      %p300 = scmp.ne.s32.totalorder %s285, %s299
      %p301 = scmp.eq.s32.totalorder %s101, 0
      %p302 = por %p300, %p301
      %s304 = sadd.s32 %s303, 1
      %p307 = scmp.eq.s32.totalorder %s95, 3
      %p308 = scmp.ne.s32.totalorder %s303, %s305
      %p309 = scmp.eq.s32.totalorder %s95, 0
      %p310 = por %p308, %p309
      %p311 = scmp.ne.s32.totalorder %s303, %s305
      %p312 = scmp.eq.s32.totalorder %s100, 3
      %p313 = por %p311, %p312
      %p314 = scmp.ne.s32.totalorder %s305, %s306
      %p315 = scmp.eq.s32.totalorder %s100, 0
      %p316 = por %p314, %p315
      %p317 = scmp.ne.s32.totalorder %s305, %s306
      %p318 = scmp.eq.s32.totalorder %s101, 3
      %p319 = por %p317, %p318
      %p321 = scmp.ne.s32.totalorder %s306, %s320
      %p322 = scmp.eq.s32.totalorder %s101, 0
      %p323 = por %p321, %p322
      %s325 = sadd.s32 %s324, 1
      %p328 = scmp.eq.s32.totalorder %s95, 3
      %p329 = scmp.ne.s32.totalorder %s324, %s326
      %p330 = scmp.eq.s32.totalorder %s95, 0
      %p331 = por %p329, %p330
      %p332 = scmp.ne.s32.totalorder %s324, %s326
      %p333 = scmp.eq.s32.totalorder %s100, 3
      %p334 = por %p332, %p333
      %p335 = scmp.ne.s32.totalorder %s326, %s327
      %p336 = scmp.eq.s32.totalorder %s100, 0
      %p337 = por %p335, %p336
      %p338 = scmp.ne.s32.totalorder %s326, %s327
      %p339 = scmp.eq.s32.totalorder %s101, 3
      %p340 = por %p338, %p339
      %p342 = scmp.ne.s32.totalorder %s327, %s341
      %p343 = scmp.eq.s32.totalorder %s101, 0
      %p344 = por %p342, %p343
      %s346 = sadd.s32 %s345, 1
      %p349 = scmp.eq.s32.totalorder %s95, 3
      %p350 = scmp.ne.s32.totalorder %s345, %s347
      %p351 = scmp.eq.s32.totalorder %s95, 0
      %p352 = por %p350, %p351
      %p353 = scmp.ne.s32.totalorder %s345, %s347
      %p354 = scmp.eq.s32.totalorder %s100, 3
      %p355 = por %p353, %p354
      %p356 = scmp.ne.s32.totalorder %s347, %s348
      %p357 = scmp.eq.s32.totalorder %s100, 0
      %p358 = por %p356, %p357
      %p359 = scmp.ne.s32.totalorder %s347, %s348
      %p360 = scmp.eq.s32.totalorder %s101, 3
      %p361 = por %p359, %p360
      %p363 = scmp.ne.s32.totalorder %s348, %s362
      %p364 = scmp.eq.s32.totalorder %s101, 0
      %p365 = por %p363, %p364
      %s367 = sadd.s32 %s366, 1
      %p370 = scmp.eq.s32.totalorder %s95, 3
      %p371 = scmp.ne.s32.totalorder %s366, %s368
      %p372 = scmp.eq.s32.totalorder %s95, 0
      %p373 = por %p371, %p372
      %p374 = scmp.ne.s32.totalorder %s366, %s368
      %p375 = scmp.eq.s32.totalorder %s100, 3
      %p376 = por %p374, %p375
      %p377 = scmp.ne.s32.totalorder %s368, %s369
      %p378 = scmp.eq.s32.totalorder %s100, 0
      %p379 = por %p377, %p378
      %p380 = scmp.ne.s32.totalorder %s368, %s369
      %p381 = scmp.eq.s32.totalorder %s101, 3
      %p382 = por %p380, %p381
      %p384 = scmp.ne.s32.totalorder %s369, %s383
      %p385 = scmp.eq.s32.totalorder %s101, 0
      %p386 = por %p384, %p385
      %s388 = sadd.s32 %s387, 1
      %p391 = scmp.eq.s32.totalorder %s95, 3
      %p392 = scmp.ne.s32.totalorder %s387, %s389
      %p393 = scmp.eq.s32.totalorder %s95, 0
      %p394 = por %p392, %p393
      %p395 = scmp.ne.s32.totalorder %s387, %s389
      %p396 = scmp.eq.s32.totalorder %s100, 3
      %p397 = por %p395, %p396
      %p398 = scmp.ne.s32.totalorder %s389, %s390
      %p399 = scmp.eq.s32.totalorder %s100, 0
      %p400 = por %p398, %p399
      %p401 = scmp.ne.s32.totalorder %s389, %s390
      %p402 = scmp.eq.s32.totalorder %s101, 3
      %p403 = por %p401, %p402
      %p405 = scmp.ne.s32.totalorder %s390, %s404
      %p406 = scmp.eq.s32.totalorder %s101, 0
      %p407 = por %p405, %p406
      %s409 = sadd.s32 %s408, 1
      %p412 = scmp.eq.s32.totalorder %s95, 3
      %p413 = scmp.ne.s32.totalorder %s408, %s410
      %p414 = scmp.eq.s32.totalorder %s95, 0
      %p415 = por %p413, %p414
      %p416 = scmp.ne.s32.totalorder %s408, %s410
      %p417 = scmp.eq.s32.totalorder %s100, 3
      %p418 = por %p416, %p417
      %p419 = scmp.ne.s32.totalorder %s410, %s411
      %p420 = scmp.eq.s32.totalorder %s100, 0
      %p421 = por %p419, %p420
      %p422 = scmp.ne.s32.totalorder %s410, %s411
      %p423 = scmp.eq.s32.totalorder %s101, 3
      %p424 = por %p422, %p423
      %p426 = scmp.ne.s32.totalorder %s411, %s425
      %p427 = scmp.eq.s32.totalorder %s101, 0
      %p428 = por %p426, %p427
      %s430 = sadd.s32 %s429, 1
      %p433 = scmp.eq.s32.totalorder %s95, 3
      %p434 = scmp.ne.s32.totalorder %s429, %s431
      %p435 = scmp.eq.s32.totalorder %s95, 0
      %p436 = por %p434, %p435
      %p437 = scmp.ne.s32.totalorder %s429, %s431
      %p438 = scmp.eq.s32.totalorder %s100, 3
      %p439 = por %p437, %p438
      %p440 = scmp.ne.s32.totalorder %s431, %s432
      %p441 = scmp.eq.s32.totalorder %s100, 0
      %p442 = por %p440, %p441
      %p443 = scmp.ne.s32.totalorder %s431, %s432
      %p444 = scmp.eq.s32.totalorder %s101, 3
      %p445 = por %p443, %p444
      %p447 = scmp.ne.s32.totalorder %s432, %s446
      %p448 = scmp.eq.s32.totalorder %s101, 0
      %p449 = por %p447, %p448
      %s451 = sadd.s32 %s450, 1
      %p454 = scmp.eq.s32.totalorder %s95, 3
      %p455 = scmp.ne.s32.totalorder %s450, %s452
      %p456 = scmp.eq.s32.totalorder %s95, 0
      %p457 = por %p455, %p456
      %p458 = scmp.ne.s32.totalorder %s450, %s452
      %p459 = scmp.eq.s32.totalorder %s100, 3
      %p460 = por %p458, %p459
      %p461 = scmp.ne.s32.totalorder %s452, %s453
      %p462 = scmp.eq.s32.totalorder %s100, 0
      %p463 = por %p461, %p462
      %p464 = scmp.ne.s32.totalorder %s452, %s453
      %p465 = scmp.eq.s32.totalorder %s101, 3
      %p466 = por %p464, %p465
      %p468 = scmp.ne.s32.totalorder %s453, %s467
      %p469 = scmp.eq.s32.totalorder %s101, 0
      %p470 = por %p468, %p469
      %s472 = sadd.s32 %s471, 1
      %p475 = scmp.eq.s32.totalorder %s95, 3
      %p476 = scmp.ne.s32.totalorder %s471, %s473
      %p477 = scmp.eq.s32.totalorder %s95, 0
      %p478 = por %p476, %p477
      %p479 = scmp.ne.s32.totalorder %s471, %s473
      %p480 = scmp.eq.s32.totalorder %s100, 3
      %p481 = por %p479, %p480
      %p482 = scmp.ne.s32.totalorder %s473, %s474
      %p483 = scmp.eq.s32.totalorder %s100, 0
      %p484 = por %p482, %p483
      %p485 = scmp.ne.s32.totalorder %s473, %s474
      %p486 = scmp.eq.s32.totalorder %s101, 3
      %p487 = por %p485, %p486
      %p489 = scmp.ne.s32.totalorder %s474, %s488
      %p490 = scmp.eq.s32.totalorder %s101, 0
      %p491 = por %p489, %p490
      %s493 = sadd.s32 %s492, 1
      %p496 = scmp.eq.s32.totalorder %s95, 3
      %p497 = scmp.ne.s32.totalorder %s492, %s494
      %p498 = scmp.eq.s32.totalorder %s95, 0
      %p499 = por %p497, %p498
      %p500 = scmp.ne.s32.totalorder %s492, %s494
      %p501 = scmp.eq.s32.totalorder %s100, 3
      %p502 = por %p500, %p501
      %p503 = scmp.ne.s32.totalorder %s494, %s495
      %p504 = scmp.eq.s32.totalorder %s100, 0
      %p505 = por %p503, %p504
      %p506 = scmp.ne.s32.totalorder %s494, %s495
      %p507 = scmp.eq.s32.totalorder %s101, 3
      %p508 = por %p506, %p507
      %p510 = scmp.ne.s32.totalorder %s495, %s509
      %p511 = scmp.eq.s32.totalorder %s101, 0
      %p512 = por %p510, %p511
      %s514 = sadd.s32 %s513, 1
      %p517 = scmp.eq.s32.totalorder %s95, 3
      %p518 = scmp.ne.s32.totalorder %s513, %s515
      %p519 = scmp.eq.s32.totalorder %s95, 0
      %p520 = por %p518, %p519
      %p521 = scmp.ne.s32.totalorder %s513, %s515
      %p522 = scmp.eq.s32.totalorder %s100, 3
      %p523 = por %p521, %p522
      %p524 = scmp.ne.s32.totalorder %s515, %s516
      %p525 = scmp.eq.s32.totalorder %s100, 0
      %p526 = por %p524, %p525
      %p527 = scmp.ne.s32.totalorder %s515, %s516
      %p528 = scmp.eq.s32.totalorder %s101, 3
      %p529 = por %p527, %p528
      %p531 = scmp.ne.s32.totalorder %s516, %s530
      %p532 = scmp.eq.s32.totalorder %s101, 0
      %p533 = por %p531, %p532
      %s535 = sadd.s32 %s534, 1
      %p538 = scmp.eq.s32.totalorder %s95, 3
      %p539 = scmp.ne.s32.totalorder %s534, %s536
      %p540 = scmp.eq.s32.totalorder %s95, 0
      %p541 = por %p539, %p540
      %p542 = scmp.ne.s32.totalorder %s534, %s536
      %p543 = scmp.eq.s32.totalorder %s100, 3
      %p544 = por %p542, %p543
      %p545 = scmp.ne.s32.totalorder %s536, %s537
      %p546 = scmp.eq.s32.totalorder %s100, 0
      %p547 = por %p545, %p546
      %p548 = scmp.ne.s32.totalorder %s536, %s537
      %p549 = scmp.eq.s32.totalorder %s101, 3
      %p550 = por %p548, %p549
      %p552 = scmp.ne.s32.totalorder %s537, %s551
      %p553 = scmp.eq.s32.totalorder %s101, 0
      %p554 = por %p552, %p553
      %s556 = sadd.s32 %s555, 1
      %p559 = scmp.eq.s32.totalorder %s95, 3
      %p560 = scmp.ne.s32.totalorder %s555, %s557
      %p561 = scmp.eq.s32.totalorder %s95, 0
      %p562 = por %p560, %p561
      %p563 = scmp.ne.s32.totalorder %s555, %s557
      %p564 = scmp.eq.s32.totalorder %s100, 3
      %p565 = por %p563, %p564
      %p566 = scmp.ne.s32.totalorder %s557, %s558
      %p567 = scmp.eq.s32.totalorder %s100, 0
      %p568 = por %p566, %p567
      %p569 = scmp.ne.s32.totalorder %s557, %s558
      %p570 = scmp.eq.s32.totalorder %s101, 3
      %p571 = por %p569, %p570
      %p573 = scmp.ne.s32.totalorder %s558, %s572
      %p574 = scmp.eq.s32.totalorder %s101, 0
      %p575 = por %p573, %p574
      %s577 = sadd.s32 %s576, 1
      %p580 = scmp.eq.s32.totalorder %s95, 3
      %p581 = scmp.ne.s32.totalorder %s576, %s578
      %p582 = scmp.eq.s32.totalorder %s95, 0
      %p583 = por %p581, %p582
      %p584 = scmp.ne.s32.totalorder %s576, %s578
      %p585 = scmp.eq.s32.totalorder %s100, 3
      %p586 = por %p584, %p585
      %p587 = scmp.ne.s32.totalorder %s578, %s579
      %p588 = scmp.eq.s32.totalorder %s100, 0
      %p589 = por %p587, %p588
      %p590 = scmp.ne.s32.totalorder %s578, %s579
      %p591 = scmp.eq.s32.totalorder %s101, 3
      %p592 = por %p590, %p591
      %p594 = scmp.ne.s32.totalorder %s579, %s593
      %p595 = scmp.eq.s32.totalorder %s101, 0
      %p596 = por %p594, %p595
      %s598 = sadd.s32 %s597, 1
      %p601 = scmp.eq.s32.totalorder %s95, 3
      %p602 = scmp.ne.s32.totalorder %s597, %s599
      %p603 = scmp.eq.s32.totalorder %s95, 0
      %p604 = por %p602, %p603
      %p605 = scmp.ne.s32.totalorder %s597, %s599
      %p606 = scmp.eq.s32.totalorder %s100, 3
      %p607 = por %p605, %p606
      %p608 = scmp.ne.s32.totalorder %s599, %s600
      %p609 = scmp.eq.s32.totalorder %s100, 0
      %p610 = por %p608, %p609
      %p611 = scmp.ne.s32.totalorder %s599, %s600
      %p612 = scmp.eq.s32.totalorder %s101, 3
      %p613 = por %p611, %p612
      %p615 = scmp.ne.s32.totalorder %s600, %s614
      %p616 = scmp.eq.s32.totalorder %s101, 0
      %p617 = por %p615, %p616
      %s619 = sadd.s32 %s618, 1
      %p622 = scmp.eq.s32.totalorder %s95, 3
      %p623 = scmp.ne.s32.totalorder %s618, %s620
      %p624 = scmp.eq.s32.totalorder %s95, 0
      %p625 = por %p623, %p624
      %p626 = scmp.ne.s32.totalorder %s618, %s620
      %p627 = scmp.eq.s32.totalorder %s100, 3
      %p628 = por %p626, %p627
      %p629 = scmp.ne.s32.totalorder %s620, %s621
      %p630 = scmp.eq.s32.totalorder %s100, 0
      %p631 = por %p629, %p630
      %p632 = scmp.ne.s32.totalorder %s620, %s621
      %p633 = scmp.eq.s32.totalorder %s101, 3
      %p634 = por %p632, %p633
      %p636 = scmp.ne.s32.totalorder %s621, %s635
      %p637 = scmp.eq.s32.totalorder %s101, 0
      %p638 = por %p636, %p637
      %s640 = sadd.s32 %s639, 1
      %p643 = scmp.eq.s32.totalorder %s95, 3
      %p644 = scmp.ne.s32.totalorder %s639, %s641
      %p645 = scmp.eq.s32.totalorder %s95, 0
      %p646 = por %p644, %p645
      %p647 = scmp.ne.s32.totalorder %s639, %s641
      %p648 = scmp.eq.s32.totalorder %s100, 3
      %p649 = por %p647, %p648
      %p650 = scmp.ne.s32.totalorder %s641, %s642
      %p651 = scmp.eq.s32.totalorder %s100, 0
      %p652 = por %p650, %p651
      %p653 = scmp.ne.s32.totalorder %s641, %s642
      %p654 = scmp.eq.s32.totalorder %s101, 3
      %p655 = por %p653, %p654
      %p657 = scmp.ne.s32.totalorder %s642, %s656
      %p658 = scmp.eq.s32.totalorder %s101, 0
      %p659 = por %p657, %p658
      %s661 = sadd.s32 %s660, 1
      %p664 = scmp.eq.s32.totalorder %s95, 3
      %p665 = scmp.ne.s32.totalorder %s660, %s662
      %p666 = scmp.eq.s32.totalorder %s95, 0
      %p667 = por %p665, %p666
      %p668 = scmp.ne.s32.totalorder %s660, %s662
      %p669 = scmp.eq.s32.totalorder %s100, 3
      %p670 = por %p668, %p669
      %p671 = scmp.ne.s32.totalorder %s662, %s663
      %p672 = scmp.eq.s32.totalorder %s100, 0
      %p673 = por %p671, %p672
      %p674 = scmp.ne.s32.totalorder %s662, %s663
      %p675 = scmp.eq.s32.totalorder %s101, 3
      %p676 = por %p674, %p675
      %p678 = scmp.ne.s32.totalorder %s663, %s677
      %p679 = scmp.eq.s32.totalorder %s101, 0
      %p680 = por %p678, %p679
      %s682 = sadd.s32 %s681, 1
      %p685 = scmp.eq.s32.totalorder %s95, 3
      %p686 = scmp.ne.s32.totalorder %s681, %s683
      %p687 = scmp.eq.s32.totalorder %s95, 0
      %p688 = por %p686, %p687
      %p689 = scmp.ne.s32.totalorder %s681, %s683
      %p690 = scmp.eq.s32.totalorder %s100, 3
      %p691 = por %p689, %p690
      %p692 = scmp.ne.s32.totalorder %s683, %s684
      %p693 = scmp.eq.s32.totalorder %s100, 0
      %p694 = por %p692, %p693
      %p695 = scmp.ne.s32.totalorder %s683, %s684
      %p696 = scmp.eq.s32.totalorder %s101, 3
      %p697 = por %p695, %p696
      %p699 = scmp.ne.s32.totalorder %s684, %s698
      %p700 = scmp.eq.s32.totalorder %s101, 0
      %p701 = por %p699, %p700
      %s703 = sadd.s32 %s702, 1
      %p706 = scmp.eq.s32.totalorder %s95, 3
      %p707 = scmp.ne.s32.totalorder %s702, %s704
      %p708 = scmp.eq.s32.totalorder %s95, 0
      %p709 = por %p707, %p708
      %p710 = scmp.ne.s32.totalorder %s702, %s704
      %p711 = scmp.eq.s32.totalorder %s100, 3
      %p712 = por %p710, %p711
      %p713 = scmp.ne.s32.totalorder %s704, %s705
      %p714 = scmp.eq.s32.totalorder %s100, 0
      %p715 = por %p713, %p714
      %p716 = scmp.ne.s32.totalorder %s704, %s705
      %p717 = scmp.eq.s32.totalorder %s101, 3
      %p718 = por %p716, %p717
      %p720 = scmp.ne.s32.totalorder %s705, %s719
      %p721 = scmp.eq.s32.totalorder %s101, 0
      %p722 = por %p720, %p721
      %s724 = sadd.s32 %s723, 1
      %p727 = scmp.eq.s32.totalorder %s95, 3
      %p728 = scmp.ne.s32.totalorder %s723, %s725
      %p729 = scmp.eq.s32.totalorder %s95, 0
      %p730 = por %p728, %p729
      %p731 = scmp.ne.s32.totalorder %s723, %s725
      %p732 = scmp.eq.s32.totalorder %s100, 3
      %p733 = por %p731, %p732
      %p734 = scmp.ne.s32.totalorder %s725, %s726
      %p735 = scmp.eq.s32.totalorder %s100, 0
      %p736 = por %p734, %p735
      %p737 = scmp.ne.s32.totalorder %s725, %s726
      %p738 = scmp.eq.s32.totalorder %s101, 3
      %p739 = por %p737, %p738
      %p741 = scmp.ne.s32.totalorder %s726, %s740
      %p742 = scmp.eq.s32.totalorder %s101, 0
      %p743 = por %p741, %p742
      %s745 = sadd.s32 %s744, 1
      %p748 = scmp.eq.s32.totalorder %s95, 3
      %p749 = scmp.ne.s32.totalorder %s744, %s746
      %p750 = scmp.eq.s32.totalorder %s95, 0
      %p751 = por %p749, %p750
      %p752 = scmp.ne.s32.totalorder %s744, %s746
      %p753 = scmp.eq.s32.totalorder %s100, 3
      %p754 = por %p752, %p753
      %p755 = scmp.ne.s32.totalorder %s746, %s747
      %p756 = scmp.eq.s32.totalorder %s100, 0
      %p757 = por %p755, %p756
      %p758 = scmp.ne.s32.totalorder %s746, %s747
      %p759 = scmp.eq.s32.totalorder %s101, 3
      %p760 = por %p758, %p759
      %p762 = scmp.ne.s32.totalorder %s747, %s761
      %p763 = scmp.eq.s32.totalorder %s101, 0
      %p764 = por %p762, %p763
      %s766 = sadd.s32 %s765, 1
      %p769 = scmp.eq.s32.totalorder %s95, 3
      %p770 = scmp.ne.s32.totalorder %s765, %s767
      %p771 = scmp.eq.s32.totalorder %s95, 0
      %p772 = por %p770, %p771
      %p773 = scmp.ne.s32.totalorder %s765, %s767
      %p774 = scmp.eq.s32.totalorder %s100, 3
      %p775 = por %p773, %p774
      %p776 = scmp.ne.s32.totalorder %s767, %s768
      %p777 = scmp.eq.s32.totalorder %s100, 0
      %p778 = por %p776, %p777
      %p779 = scmp.ne.s32.totalorder %s767, %s768
      %p780 = scmp.eq.s32.totalorder %s101, 3
      %p781 = por %p779, %p780
      %p783 = scmp.ne.s32.totalorder %s768, %s782
      %p784 = scmp.eq.s32.totalorder %s101, 0
      %p785 = por %p783, %p784
      %s787 = sadd.s32 %s786, 1
      %p790 = scmp.eq.s32.totalorder %s95, 3
      %p791 = scmp.ne.s32.totalorder %s786, %s788
      %p792 = scmp.eq.s32.totalorder %s95, 0
      %p793 = por %p791, %p792
      %p794 = scmp.ne.s32.totalorder %s786, %s788
      %p795 = scmp.eq.s32.totalorder %s100, 3
      %p796 = por %p794, %p795
      %p797 = scmp.ne.s32.totalorder %s788, %s789
      %p798 = scmp.eq.s32.totalorder %s100, 0
      %p799 = por %p797, %p798
      %p800 = scmp.ne.s32.totalorder %s788, %s789
      %p801 = scmp.eq.s32.totalorder %s101, 3
      %p802 = por %p800, %p801
      %p804 = scmp.ne.s32.totalorder %s789, %s803
      %p805 = scmp.eq.s32.totalorder %s101, 0
      %p806 = por %p804, %p805
      %s808 = sadd.s32 %s807, 1
      %p811 = scmp.eq.s32.totalorder %s95, 3
      %p812 = scmp.ne.s32.totalorder %s807, %s809
      %p813 = scmp.eq.s32.totalorder %s95, 0
      %p814 = por %p812, %p813
      %p815 = scmp.ne.s32.totalorder %s807, %s809
      %p816 = scmp.eq.s32.totalorder %s100, 3
      %p817 = por %p815, %p816
      %p818 = scmp.ne.s32.totalorder %s809, %s810
      %p819 = scmp.eq.s32.totalorder %s100, 0
      %p820 = por %p818, %p819
      %p821 = scmp.ne.s32.totalorder %s809, %s810
      %p822 = scmp.eq.s32.totalorder %s101, 3
      %p823 = por %p821, %p822
      %p825 = scmp.ne.s32.totalorder %s810, %s824
      %p826 = scmp.eq.s32.totalorder %s101, 0
      %p827 = por %p825, %p826
      %s829 = sadd.s32 %s828, 1
      %p832 = scmp.eq.s32.totalorder %s95, 3
      %p833 = scmp.ne.s32.totalorder %s828, %s830
      %p834 = scmp.eq.s32.totalorder %s95, 0
      %p835 = por %p833, %p834
      %p836 = scmp.ne.s32.totalorder %s828, %s830
      %p837 = scmp.eq.s32.totalorder %s100, 3
      %p838 = por %p836, %p837
      %p839 = scmp.ne.s32.totalorder %s830, %s831
      %p840 = scmp.eq.s32.totalorder %s100, 0
      %p841 = por %p839, %p840
      %p842 = scmp.ne.s32.totalorder %s830, %s831
      %p843 = scmp.eq.s32.totalorder %s101, 3
      %p844 = por %p842, %p843
      %p846 = scmp.ne.s32.totalorder %s831, %s845
      %p847 = scmp.eq.s32.totalorder %s101, 0
      %p848 = por %p846, %p847
      %s850 = sadd.s32 %s849, 1
      %p853 = scmp.eq.s32.totalorder %s95, 3
      %p854 = scmp.ne.s32.totalorder %s849, %s851
      %p855 = scmp.eq.s32.totalorder %s95, 0
      %p856 = por %p854, %p855
      %p857 = scmp.ne.s32.totalorder %s849, %s851
      %p858 = scmp.eq.s32.totalorder %s100, 3
      %p859 = por %p857, %p858
      %p860 = scmp.ne.s32.totalorder %s851, %s852
      %p861 = scmp.eq.s32.totalorder %s100, 0
      %p862 = por %p860, %p861
      %p863 = scmp.ne.s32.totalorder %s851, %s852
      %p864 = scmp.eq.s32.totalorder %s101, 3
      %p865 = por %p863, %p864
      %p867 = scmp.ne.s32.totalorder %s852, %s866
      %p868 = scmp.eq.s32.totalorder %s101, 0
      %p869 = por %p867, %p868
      %s871 = sadd.s32 %s870, 1
      %p874 = scmp.eq.s32.totalorder %s95, 3
      %p875 = scmp.ne.s32.totalorder %s870, %s872
      %p876 = scmp.eq.s32.totalorder %s95, 0
      %p877 = por %p875, %p876
      %p878 = scmp.ne.s32.totalorder %s870, %s872
      %p879 = scmp.eq.s32.totalorder %s100, 3
      %p880 = por %p878, %p879
      %p881 = scmp.ne.s32.totalorder %s872, %s873
      %p882 = scmp.eq.s32.totalorder %s100, 0
      %p883 = por %p881, %p882
      %p884 = scmp.ne.s32.totalorder %s872, %s873
      %p885 = scmp.eq.s32.totalorder %s101, 3
      %p886 = por %p884, %p885
      %p888 = scmp.ne.s32.totalorder %s873, %s887
      %p889 = scmp.eq.s32.totalorder %s101, 0
      %p890 = por %p888, %p889
      %s892 = sadd.s32 %s891, 1
      %p895 = scmp.eq.s32.totalorder %s95, 3
      %p896 = scmp.ne.s32.totalorder %s891, %s893
      %p897 = scmp.eq.s32.totalorder %s95, 0
      %p898 = por %p896, %p897
      %p899 = scmp.ne.s32.totalorder %s891, %s893
      %p900 = scmp.eq.s32.totalorder %s100, 3
      %p901 = por %p899, %p900
      %p902 = scmp.ne.s32.totalorder %s893, %s894
      %p903 = scmp.eq.s32.totalorder %s100, 0
      %p904 = por %p902, %p903
      %p905 = scmp.ne.s32.totalorder %s893, %s894
      %p906 = scmp.eq.s32.totalorder %s101, 3
      %p907 = por %p905, %p906
      %p909 = scmp.ne.s32.totalorder %s894, %s908
      %p910 = scmp.eq.s32.totalorder %s101, 0
      %p911 = por %p909, %p910
      %s913 = sadd.s32 %s912, 1
      %p916 = scmp.eq.s32.totalorder %s95, 3
      %p917 = scmp.ne.s32.totalorder %s912, %s914
      %p918 = scmp.eq.s32.totalorder %s95, 0
      %p919 = por %p917, %p918
      %p920 = scmp.ne.s32.totalorder %s912, %s914
      %p921 = scmp.eq.s32.totalorder %s100, 3
      %p922 = por %p920, %p921
      %p923 = scmp.ne.s32.totalorder %s914, %s915
      %p924 = scmp.eq.s32.totalorder %s100, 0
      %p925 = por %p923, %p924
      %p926 = scmp.ne.s32.totalorder %s914, %s915
      %p927 = scmp.eq.s32.totalorder %s101, 3
      %p928 = por %p926, %p927
      %p930 = scmp.ne.s32.totalorder %s915, %s929
      %p931 = scmp.eq.s32.totalorder %s101, 0
      %p932 = por %p930, %p931
      %s934 = sadd.s32 %s933, 1
      %p937 = scmp.eq.s32.totalorder %s95, 3
      %p938 = scmp.ne.s32.totalorder %s933, %s935
      %p939 = scmp.eq.s32.totalorder %s95, 0
      %p940 = por %p938, %p939
      %p941 = scmp.ne.s32.totalorder %s933, %s935
      %p942 = scmp.eq.s32.totalorder %s100, 3
      %p943 = por %p941, %p942
      %p944 = scmp.ne.s32.totalorder %s935, %s936
      %p945 = scmp.eq.s32.totalorder %s100, 0
      %p946 = por %p944, %p945
      %p947 = scmp.ne.s32.totalorder %s935, %s936
      %p948 = scmp.eq.s32.totalorder %s101, 3
      %p949 = por %p947, %p948
      %p951 = scmp.ne.s32.totalorder %s936, %s950
      %p952 = scmp.eq.s32.totalorder %s101, 0
      %p953 = por %p951, %p952
      %s955 = sadd.s32 %s954, 1
      %p958 = scmp.eq.s32.totalorder %s95, 3
      %p959 = scmp.ne.s32.totalorder %s954, %s956
      %p960 = scmp.eq.s32.totalorder %s95, 0
      %p961 = por %p959, %p960
      %p962 = scmp.ne.s32.totalorder %s954, %s956
      %p963 = scmp.eq.s32.totalorder %s100, 3
      %p964 = por %p962, %p963
      %p965 = scmp.ne.s32.totalorder %s956, %s957
      %p966 = scmp.eq.s32.totalorder %s100, 0
      %p967 = por %p965, %p966
      %p968 = scmp.ne.s32.totalorder %s956, %s957
      %p969 = scmp.eq.s32.totalorder %s101, 3
      %p970 = por %p968, %p969
      %p972 = scmp.ne.s32.totalorder %s957, %s971
      %p973 = scmp.eq.s32.totalorder %s101, 0
      %p974 = por %p972, %p973
      %s976 = sadd.s32 %s975, 1
      %p979 = scmp.eq.s32.totalorder %s95, 3
      %p980 = scmp.ne.s32.totalorder %s975, %s977
      %p981 = scmp.eq.s32.totalorder %s95, 0
      %p982 = por %p980, %p981
      %p983 = scmp.ne.s32.totalorder %s975, %s977
      %p984 = scmp.eq.s32.totalorder %s100, 3
      %p985 = por %p983, %p984
      %p986 = scmp.ne.s32.totalorder %s977, %s978
      %p987 = scmp.eq.s32.totalorder %s100, 0
      %p988 = por %p986, %p987
      %p989 = scmp.ne.s32.totalorder %s977, %s978
      %p990 = scmp.eq.s32.totalorder %s101, 3
      %p991 = por %p989, %p990
      %p993 = scmp.ne.s32.totalorder %s978, %s992
      %p994 = scmp.eq.s32.totalorder %s101, 0
      %p995 = por %p993, %p994
      %s997 = sadd.s32 %s996, 1
      %p1000 = scmp.eq.s32.totalorder %s95, 3
      %p1001 = scmp.ne.s32.totalorder %s996, %s998
      %p1002 = scmp.eq.s32.totalorder %s95, 0
      %p1003 = por %p1001, %p1002
      %p1004 = scmp.ne.s32.totalorder %s996, %s998
      %p1005 = scmp.eq.s32.totalorder %s100, 3
      %p1006 = por %p1004, %p1005
      %p1007 = scmp.ne.s32.totalorder %s998, %s999
      %p1008 = scmp.eq.s32.totalorder %s100, 0
      %p1009 = por %p1007, %p1008
      %p1010 = scmp.ne.s32.totalorder %s998, %s999
      %p1011 = scmp.eq.s32.totalorder %s101, 3
      %p1012 = por %p1010, %p1011
      %p1014 = scmp.ne.s32.totalorder %s999, %s1013
      %p1015 = scmp.eq.s32.totalorder %s101, 0
      %p1016 = por %p1014, %p1015
      %s1018 = sadd.s32 %s1017, 1
      %p1021 = scmp.eq.s32.totalorder %s95, 3
      %p1022 = scmp.ne.s32.totalorder %s1017, %s1019
      %p1023 = scmp.eq.s32.totalorder %s95, 0
      %p1024 = por %p1022, %p1023
      %p1025 = scmp.ne.s32.totalorder %s1017, %s1019
      %p1026 = scmp.eq.s32.totalorder %s100, 3
      %p1027 = por %p1025, %p1026
      %p1028 = scmp.ne.s32.totalorder %s1019, %s1020
      %p1029 = scmp.eq.s32.totalorder %s100, 0
      %p1030 = por %p1028, %p1029
      %p1031 = scmp.ne.s32.totalorder %s1019, %s1020
      %p1032 = scmp.eq.s32.totalorder %s101, 3
      %p1033 = por %p1031, %p1032
      %p1035 = scmp.ne.s32.totalorder %s1020, %s1034
      %p1036 = scmp.eq.s32.totalorder %s101, 0
      %p1037 = por %p1035, %p1036
      %s1039 = sadd.s32 %s1038, 1
      %p1042 = scmp.eq.s32.totalorder %s95, 3
      %p1043 = scmp.ne.s32.totalorder %s1038, %s1040
      %p1044 = scmp.eq.s32.totalorder %s95, 0
      %p1045 = por %p1043, %p1044
      %p1046 = scmp.ne.s32.totalorder %s1038, %s1040
      %p1047 = scmp.eq.s32.totalorder %s100, 3
      %p1048 = por %p1046, %p1047
      %p1049 = scmp.ne.s32.totalorder %s1040, %s1041
      %p1050 = scmp.eq.s32.totalorder %s100, 0
      %p1051 = por %p1049, %p1050
      %p1052 = scmp.ne.s32.totalorder %s1040, %s1041
      %p1053 = scmp.eq.s32.totalorder %s101, 3
      %p1054 = por %p1052, %p1053
      %p1056 = scmp.ne.s32.totalorder %s1041, %s1055
      %p1057 = scmp.eq.s32.totalorder %s101, 0
      %p1058 = por %p1056, %p1057
      %p1059 = scmp.le.s32.totalorder 1, %s95
      %p1060 = scmp.lt.s32.totalorder %s95, 5
      %p1061 = pnand %p1059, %p1060
      %p1062 = pneg %p1061
      // Predicated region
      $region9: #{_lambda_.1} parent=5 // pred_check
        _
      $region10: #{_lambda_.1} parent=5 // pred_check_branch
        %1064 = sbr.rel (%p1061) target = $region12
      $region11: #{_lambda_.1} parent=5 // pred_region
        %s1065 = ssub.s32 %s95, 1
        // Predicated region
        $region13: #{_lambda_.1} parent=11 // pred_check
          %p1066 = pneg %p232
        $region14: #{_lambda_.1} parent=11 // pred_check_branch
          %1068 = sbr.rel (%p1066) target = $region16
        $region15: #{_lambda_.1} parent=11 // pred_region
          _
        $region16: #{_lambda_.1} parent=11 // pred_fallthru
          _
        // Predicated region
        $region17: #{_lambda_.1} parent=11 // pred_check
          %p1069 = pneg %p253
        $region18: #{_lambda_.1} parent=11 // pred_check_branch
          %1071 = sbr.rel (%p1069) target = $region20
        $region19: #{_lambda_.1} parent=11 // pred_region
          _
        $region20: #{_lambda_.1} parent=11 // pred_fallthru
          _
        // Predicated region
        $region21: #{_lambda_.1} parent=11 // pred_check
          %p1072 = pneg %p274
        $region22: #{_lambda_.1} parent=11 // pred_check_branch
          %1074 = sbr.rel (%p1072) target = $region24
        $region23: #{_lambda_.1} parent=11 // pred_region
          _
        $region24: #{_lambda_.1} parent=11 // pred_fallthru
          _
        // Predicated region
        $region25: #{_lambda_.1} parent=11 // pred_check
          %p1075 = pneg %p295
        $region26: #{_lambda_.1} parent=11 // pred_check_branch
          %1077 = sbr.rel (%p1075) target = $region28
        $region27: #{_lambda_.1} parent=11 // pred_region
          _
        $region28: #{_lambda_.1} parent=11 // pred_fallthru
          _
        // Predicated region
        $region29: #{_lambda_.1} parent=11 // pred_check
          %p1078 = pneg %p316
        $region30: #{_lambda_.1} parent=11 // pred_check_branch
          %1080 = sbr.rel (%p1078) target = $region32
        $region31: #{_lambda_.1} parent=11 // pred_region
          _
        $region32: #{_lambda_.1} parent=11 // pred_fallthru
          _
        // Predicated region
        $region33: #{_lambda_.1} parent=11 // pred_check
          %p1081 = pneg %p337
        $region34: #{_lambda_.1} parent=11 // pred_check_branch
          %1083 = sbr.rel (%p1081) target = $region36
        $region35: #{_lambda_.1} parent=11 // pred_region
          _
        $region36: #{_lambda_.1} parent=11 // pred_fallthru
          _
        // Predicated region
        $region37: #{_lambda_.1} parent=11 // pred_check
          %p1084 = pneg %p358
        $region38: #{_lambda_.1} parent=11 // pred_check_branch
          %1086 = sbr.rel (%p1084) target = $region40
        $region39: #{_lambda_.1} parent=11 // pred_region
          _
        $region40: #{_lambda_.1} parent=11 // pred_fallthru
          _
        // Predicated region
        $region41: #{_lambda_.1} parent=11 // pred_check
          %p1087 = pneg %p379
        $region42: #{_lambda_.1} parent=11 // pred_check_branch
          %1089 = sbr.rel (%p1087) target = $region44
        $region43: #{_lambda_.1} parent=11 // pred_region
          _
        $region44: #{_lambda_.1} parent=11 // pred_fallthru
          _
        // Predicated region
        $region45: #{_lambda_.1} parent=11 // pred_check
          %p1090 = pneg %p400
        $region46: #{_lambda_.1} parent=11 // pred_check_branch
          %1092 = sbr.rel (%p1090) target = $region48
        $region47: #{_lambda_.1} parent=11 // pred_region
          _
        $region48: #{_lambda_.1} parent=11 // pred_fallthru
          _
        // Predicated region
        $region49: #{_lambda_.1} parent=11 // pred_check
          %p1093 = pneg %p421
        $region50: #{_lambda_.1} parent=11 // pred_check_branch
          %1095 = sbr.rel (%p1093) target = $region52
        $region51: #{_lambda_.1} parent=11 // pred_region
          _
        $region52: #{_lambda_.1} parent=11 // pred_fallthru
          _
        // Predicated region
        $region53: #{_lambda_.1} parent=11 // pred_check
          %p1096 = pneg %p442
        $region54: #{_lambda_.1} parent=11 // pred_check_branch
          %1098 = sbr.rel (%p1096) target = $region56
        $region55: #{_lambda_.1} parent=11 // pred_region
          _
        $region56: #{_lambda_.1} parent=11 // pred_fallthru
          _
        // Predicated region
        $region57: #{_lambda_.1} parent=11 // pred_check
          %p1099 = pneg %p463
        $region58: #{_lambda_.1} parent=11 // pred_check_branch
          %1101 = sbr.rel (%p1099) target = $region60
        $region59: #{_lambda_.1} parent=11 // pred_region
          _
        $region60: #{_lambda_.1} parent=11 // pred_fallthru
          _
        // Predicated region
        $region61: #{_lambda_.1} parent=11 // pred_check
          %p1102 = pneg %p484
        $region62: #{_lambda_.1} parent=11 // pred_check_branch
          %1104 = sbr.rel (%p1102) target = $region64
        $region63: #{_lambda_.1} parent=11 // pred_region
          _
        $region64: #{_lambda_.1} parent=11 // pred_fallthru
          _
        // Predicated region
        $region65: #{_lambda_.1} parent=11 // pred_check
          %p1105 = pneg %p505
        $region66: #{_lambda_.1} parent=11 // pred_check_branch
          %1107 = sbr.rel (%p1105) target = $region68
        $region67: #{_lambda_.1} parent=11 // pred_region
          _
        $region68: #{_lambda_.1} parent=11 // pred_fallthru
          _
        // Predicated region
        $region69: #{_lambda_.1} parent=11 // pred_check
          %p1108 = pneg %p526
        $region70: #{_lambda_.1} parent=11 // pred_check_branch
          %1110 = sbr.rel (%p1108) target = $region72
        $region71: #{_lambda_.1} parent=11 // pred_region
          _
        $region72: #{_lambda_.1} parent=11 // pred_fallthru
          _
        // Predicated region
        $region73: #{_lambda_.1} parent=11 // pred_check
          %p1111 = pneg %p547
        $region74: #{_lambda_.1} parent=11 // pred_check_branch
          %1113 = sbr.rel (%p1111) target = $region76
        $region75: #{_lambda_.1} parent=11 // pred_region
          _
        $region76: #{_lambda_.1} parent=11 // pred_fallthru
          _
        // Predicated region
        $region77: #{_lambda_.1} parent=11 // pred_check
          %p1114 = pneg %p568
        $region78: #{_lambda_.1} parent=11 // pred_check_branch
          %1116 = sbr.rel (%p1114) target = $region80
        $region79: #{_lambda_.1} parent=11 // pred_region
          _
        $region80: #{_lambda_.1} parent=11 // pred_fallthru
          _
        // Predicated region
        $region81: #{_lambda_.1} parent=11 // pred_check
          %p1117 = pneg %p589
        $region82: #{_lambda_.1} parent=11 // pred_check_branch
          %1119 = sbr.rel (%p1117) target = $region84
        $region83: #{_lambda_.1} parent=11 // pred_region
          _
        $region84: #{_lambda_.1} parent=11 // pred_fallthru
          _
        // Predicated region
        $region85: #{_lambda_.1} parent=11 // pred_check
          %p1120 = pneg %p610
        $region86: #{_lambda_.1} parent=11 // pred_check_branch
          %1122 = sbr.rel (%p1120) target = $region88
        $region87: #{_lambda_.1} parent=11 // pred_region
          _
        $region88: #{_lambda_.1} parent=11 // pred_fallthru
          _
        // Predicated region
        $region89: #{_lambda_.1} parent=11 // pred_check
          %p1123 = pneg %p631
        $region90: #{_lambda_.1} parent=11 // pred_check_branch
          %1125 = sbr.rel (%p1123) target = $region92
        $region91: #{_lambda_.1} parent=11 // pred_region
          _
        $region92: #{_lambda_.1} parent=11 // pred_fallthru
          _
        // Predicated region
        $region93: #{_lambda_.1} parent=11 // pred_check
          %p1126 = pneg %p652
        $region94: #{_lambda_.1} parent=11 // pred_check_branch
          %1128 = sbr.rel (%p1126) target = $region96
        $region95: #{_lambda_.1} parent=11 // pred_region
          _
        $region96: #{_lambda_.1} parent=11 // pred_fallthru
          _
        // Predicated region
        $region97: #{_lambda_.1} parent=11 // pred_check
          %p1129 = pneg %p673
        $region98: #{_lambda_.1} parent=11 // pred_check_branch
          %1131 = sbr.rel (%p1129) target = $region100
        $region99: #{_lambda_.1} parent=11 // pred_region
          _
        $region100: #{_lambda_.1} parent=11 // pred_fallthru
          _
        // Predicated region
        $region101: #{_lambda_.1} parent=11 // pred_check
          %p1132 = pneg %p694
        $region102: #{_lambda_.1} parent=11 // pred_check_branch
          %1134 = sbr.rel (%p1132) target = $region104
        $region103: #{_lambda_.1} parent=11 // pred_region
          _
        $region104: #{_lambda_.1} parent=11 // pred_fallthru
          _
        // Predicated region
        $region105: #{_lambda_.1} parent=11 // pred_check
          %p1135 = pneg %p715
        $region106: #{_lambda_.1} parent=11 // pred_check_branch
          %1137 = sbr.rel (%p1135) target = $region108
        $region107: #{_lambda_.1} parent=11 // pred_region
          _
        $region108: #{_lambda_.1} parent=11 // pred_fallthru
          _
        // Predicated region
        $region109: #{_lambda_.1} parent=11 // pred_check
          %p1138 = pneg %p736
        $region110: #{_lambda_.1} parent=11 // pred_check_branch
          %1140 = sbr.rel (%p1138) target = $region112
        $region111: #{_lambda_.1} parent=11 // pred_region
          _
        $region112: #{_lambda_.1} parent=11 // pred_fallthru
          _
        // Predicated region
        $region113: #{_lambda_.1} parent=11 // pred_check
          %p1141 = pneg %p757
        $region114: #{_lambda_.1} parent=11 // pred_check_branch
          %1143 = sbr.rel (%p1141) target = $region116
        $region115: #{_lambda_.1} parent=11 // pred_region
          _
        $region116: #{_lambda_.1} parent=11 // pred_fallthru
          _
        // Predicated region
        $region117: #{_lambda_.1} parent=11 // pred_check
          %p1144 = pneg %p778
        $region118: #{_lambda_.1} parent=11 // pred_check_branch
          %1146 = sbr.rel (%p1144) target = $region120
        $region119: #{_lambda_.1} parent=11 // pred_region
          _
        $region120: #{_lambda_.1} parent=11 // pred_fallthru
          _
        // Predicated region
        $region121: #{_lambda_.1} parent=11 // pred_check
          %p1147 = pneg %p799
        $region122: #{_lambda_.1} parent=11 // pred_check_branch
          %1149 = sbr.rel (%p1147) target = $region124
        $region123: #{_lambda_.1} parent=11 // pred_region
          _
        $region124: #{_lambda_.1} parent=11 // pred_fallthru
          _
        // Predicated region
        $region125: #{_lambda_.1} parent=11 // pred_check
          %p1150 = pneg %p820
        $region126: #{_lambda_.1} parent=11 // pred_check_branch
          %1152 = sbr.rel (%p1150) target = $region128
        $region127: #{_lambda_.1} parent=11 // pred_region
          _
        $region128: #{_lambda_.1} parent=11 // pred_fallthru
          _
        // Predicated region
        $region129: #{_lambda_.1} parent=11 // pred_check
          %p1153 = pneg %p841
        $region130: #{_lambda_.1} parent=11 // pred_check_branch
          %1155 = sbr.rel (%p1153) target = $region132
        $region131: #{_lambda_.1} parent=11 // pred_region
          _
        $region132: #{_lambda_.1} parent=11 // pred_fallthru
          _
        // Predicated region
        $region133: #{_lambda_.1} parent=11 // pred_check
          %p1156 = pneg %p862
        $region134: #{_lambda_.1} parent=11 // pred_check_branch
          %1158 = sbr.rel (%p1156) target = $region136
        $region135: #{_lambda_.1} parent=11 // pred_region
          _
        $region136: #{_lambda_.1} parent=11 // pred_fallthru
          _
        // Predicated region
        $region137: #{_lambda_.1} parent=11 // pred_check
          %p1159 = pneg %p883
        $region138: #{_lambda_.1} parent=11 // pred_check_branch
          %1161 = sbr.rel (%p1159) target = $region140
        $region139: #{_lambda_.1} parent=11 // pred_region
          _
        $region140: #{_lambda_.1} parent=11 // pred_fallthru
          _
        // Predicated region
        $region141: #{_lambda_.1} parent=11 // pred_check
          %p1162 = pneg %p904
        $region142: #{_lambda_.1} parent=11 // pred_check_branch
          %1164 = sbr.rel (%p1162) target = $region144
        $region143: #{_lambda_.1} parent=11 // pred_region
          _
        $region144: #{_lambda_.1} parent=11 // pred_fallthru
          _
        // Predicated region
        $region145: #{_lambda_.1} parent=11 // pred_check
          %p1165 = pneg %p925
        $region146: #{_lambda_.1} parent=11 // pred_check_branch
          %1167 = sbr.rel (%p1165) target = $region148
        $region147: #{_lambda_.1} parent=11 // pred_region
          _
        $region148: #{_lambda_.1} parent=11 // pred_fallthru
          _
        // Predicated region
        $region149: #{_lambda_.1} parent=11 // pred_check
          %p1168 = pneg %p946
        $region150: #{_lambda_.1} parent=11 // pred_check_branch
          %1170 = sbr.rel (%p1168) target = $region152
        $region151: #{_lambda_.1} parent=11 // pred_region
          _
        $region152: #{_lambda_.1} parent=11 // pred_fallthru
          _
        // Predicated region
        $region153: #{_lambda_.1} parent=11 // pred_check
          %p1171 = pneg %p967
        $region154: #{_lambda_.1} parent=11 // pred_check_branch
          %1173 = sbr.rel (%p1171) target = $region156
        $region155: #{_lambda_.1} parent=11 // pred_region
          _
        $region156: #{_lambda_.1} parent=11 // pred_fallthru
          _
        // Predicated region
        $region157: #{_lambda_.1} parent=11 // pred_check
          %p1174 = pneg %p988
        $region158: #{_lambda_.1} parent=11 // pred_check_branch
          %1176 = sbr.rel (%p1174) target = $region160
        $region159: #{_lambda_.1} parent=11 // pred_region
          _
        $region160: #{_lambda_.1} parent=11 // pred_fallthru
          _
        // Predicated region
        $region161: #{_lambda_.1} parent=11 // pred_check
          %p1177 = pneg %p1009
        $region162: #{_lambda_.1} parent=11 // pred_check_branch
          %1179 = sbr.rel (%p1177) target = $region164
        $region163: #{_lambda_.1} parent=11 // pred_region
          _
        $region164: #{_lambda_.1} parent=11 // pred_fallthru
          _
      $region12: #{_lambda_.1} parent=5 // pred_fallthru
        _
      %p1180 = scmp.lt.s32.totalorder %s95, 4
      // Predicated region
      $region165: #{_lambda_.1} parent=5 // pred_check
        %p1181 = pneg %p1180
      $region166: #{_lambda_.1} parent=5 // pred_check_branch
        %1183 = sbr.rel (%p1181) target = $region168
      $region167: #{_lambda_.1} parent=5 // pred_region
        // Predicated region
        $region169: #{_lambda_.1} parent=167 // pred_check
          %p1184 = pneg %p127
        $region170: #{_lambda_.1} parent=167 // pred_check_branch
          %1186 = sbr.rel (%p1184) target = $region172
        $region171: #{_lambda_.1} parent=167 // pred_region
          %s1187 = smul.u32 4, %s103
          %p1188 = scmp.lt.s32.totalorder %s1187, 7
          %s1189 = scalar_select %p1188, %s1187, 7
          %s1190 = smul.addr %s1189, 8
          %s1191 = scalar_lea.vmem %s1, %s1190
          %s1192 = smul.u32 4, %s103
        $region172: #{_lambda_.1} parent=167 // pred_fallthru
          _
        // Predicated region
        $region173: #{_lambda_.1} parent=167 // pred_check
          %p1193 = pneg %p153
        $region174: #{_lambda_.1} parent=167 // pred_check_branch
          %1195 = sbr.rel (%p1193) target = $region176
        $region175: #{_lambda_.1} parent=167 // pred_region
          %s1196 = smul.u32 4, %s103
          %p1197 = scmp.lt.s32.totalorder %s1196, 7
          %s1198 = scalar_select %p1197, %s1196, 7
          %s1199 = smul.addr %s1198, 8
          %s1200 = scalar_lea.vmem %s3, %s1199
          %s1201 = smul.u32 4, %s103
        $region176: #{_lambda_.1} parent=167 // pred_fallthru
          _
        // Predicated region
        $region177: #{_lambda_.1} parent=167 // pred_check
          %p1202 = pneg %p179
        $region178: #{_lambda_.1} parent=167 // pred_check_branch
          %1204 = sbr.rel (%p1202) target = $region180
        $region179: #{_lambda_.1} parent=167 // pred_region
          %s1205 = smul.u32 4, %s103
          %p1206 = scmp.lt.s32.totalorder %s1205, 7
          %s1207 = scalar_select %p1206, %s1205, 7
          %s1208 = smul.addr %s1207, 8
          %s1209 = scalar_lea.vmem %s5, %s1208
          %s1210 = smul.u32 4, %s103
        $region180: #{_lambda_.1} parent=167 // pred_fallthru
          _
        // Predicated region
        $region181: #{_lambda_.1} parent=167 // pred_check
          %p1211 = pneg %p205
        $region182: #{_lambda_.1} parent=167 // pred_check_branch
          %1213 = sbr.rel (%p1211) target = $region184
        $region183: #{_lambda_.1} parent=167 // pred_region
          %s1214 = smul.u32 4, %s103
          %p1215 = scmp.lt.s32.totalorder %s1214, 7
          %s1216 = scalar_select %p1215, %s1214, 7
          %s1217 = smul.addr %s1216, 8
          %s1218 = scalar_lea.vmem %s7, %s1217
          %s1219 = smul.u32 4, %s103
        $region184: #{_lambda_.1} parent=167 // pred_fallthru
          _
      $region168: #{_lambda_.1} parent=5 // pred_fallthru
        _
      %p1220 = scmp.le.s32.totalorder 1, %s95
      %p1221 = scmp.lt.s32.totalorder %s95, 5
      %p1222 = pnand %p1220, %p1221
      %p1223 = pneg %p1222
      // Predicated region
      $region185: #{_lambda_.1} parent=5 // pred_check
        _
      $region186: #{_lambda_.1} parent=5 // pred_check_branch
        %1225 = sbr.rel (%p1222) target = $region188
      $region187: #{_lambda_.1} parent=5 // pred_region
        %s1226 = ssub.s32 %s95, 1
        %s1227 = smul.u32 4, %s105
        %p1228 = scmp.lt.s32.totalorder %s1227, 7
        %s1229 = scalar_select %p1228, %s1227, 7
        %s1230 = smul.addr %s1229, 8
        %s1231 = scalar_lea.vmem %s1, %s1230
        %p1232 = pneg %p133
        %p1233 = pneg %p130
        %s1234 = smul.u32 4, %s105
        %p1235 = scmp.lt.s32.totalorder %s1234, 7
        %s1236 = scalar_select %p1235, %s1234, 7
        %s1237 = smul.addr %s1236, 8
        %s1238 = scalar_lea.vmem %s3, %s1237
        %p1239 = pneg %p159
        %p1240 = pneg %p156
        %s1241 = smul.u32 4, %s105
        %p1242 = scmp.lt.s32.totalorder %s1241, 7
        %s1243 = scalar_select %p1242, %s1241, 7
        %s1244 = smul.addr %s1243, 8
        %s1245 = scalar_lea.vmem %s5, %s1244
        %p1246 = pneg %p185
        %p1247 = pneg %p182
        %s1248 = smul.u32 4, %s105
        %p1249 = scmp.lt.s32.totalorder %s1248, 7
        %s1250 = scalar_select %p1249, %s1248, 7
        %s1251 = smul.addr %s1250, 8
        %s1252 = scalar_lea.vmem %s7, %s1251
        %p1253 = pneg %p211
        %p1254 = pneg %p208
        %p1255 = pneg %p232
        %p1256 = pneg %p229
        %p1257 = pneg %p253
        %p1258 = pneg %p250
        %p1259 = pneg %p274
        %p1260 = pneg %p271
        %p1261 = pneg %p295
        %p1262 = pneg %p292
        %p1263 = pneg %p316
        %p1264 = pneg %p313
        %p1265 = pneg %p337
        %p1266 = pneg %p334
        %p1267 = pneg %p358
        %p1268 = pneg %p355
        %p1269 = pneg %p379
        %p1270 = pneg %p376
        %p1271 = pneg %p400
        %p1272 = pneg %p397
        %p1273 = pneg %p421
        %p1274 = pneg %p418
        %p1275 = pneg %p442
        %p1276 = pneg %p439
        %p1277 = pneg %p463
        %p1278 = pneg %p460
        %p1279 = pneg %p484
        %p1280 = pneg %p481
        %p1281 = pneg %p505
        %p1282 = pneg %p502
        %p1283 = pneg %p526
        %p1284 = pneg %p523
        %p1285 = pneg %p547
        %p1286 = pneg %p544
        %p1287 = pneg %p568
        %p1288 = pneg %p565
        %p1289 = pneg %p589
        %p1290 = pneg %p586
        %p1291 = pneg %p610
        %p1292 = pneg %p607
        %p1293 = pneg %p631
        %p1294 = pneg %p628
        %p1295 = pneg %p652
        %p1296 = pneg %p649
        %p1297 = pneg %p673
        %p1298 = pneg %p670
        %p1299 = pneg %p694
        %p1300 = pneg %p691
        %p1301 = pneg %p715
        %p1302 = pneg %p712
        %p1303 = pneg %p736
        %p1304 = pneg %p733
        %p1305 = pneg %p757
        %p1306 = pneg %p754
        %p1307 = pneg %p778
        %p1308 = pneg %p775
        %p1309 = pneg %p799
        %p1310 = pneg %p796
        %p1311 = pneg %p820
        %p1312 = pneg %p817
        %p1313 = pneg %p841
        %p1314 = pneg %p838
        %p1315 = pneg %p862
        %p1316 = pneg %p859
        %p1317 = pneg %p883
        %p1318 = pneg %p880
        %p1319 = pneg %p904
        %p1320 = pneg %p901
        %p1321 = pneg %p925
        %p1322 = pneg %p922
        %p1323 = pneg %p946
        %p1324 = pneg %p943
        %p1325 = pneg %p967
        %p1326 = pneg %p964
        %p1327 = pneg %p988
        %p1328 = pneg %p985
        %p1329 = pneg %p1009
        %p1330 = pneg %p1006
        %p1331 = pneg %p1030
        %p1332 = pneg %p1027
        %p1333 = pneg %p1051
        %p1334 = pneg %p1048
        %s1335 = smul.u32 4, %s105
        %p1336 = scmp.lt.s32.totalorder %s1335, 7
        %s1337 = scalar_select %p1336, %s1335, 7
        %s1338 = smul.addr %s1337, 8
        %s1339 = scalar_lea.vmem %s1, %s1338
        %s1340 = smul.u32 4, %s105
        %s1341 = smul.u32 4, %s105
        %p1342 = scmp.lt.s32.totalorder %s1341, 7
        %s1343 = scalar_select %p1342, %s1341, 7
        %s1344 = smul.addr %s1343, 8
        %s1345 = scalar_lea.vmem %s3, %s1344
        %s1346 = smul.u32 4, %s105
        %s1347 = smul.u32 4, %s105
        %p1348 = scmp.lt.s32.totalorder %s1347, 7
        %s1349 = scalar_select %p1348, %s1347, 7
        %s1350 = smul.addr %s1349, 8
        %s1351 = scalar_lea.vmem %s5, %s1350
        %s1352 = smul.u32 4, %s105
        %s1353 = smul.u32 4, %s105
        %p1354 = scmp.lt.s32.totalorder %s1353, 7
        %s1355 = scalar_select %p1354, %s1353, 7
        %s1356 = smul.addr %s1355, 8
        %s1357 = scalar_lea.vmem %s7, %s1356
        %s1358 = smul.u32 4, %s105
        %v1360 = vlaneseq
        %v1361 = vand.u32 %v1360, 127
        %v1362 = vld [vmem:[%s1339] sm:$0xff]
        %v1363 = vld [vmem:[%s1339 + $0x8] sm:$0xff]
        %v1364 = vld [vmem:[%s1339 + $0x10] sm:$0xff]
        %v1365 = vld [vmem:[%s1339 + $0x18] sm:$0xff]
        %1366 = vset.pattern.permute.xlu0 0
        %1367 = vperm.xlu0 %1366, %v1362
        %v1368 = vpop.permute.xlu0 %1367
        %1369 = vset.pattern.permute.xlu0 0
        %1370 = vperm.xlu0 %1369, %v1363
        %v1371 = vpop.permute.xlu0 %1370
        %1372 = vset.pattern.permute.xlu0 0
        %1373 = vperm.xlu0 %1372, %v1364
        %v1374 = vpop.permute.xlu0 %1373
        %1375 = vset.pattern.permute.xlu0 0
        %1376 = vperm.xlu0 %1375, %v1365
        %v1377 = vpop.permute.xlu0 %1376
        %vm1378 = vcmp.eq.s32.totalorder %v1361, %v1368
        %vm1379 = vcmp.eq.s32.totalorder %v1361, %v1371
        %vm1380 = vcmp.eq.s32.totalorder %v1361, %v1374
        %vm1381 = vcmp.eq.s32.totalorder %v1361, %v1377
        %v1382 = vsel %vm1378, 1, 0
        %v1383 = vsel %vm1379, 1, 0
        %v1384 = vsel %vm1380, 1, 0
        %v1385 = vsel %vm1381, 1, 0
        %v1386 = vcvt.s32.f32 %v1382
        %v1387 = vcvt.s32.f32 %v1383
        %v1388 = vcvt.s32.f32 %v1384
        %v1389 = vcvt.s32.f32 %v1385
        %v1390 = vpack.c.bf16 %v1387, %v1386
        %v1391 = vpack.c.bf16 %v1389, %v1388
        %v1392 = vld [vmem:[%s1345] sm:$0xff]
        %v1393 = vld [vmem:[%s1345 + $0x8] sm:$0xff]
        %v1394 = vld [vmem:[%s1345 + $0x10] sm:$0xff]
        %v1395 = vld [vmem:[%s1345 + $0x18] sm:$0xff]
        %1396 = vset.pattern.permute.xlu0 0
        %1397 = vperm.xlu0 %1396, %v1392
        %v1398 = vpop.permute.xlu0 %1397
        %1399 = vset.pattern.permute.xlu0 0
        %1400 = vperm.xlu0 %1399, %v1393
        %v1401 = vpop.permute.xlu0 %1400
        %1402 = vset.pattern.permute.xlu0 0
        %1403 = vperm.xlu0 %1402, %v1394
        %v1404 = vpop.permute.xlu0 %1403
        %1405 = vset.pattern.permute.xlu0 0
        %1406 = vperm.xlu0 %1405, %v1395
        %v1407 = vpop.permute.xlu0 %1406
        %vm1408 = vcmp.eq.s32.totalorder %v1361, %v1398
        %vm1409 = vcmp.eq.s32.totalorder %v1361, %v1401
        %vm1410 = vcmp.eq.s32.totalorder %v1361, %v1404
        %vm1411 = vcmp.eq.s32.totalorder %v1361, %v1407
        %v1412 = vsel %vm1408, 1, 0
        %v1413 = vsel %vm1409, 1, 0
        %v1414 = vsel %vm1410, 1, 0
        %v1415 = vsel %vm1411, 1, 0
        %v1416 = vcvt.s32.f32 %v1412
        %v1417 = vcvt.s32.f32 %v1413
        %v1418 = vcvt.s32.f32 %v1414
        %v1419 = vcvt.s32.f32 %v1415
        %v1420 = vpack.c.bf16 %v1417, %v1416
        %v1421 = vpack.c.bf16 %v1419, %v1418
        %s1422 = smul.u32 %s105, 32
        %p1423 = scmp.eq.s32.totalorder %s104, 0
        %p1424 = scmp.eq.s32.totalorder %s105, 0
        %p1425 = pnand %p1423, %p1424
        %p1426 = pneg %p1425
        // Predicated region
        $region189: #{_lambda_.1} parent=187 // pred_check
          _
        $region190: #{_lambda_.1} parent=187 // pred_check_branch
          %1428 = sbr.rel (%p1425) target = $region192
        $region191: #{_lambda_.1} parent=187 // pred_region
          %v1429 = vld [vmem:[%s9] sm:$0xff]
          %v1430 = vld [vmem:[%s23] sm:$0x1]
          %v1431 = vld [vmem:[%s25] sm:$0x1]
          %vm1432 = vcmask 261120
          %v1433 = vsel %vm1432, %v1429, 0.0
          %1434 = vadd.xlane.f32.xlu0 %v1433
          %v1435 = vpop.xlane.xlu0 %1434
          %v1436 = vrcp.pop 32.0
          %v1437 = vmul.f32 %v1435, %v1436
          %v1438 = vsub.f32 %v1429, %v1437
          %v1439 = vmul.f32 %v1438, %v1438
          %v1440 = vsel %vm1432, %v1439, 0.0
          %1441 = vadd.xlane.f32.xlu0 %v1440
          %v1442 = vpop.xlane.xlu0 %1441
          %v1443 = vmul.f32 %v1442, %v1436
          %v1444 = vadd.f32 %v1443, 1e-05
          %v1445 = vrsqrt.pop %v1444
          %v1446 = vmul.f32 %v1438, %v1445
          %v1448 = vlaneseq
          %v1449 = vshrl.u32 %v1448, 7
          %v1450 = vsub.s32 0, %v1449
          %v1451 = vrot.slane %v1430, %v1450
          %v1453 = vmul.f32 %v1446, %v1451
          %v1455 = vlaneseq
          %v1456 = vshrl.u32 %v1455, 7
          %v1457 = vsub.s32 0, %v1456
          %v1458 = vrot.slane %v1431, %v1457
          %v1460 = vadd.f32 %v1453, %v1458
          %v1461 = vpack.c.bf16 %v1460, %v1460
          %v1462 = vld [vmem:[%s35] sm:$0xf]
          %v1463 = vld [vmem:[%s35 + $0x4] sm:$0xf]
          %v1464 = vld [vmem:[%s35 + $0x8] sm:$0xf]
          %v1465 = vld [vmem:[%s35 + $0xc] sm:$0xf]
          %v1466 = vld [vmem:[%s37] sm:$0x1]
          %v1468 = vlaneseq
          %v1469 = vshrl.u32 %v1468, 7
          %v1470 = vsub.s32 0, %v1469
          %v1471 = vrot.slane %v1466, %v1470
          %v1477 = vunpack.c.l.b16 %v1462
          %v1478 = vunpack.c.l.b16 %v1463
          %v1479 = vunpack.c.l.b16 %v1464
          %v1480 = vunpack.c.l.b16 %v1465
          %v1481 = vpack.c.b16 %v1478, %v1477
          %v1482 = vpack.c.b16 %v1480, %v1479
          %v1486 = vsel %vm1432, %v1461, 0
          %1488 = vmatprep.subr.bf16.mxu0 0
          %1489 = vmatpush1.bf16.msra.mxu0 0
          %1490 = vmatprep.subr.bf16.mxu0 0
          %1491 = vmatpush1.bf16.msra.mxu0 0
          %1492 = vmatprep.subr.bf16.mxu0 0
          %1493 = vmatpush1.bf16.msra.mxu0 0
          %1494 = vmatprep.subr.bf16.mxu0 0
          %1495 = vmatpush1.bf16.msra.mxu0 0
          %1496 = vmatprep.subr.bf16.mxu0 0
          %1497 = vmatpush1.bf16.msra.mxu0 0
          %1498 = vmatprep.subr.bf16.mxu0 0
          %1499 = vmatpush1.bf16.msra.mxu0 0
          %1500 = vmatprep.subr.bf16.mxu0 0
          %1501 = vmatpush1.bf16.msra.mxu0 %v1482
          %1502 = vmatprep.subr.bf16.mxu0 0
          %1503 = vmatpush1.bf16.msra.mxu0 %v1481
          %1504 = vmatprep.subr.bf16.mxu0 0
          %1505 = vmatpush2.bf16.msra.mxu0 0
          %1506 = vmatprep.subr.bf16.mxu0 0
          %1507 = vmatpush2.bf16.msra.mxu0 0
          %1508 = vmatprep.subr.bf16.mxu0 0
          %1509 = vmatpush2.bf16.msra.mxu0 0
          %1510 = vmatprep.subr.bf16.mxu0 0
          %1511 = vmatpush2.bf16.msra.mxu0 0
          %1512 = vmatprep.subr.bf16.mxu0 0
          %1513 = vmatpush2.bf16.msra.mxu0 0
          %1514 = vmatprep.subr.bf16.mxu0 0
          %1515 = vmatpush2.bf16.msra.mxu0 0
          %1516 = vmatprep.subr.bf16.mxu0 0
          %1517 = vmatpush2.bf16.msra.mxu0 0
          %1518 = vmatprep.subr.bf16.mxu0 0
          %1519 = vmatpush2.bf16.msra.mxu0 0
          %1520 = vmatprep.mubr.bf16.mxu0 0
          %1521 = vmatmul.mubr.bf16.gmra.mxu0 %v1486
          %v1522 = vpop.f32.mrf.mxu0
          %v1523 = vadd.f32 %v1471, %v1522
          %v1524 = vpop.f32.mrf.mxu0
          %v1525 = vpop.f32.mrf.mxu0
          %v1526 = vpop.f32.mrf.mxu0
          %1527 = vdwg.mxu0
          %v1528 = vpack.c.bf16 %v1523, %v1523
          %vm1529 = vcmask 257024
          %1530 = vst.msk [vmem:[#allocation2] sm:$0xf] %vm1529, %v1528
          %v1531 = vld [vmem:[%s39] sm:$0xf]
          %v1532 = vld [vmem:[%s39 + $0x4] sm:$0xf]
          %v1533 = vld [vmem:[%s39 + $0x8] sm:$0xf]
          %v1534 = vld [vmem:[%s39 + $0xc] sm:$0xf]
          %v1535 = vld [vmem:[%s41] sm:$0x1]
          %v1537 = vlaneseq
          %v1538 = vshrl.u32 %v1537, 7
          %v1539 = vsub.s32 0, %v1538
          %v1540 = vrot.slane %v1535, %v1539
          %v1546 = vunpack.c.l.b16 %v1531
          %v1547 = vunpack.c.l.b16 %v1532
          %v1548 = vunpack.c.l.b16 %v1533
          %v1549 = vunpack.c.l.b16 %v1534
          %v1550 = vpack.c.b16 %v1547, %v1546
          %v1551 = vpack.c.b16 %v1549, %v1548
          %1554 = vmatprep.subr.bf16.mxu0 0
          %1555 = vmatpush1.bf16.msra.mxu0 0
          %1556 = vmatprep.subr.bf16.mxu0 0
          %1557 = vmatpush1.bf16.msra.mxu0 0
          %1558 = vmatprep.subr.bf16.mxu0 0
          %1559 = vmatpush1.bf16.msra.mxu0 0
          %1560 = vmatprep.subr.bf16.mxu0 0
          %1561 = vmatpush1.bf16.msra.mxu0 0
          %1562 = vmatprep.subr.bf16.mxu0 0
          %1563 = vmatpush1.bf16.msra.mxu0 0
          %1564 = vmatprep.subr.bf16.mxu0 0
          %1565 = vmatpush1.bf16.msra.mxu0 0
          %1566 = vmatprep.subr.bf16.mxu0 0
          %1567 = vmatpush1.bf16.msra.mxu0 %v1551
          %1568 = vmatprep.subr.bf16.mxu0 0
          %1569 = vmatpush1.bf16.msra.mxu0 %v1550
          %1570 = vmatprep.subr.bf16.mxu0 0
          %1571 = vmatpush2.bf16.msra.mxu0 0
          %1572 = vmatprep.subr.bf16.mxu0 0
          %1573 = vmatpush2.bf16.msra.mxu0 0
          %1574 = vmatprep.subr.bf16.mxu0 0
          %1575 = vmatpush2.bf16.msra.mxu0 0
          %1576 = vmatprep.subr.bf16.mxu0 0
          %1577 = vmatpush2.bf16.msra.mxu0 0
          %1578 = vmatprep.subr.bf16.mxu0 0
          %1579 = vmatpush2.bf16.msra.mxu0 0
          %1580 = vmatprep.subr.bf16.mxu0 0
          %1581 = vmatpush2.bf16.msra.mxu0 0
          %1582 = vmatprep.subr.bf16.mxu0 0
          %1583 = vmatpush2.bf16.msra.mxu0 0
          %1584 = vmatprep.subr.bf16.mxu0 0
          %1585 = vmatpush2.bf16.msra.mxu0 0
          %1586 = vmatprep.mubr.bf16.mxu0 0
          %1587 = vmatmul.mubr.bf16.gmra.mxu0 %v1486
          %v1588 = vpop.f32.mrf.mxu0
          %v1589 = vadd.f32 %v1540, %v1588
          %v1590 = vpop.f32.mrf.mxu0
          %v1591 = vpop.f32.mrf.mxu0
          %v1592 = vpop.f32.mrf.mxu0
          %1593 = vdwg.mxu0
          %v1594 = vpack.c.bf16 %v1589, %v1589
          %1595 = vst.msk [vmem:[#allocation3] sm:$0xf] %vm1529, %v1594
          %v1596 = vld [vmem:[%s43] sm:$0xf]
          %v1597 = vld [vmem:[%s43 + $0x4] sm:$0xf]
          %v1598 = vld [vmem:[%s43 + $0x8] sm:$0xf]
          %v1599 = vld [vmem:[%s43 + $0xc] sm:$0xf]
          %v1600 = vld [vmem:[%s45] sm:$0x1]
          %v1602 = vlaneseq
          %v1603 = vshrl.u32 %v1602, 7
          %v1604 = vsub.s32 0, %v1603
          %v1605 = vrot.slane %v1600, %v1604
          %v1611 = vunpack.c.l.b16 %v1596
          %v1612 = vunpack.c.l.b16 %v1597
          %v1613 = vunpack.c.l.b16 %v1598
          %v1614 = vunpack.c.l.b16 %v1599
          %v1615 = vpack.c.b16 %v1612, %v1611
          %v1616 = vpack.c.b16 %v1614, %v1613
          %1619 = vmatprep.subr.bf16.mxu0 0
          %1620 = vmatpush1.bf16.msra.mxu0 0
          %1621 = vmatprep.subr.bf16.mxu0 0
          %1622 = vmatpush1.bf16.msra.mxu0 0
          %1623 = vmatprep.subr.bf16.mxu0 0
          %1624 = vmatpush1.bf16.msra.mxu0 0
          %1625 = vmatprep.subr.bf16.mxu0 0
          %1626 = vmatpush1.bf16.msra.mxu0 0
          %1627 = vmatprep.subr.bf16.mxu0 0
          %1628 = vmatpush1.bf16.msra.mxu0 0
          %1629 = vmatprep.subr.bf16.mxu0 0
          %1630 = vmatpush1.bf16.msra.mxu0 0
          %1631 = vmatprep.subr.bf16.mxu0 0
          %1632 = vmatpush1.bf16.msra.mxu0 %v1616
          %1633 = vmatprep.subr.bf16.mxu0 0
          %1634 = vmatpush1.bf16.msra.mxu0 %v1615
          %1635 = vmatprep.subr.bf16.mxu0 0
          %1636 = vmatpush2.bf16.msra.mxu0 0
          %1637 = vmatprep.subr.bf16.mxu0 0
          %1638 = vmatpush2.bf16.msra.mxu0 0
          %1639 = vmatprep.subr.bf16.mxu0 0
          %1640 = vmatpush2.bf16.msra.mxu0 0
          %1641 = vmatprep.subr.bf16.mxu0 0
          %1642 = vmatpush2.bf16.msra.mxu0 0
          %1643 = vmatprep.subr.bf16.mxu0 0
          %1644 = vmatpush2.bf16.msra.mxu0 0
          %1645 = vmatprep.subr.bf16.mxu0 0
          %1646 = vmatpush2.bf16.msra.mxu0 0
          %1647 = vmatprep.subr.bf16.mxu0 0
          %1648 = vmatpush2.bf16.msra.mxu0 0
          %1649 = vmatprep.subr.bf16.mxu0 0
          %1650 = vmatpush2.bf16.msra.mxu0 0
          %1651 = vmatprep.mubr.bf16.mxu0 0
          %1652 = vmatmul.mubr.bf16.gmra.mxu0 %v1486
          %v1653 = vpop.f32.mrf.mxu0
          %v1654 = vadd.f32 %v1605, %v1653
          %v1655 = vpop.f32.mrf.mxu0
          %v1656 = vpop.f32.mrf.mxu0
          %v1657 = vpop.f32.mrf.mxu0
          %1658 = vdwg.mxu0
          %v1659 = vpack.c.bf16 %v1654, %v1654
          %1660 = vst.msk [vmem:[#allocation4] sm:$0xf] %vm1529, %v1659
          %v1661 = vld [vmem:[%s11] sm:$0xff]
          %v1662 = vpack.c.bf16 %v1661, %v1661
          %v1663 = vld [vmem:[%s47] sm:$0xf]
          %v1664 = vld [vmem:[%s47 + $0x4] sm:$0xf]
          %v1665 = vld [vmem:[%s47 + $0x8] sm:$0xf]
          %v1666 = vld [vmem:[%s47 + $0xc] sm:$0xf]
          %v1667 = vld [vmem:[%s47 + $0x10] sm:$0xf]
          %v1668 = vld [vmem:[%s47 + $0x14] sm:$0xf]
          %v1669 = vld [vmem:[%s47 + $0x18] sm:$0xf]
          %v1670 = vld [vmem:[%s47 + $0x1c] sm:$0xf]
          %v1671 = vld [vmem:[%s47 + $0x20] sm:$0xf]
          %v1672 = vld [vmem:[%s47 + $0x24] sm:$0xf]
          %v1673 = vld [vmem:[%s47 + $0x28] sm:$0xf]
          %v1674 = vld [vmem:[%s47 + $0x2c] sm:$0xf]
          %v1687 = vunpack.c.l.b16 %v1663
          %v1688 = vunpack.c.l.b16 %v1664
          %v1689 = vunpack.c.l.b16 %v1665
          %v1690 = vunpack.c.l.b16 %v1666
          %v1691 = vunpack.c.l.b16 %v1667
          %v1692 = vunpack.c.l.b16 %v1668
          %v1693 = vunpack.c.l.b16 %v1669
          %v1694 = vunpack.c.l.b16 %v1670
          %v1695 = vunpack.c.l.b16 %v1671
          %v1696 = vunpack.c.l.b16 %v1672
          %v1697 = vunpack.c.l.b16 %v1673
          %v1698 = vunpack.c.l.b16 %v1674
          %v1699 = vpack.c.b16 %v1688, %v1687
          %v1700 = vpack.c.b16 %v1690, %v1689
          %v1701 = vpack.c.b16 %v1692, %v1691
          %v1702 = vpack.c.b16 %v1694, %v1693
          %v1703 = vpack.c.b16 %v1696, %v1695
          %v1704 = vpack.c.b16 %v1698, %v1697
          %vm1711 = vcmask 785408
          %v1713 = vsel %vm1711, %v1662, 0
          %1715 = vmatprep.subr.bf16.mxu0 0
          %1716 = vmatpush1.bf16.msra.mxu0 0
          %1717 = vmatprep.subr.bf16.mxu0 0
          %1718 = vmatpush1.bf16.msra.mxu0 0
          %1719 = vmatprep.subr.bf16.mxu0 0
          %1720 = vmatpush1.bf16.msra.mxu0 %v1704
          %1721 = vmatprep.subr.bf16.mxu0 0
          %1722 = vmatpush1.bf16.msra.mxu0 %v1703
          %1723 = vmatprep.subr.bf16.mxu0 0
          %1724 = vmatpush1.bf16.msra.mxu0 %v1702
          %1725 = vmatprep.subr.bf16.mxu0 0
          %1726 = vmatpush1.bf16.msra.mxu0 %v1701
          %1727 = vmatprep.subr.bf16.mxu0 0
          %1728 = vmatpush1.bf16.msra.mxu0 %v1700
          %1729 = vmatprep.subr.bf16.mxu0 0
          %1730 = vmatpush1.bf16.msra.mxu0 %v1699
          %1731 = vmatprep.subr.bf16.mxu0 0
          %1732 = vmatpush2.bf16.msra.mxu0 0
          %1733 = vmatprep.subr.bf16.mxu0 0
          %1734 = vmatpush2.bf16.msra.mxu0 0
          %1735 = vmatprep.subr.bf16.mxu0 0
          %1736 = vmatpush2.bf16.msra.mxu0 0
          %1737 = vmatprep.subr.bf16.mxu0 0
          %1738 = vmatpush2.bf16.msra.mxu0 0
          %1739 = vmatprep.subr.bf16.mxu0 0
          %1740 = vmatpush2.bf16.msra.mxu0 0
          %1741 = vmatprep.subr.bf16.mxu0 0
          %1742 = vmatpush2.bf16.msra.mxu0 0
          %1743 = vmatprep.subr.bf16.mxu0 0
          %1744 = vmatpush2.bf16.msra.mxu0 0
          %1745 = vmatprep.subr.bf16.mxu0 0
          %1746 = vmatpush2.bf16.msra.mxu0 0
          %1747 = vmatprep.mubr.bf16.mxu0 0
          %1748 = vmatmul.mubr.bf16.gmra.mxu0 %v1713
          %v1749 = vpop.f32.mrf.mxu0
          %v1750 = vadd.f32 0.0, %v1749
          %v1751 = vpop.f32.mrf.mxu0
          %v1752 = vpop.f32.mrf.mxu0
          %v1753 = vpop.f32.mrf.mxu0
          %1754 = vdwg.mxu0
          %v1755 = vpack.c.bf16 %v1750, %v1750
          %vm1756 = vcmask 781312
          %1757 = vst.msk [vmem:[#allocation5] sm:$0xf] %vm1756, %v1755
          %vm1758 = vcmask 57344
          %1759 = vst.msk [vmem:[#allocation6] sm:$0x1] %vm1758, -1e+30
          %vm1760 = vcmask 31744
          %1761 = vst.msk [vmem:[#allocation7] sm:$0xff] %vm1760, 0.0
          %1762 = vst.msk [vmem:[#allocation8] sm:$0xff] %vm1432, 0.0
          %1763 = vst.msk [vmem:[#allocation9] sm:$0xff] %vm1711, 0.0
        $region192: #{_lambda_.1} parent=187 // pred_fallthru
          _
        // Predicated region
        $region193: #{_lambda_.1} parent=187 // pred_check
          %p1764 = pneg %p1423
        $region194: #{_lambda_.1} parent=187 // pred_check_branch
          %1766 = sbr.rel (%p1764) target = $region196
        $region195: #{_lambda_.1} parent=187 // pred_region
          %v1767 = vld [vmem:[#allocation2] sm:$0xf]
          %vm1768 = vcmask 64512
          %v1770 = vsel %vm1768, %v1420, 0
          %v1773 = vsel %vm1768, %v1421, 0
          %vm1775 = vcmask 1043456
          %v1777 = vsel %vm1775, %v1767, 0
          %1779 = vmatprep.subr.bf16.mxu0 0
          %1780 = vmatpush1.bf16.msra.mxu0 0
          %1781 = vmatprep.subr.bf16.mxu0 0
          %1782 = vmatpush1.bf16.msra.mxu0 0
          %1783 = vmatprep.subr.bf16.mxu0 0
          %1784 = vmatpush1.bf16.msra.mxu0 0
          %1785 = vmatprep.subr.bf16.mxu0 0
          %1786 = vmatpush1.bf16.msra.mxu0 0
          %1787 = vmatprep.subr.bf16.mxu0 0
          %1788 = vmatpush1.bf16.msra.mxu0 0
          %1789 = vmatprep.subr.bf16.mxu0 0
          %1790 = vmatpush1.bf16.msra.mxu0 0
          %1791 = vmatprep.subr.bf16.mxu0 0
          %1792 = vmatpush1.bf16.msra.mxu0 0
          %1793 = vmatprep.subr.bf16.mxu0 0
          %1794 = vmatpush1.bf16.msra.mxu0 %v1777
          %1795 = vmatprep.subr.bf16.mxu0 0
          %1796 = vmatpush2.bf16.msra.mxu0 0
          %1797 = vmatprep.subr.bf16.mxu0 0
          %1798 = vmatpush2.bf16.msra.mxu0 0
          %1799 = vmatprep.subr.bf16.mxu0 0
          %1800 = vmatpush2.bf16.msra.mxu0 0
          %1801 = vmatprep.subr.bf16.mxu0 0
          %1802 = vmatpush2.bf16.msra.mxu0 0
          %1803 = vmatprep.subr.bf16.mxu0 0
          %1804 = vmatpush2.bf16.msra.mxu0 0
          %1805 = vmatprep.subr.bf16.mxu0 0
          %1806 = vmatpush2.bf16.msra.mxu0 0
          %1807 = vmatprep.subr.bf16.mxu0 0
          %1808 = vmatpush2.bf16.msra.mxu0 0
          %1809 = vmatprep.subr.bf16.mxu0 0
          %1810 = vmatpush2.bf16.msra.mxu0 0
          %1811 = vmatprep.mubr.bf16.mxu0 0
          %1812 = vmatmul.mubr.bf16.gmra.mxu0 %v1770
          %v1813 = vpop.f32.mrf.mxu0
          %v1814 = vadd.f32 0.0, %v1813
          %v1815 = vpop.f32.mrf.mxu0
          %v1816 = vpop.f32.mrf.mxu0
          %v1817 = vadd.f32 0.0, %v1816
          %v1818 = vpop.f32.mrf.mxu0
          %1819 = vmatprep.mubr.bf16.mxu0 0
          %1820 = vmatmul.mubr.bf16.gmra.mxu0 %v1773
          %v1821 = vpop.f32.mrf.mxu0
          %v1822 = vadd.f32 0.0, %v1821
          %v1823 = vpop.f32.mrf.mxu0
          %v1824 = vpop.f32.mrf.mxu0
          %v1825 = vadd.f32 0.0, %v1824
          %v1826 = vpop.f32.mrf.mxu0
          %1827 = vdwg.mxu0
          %v1828 = vld [vmem:[#allocation3] sm:$0xf]
          %v1830 = vsel %vm1768, %v1390, 0
          %v1833 = vsel %vm1768, %v1391, 0
          %v1836 = vsel %vm1775, %v1828, 0
          %1838 = vmatprep.subr.bf16.mxu0 0
          %1839 = vmatpush1.bf16.msra.mxu0 0
          %1840 = vmatprep.subr.bf16.mxu0 0
          %1841 = vmatpush1.bf16.msra.mxu0 0
          %1842 = vmatprep.subr.bf16.mxu0 0
          %1843 = vmatpush1.bf16.msra.mxu0 0
          %1844 = vmatprep.subr.bf16.mxu0 0
          %1845 = vmatpush1.bf16.msra.mxu0 0
          %1846 = vmatprep.subr.bf16.mxu0 0
          %1847 = vmatpush1.bf16.msra.mxu0 0
          %1848 = vmatprep.subr.bf16.mxu0 0
          %1849 = vmatpush1.bf16.msra.mxu0 0
          %1850 = vmatprep.subr.bf16.mxu0 0
          %1851 = vmatpush1.bf16.msra.mxu0 0
          %1852 = vmatprep.subr.bf16.mxu0 0
          %1853 = vmatpush1.bf16.msra.mxu0 %v1836
          %1854 = vmatprep.subr.bf16.mxu0 0
          %1855 = vmatpush2.bf16.msra.mxu0 0
          %1856 = vmatprep.subr.bf16.mxu0 0
          %1857 = vmatpush2.bf16.msra.mxu0 0
          %1858 = vmatprep.subr.bf16.mxu0 0
          %1859 = vmatpush2.bf16.msra.mxu0 0
          %1860 = vmatprep.subr.bf16.mxu0 0
          %1861 = vmatpush2.bf16.msra.mxu0 0
          %1862 = vmatprep.subr.bf16.mxu0 0
          %1863 = vmatpush2.bf16.msra.mxu0 0
          %1864 = vmatprep.subr.bf16.mxu0 0
          %1865 = vmatpush2.bf16.msra.mxu0 0
          %1866 = vmatprep.subr.bf16.mxu0 0
          %1867 = vmatpush2.bf16.msra.mxu0 0
          %1868 = vmatprep.subr.bf16.mxu0 0
          %1869 = vmatpush2.bf16.msra.mxu0 0
          %1870 = vmatprep.mubr.bf16.mxu0 0
          %1871 = vmatmul.mubr.bf16.gmra.mxu0 %v1830
          %v1872 = vpop.f32.mrf.mxu0
          %v1873 = vadd.f32 0.0, %v1872
          %v1874 = vpop.f32.mrf.mxu0
          %v1875 = vpop.f32.mrf.mxu0
          %v1876 = vadd.f32 0.0, %v1875
          %v1877 = vpop.f32.mrf.mxu0
          %1878 = vmatprep.mubr.bf16.mxu0 0
          %1879 = vmatmul.mubr.bf16.gmra.mxu0 %v1833
          %v1880 = vpop.f32.mrf.mxu0
          %v1881 = vadd.f32 0.0, %v1880
          %v1882 = vpop.f32.mrf.mxu0
          %v1883 = vpop.f32.mrf.mxu0
          %v1884 = vadd.f32 0.0, %v1883
          %v1885 = vpop.f32.mrf.mxu0
          %1886 = vdwg.mxu0
          %v1887 = vld [vmem:[%s1351] sm:$0xff]
          %v1888 = vld [vmem:[%s1351 + $0x8] sm:$0xff]
          %v1889 = vld [vmem:[%s1351 + $0x10] sm:$0xff]
          %v1890 = vld [vmem:[%s1351 + $0x18] sm:$0xff]
          %v1891 = vpack.c.bf16 %v1888, %v1887
          %v1892 = vpack.c.bf16 %v1890, %v1889
          %v1893 = vld [vmem:[%s53] sm:$0xf]
          %v1894 = vld [vmem:[%s53 + $0x4] sm:$0xf]
          %v1895 = vld [vmem:[%s55] sm:$0x1]
          %v1897 = vlaneseq
          %v1898 = vshrl.u32 %v1897, 7
          %v1899 = vsub.s32 0, %v1898
          %v1900 = vrot.slane %v1895, %v1899
          %v1904 = vunpack.c.l.b16 %v1893
          %v1905 = vunpack.c.l.b16 %v1894
          %v1906 = vpack.c.b16 %v1905, %v1904
          %vm1908 = vcmask 130048
          %v1910 = vsel %vm1908, %v1891, 0
          %v1913 = vsel %vm1908, %v1892, 0
          %1915 = vmatprep.subr.bf16.mxu0 0
          %1916 = vmatpush1.bf16.msra.mxu0 0
          %1917 = vmatprep.subr.bf16.mxu0 0
          %1918 = vmatpush1.bf16.msra.mxu0 0
          %1919 = vmatprep.subr.bf16.mxu0 0
          %1920 = vmatpush1.bf16.msra.mxu0 0
          %1921 = vmatprep.subr.bf16.mxu0 0
          %1922 = vmatpush1.bf16.msra.mxu0 0
          %1923 = vmatprep.subr.bf16.mxu0 0
          %1924 = vmatpush1.bf16.msra.mxu0 0
          %1925 = vmatprep.subr.bf16.mxu0 0
          %1926 = vmatpush1.bf16.msra.mxu0 0
          %1927 = vmatprep.subr.bf16.mxu0 0
          %1928 = vmatpush1.bf16.msra.mxu0 0
          %1929 = vmatprep.subr.bf16.mxu0 0
          %1930 = vmatpush1.bf16.msra.mxu0 %v1906
          %1931 = vmatprep.subr.bf16.mxu0 0
          %1932 = vmatpush2.bf16.msra.mxu0 0
          %1933 = vmatprep.subr.bf16.mxu0 0
          %1934 = vmatpush2.bf16.msra.mxu0 0
          %1935 = vmatprep.subr.bf16.mxu0 0
          %1936 = vmatpush2.bf16.msra.mxu0 0
          %1937 = vmatprep.subr.bf16.mxu0 0
          %1938 = vmatpush2.bf16.msra.mxu0 0
          %1939 = vmatprep.subr.bf16.mxu0 0
          %1940 = vmatpush2.bf16.msra.mxu0 0
          %1941 = vmatprep.subr.bf16.mxu0 0
          %1942 = vmatpush2.bf16.msra.mxu0 0
          %1943 = vmatprep.subr.bf16.mxu0 0
          %1944 = vmatpush2.bf16.msra.mxu0 0
          %1945 = vmatprep.subr.bf16.mxu0 0
          %1946 = vmatpush2.bf16.msra.mxu0 0
          %1947 = vmatprep.mubr.bf16.mxu0 0
          %1948 = vmatmul.mubr.bf16.gmra.mxu0 %v1910
          %v1949 = vpop.f32.mrf.mxu0
          %v1950 = vadd.f32 %v1900, %v1949
          %v1951 = vpop.f32.mrf.mxu0
          %v1952 = vpop.f32.mrf.mxu0
          %v1953 = vadd.f32 %v1900, %v1952
          %v1954 = vpop.f32.mrf.mxu0
          %1955 = vmatprep.mubr.bf16.mxu0 0
          %1956 = vmatmul.mubr.bf16.gmra.mxu0 %v1913
          %v1957 = vpop.f32.mrf.mxu0
          %v1958 = vadd.f32 %v1900, %v1957
          %v1959 = vpop.f32.mrf.mxu0
          %v1960 = vpop.f32.mrf.mxu0
          %v1961 = vadd.f32 %v1900, %v1960
          %v1962 = vpop.f32.mrf.mxu0
          %1963 = vdwg.mxu0
          %v1964 = vxor.u32 %v1950, 2147483648
          %v1965 = vxor.u32 %v1953, 2147483648
          %v1966 = vxor.u32 %v1958, 2147483648
          %v1967 = vxor.u32 %v1961, 2147483648
          %v1968 = vmul.f32 %v1964, 1.442695
          %v1969 = vpow.pop %v1968
          %v1970 = vmul.f32 %v1965, 1.442695
          %v1971 = vpow.pop %v1970
          %v1972 = vmul.f32 %v1966, 1.442695
          %v1973 = vpow.pop %v1972
          %v1974 = vmul.f32 %v1967, 1.442695
          %v1975 = vpow.pop %v1974
          %v1976 = vadd.f32 %v1969, 1.0
          %v1977 = vadd.f32 %v1971, 1.0
          %v1978 = vadd.f32 %v1973, 1.0
          %v1979 = vadd.f32 %v1975, 1.0
          %v1980 = vrcp.pop %v1976
          %v1981 = vmul.f32 1.0, %v1980
          %v1982 = vrcp.pop %v1977
          %v1983 = vmul.f32 1.0, %v1982
          %v1984 = vrcp.pop %v1978
          %v1985 = vmul.f32 1.0, %v1984
          %v1986 = vrcp.pop %v1979
          %v1987 = vmul.f32 1.0, %v1986
          %v1988 = vmul.f32 %v1950, %v1981
          %v1989 = vmul.f32 %v1953, %v1983
          %v1990 = vmul.f32 %v1958, %v1985
          %v1991 = vmul.f32 %v1961, %v1987
          %v1992 = vpack.c.bf16 %v1989, %v1988
          %v1993 = vpack.c.bf16 %v1991, %v1990
          %v1994 = vld [vmem:[%s57] sm:$0xf]
          %v1995 = vld [vmem:[%s57 + $0x4] sm:$0xf]
          %v1996 = vld [vmem:[%s59] sm:$0x1]
          %v1998 = vlaneseq
          %v1999 = vshrl.u32 %v1998, 7
          %v2000 = vsub.s32 0, %v1999
          %v2001 = vrot.slane %v1996, %v2000
          %v2005 = vunpack.c.l.b16 %v1994
          %v2006 = vunpack.c.l.b16 %v1995
          %v2007 = vpack.c.b16 %v2006, %v2005
          %v2010 = vsel %vm1908, %v1992, 0
          %v2013 = vsel %vm1908, %v1993, 0
          %2015 = vmatprep.subr.bf16.mxu0 0
          %2016 = vmatpush1.bf16.msra.mxu0 0
          %2017 = vmatprep.subr.bf16.mxu0 0
          %2018 = vmatpush1.bf16.msra.mxu0 0
          %2019 = vmatprep.subr.bf16.mxu0 0
          %2020 = vmatpush1.bf16.msra.mxu0 0
          %2021 = vmatprep.subr.bf16.mxu0 0
          %2022 = vmatpush1.bf16.msra.mxu0 0
          %2023 = vmatprep.subr.bf16.mxu0 0
          %2024 = vmatpush1.bf16.msra.mxu0 0
          %2025 = vmatprep.subr.bf16.mxu0 0
          %2026 = vmatpush1.bf16.msra.mxu0 0
          %2027 = vmatprep.subr.bf16.mxu0 0
          %2028 = vmatpush1.bf16.msra.mxu0 0
          %2029 = vmatprep.subr.bf16.mxu0 0
          %2030 = vmatpush1.bf16.msra.mxu0 %v2007
          %2031 = vmatprep.subr.bf16.mxu0 0
          %2032 = vmatpush2.bf16.msra.mxu0 0
          %2033 = vmatprep.subr.bf16.mxu0 0
          %2034 = vmatpush2.bf16.msra.mxu0 0
          %2035 = vmatprep.subr.bf16.mxu0 0
          %2036 = vmatpush2.bf16.msra.mxu0 0
          %2037 = vmatprep.subr.bf16.mxu0 0
          %2038 = vmatpush2.bf16.msra.mxu0 0
          %2039 = vmatprep.subr.bf16.mxu0 0
          %2040 = vmatpush2.bf16.msra.mxu0 0
          %2041 = vmatprep.subr.bf16.mxu0 0
          %2042 = vmatpush2.bf16.msra.mxu0 0
          %2043 = vmatprep.subr.bf16.mxu0 0
          %2044 = vmatpush2.bf16.msra.mxu0 0
          %2045 = vmatprep.subr.bf16.mxu0 0
          %2046 = vmatpush2.bf16.msra.mxu0 0
          %2047 = vmatprep.mubr.bf16.mxu0 0
          %2048 = vmatmul.mubr.bf16.gmra.mxu0 %v2010
          %v2049 = vpop.f32.mrf.mxu0
          %v2050 = vadd.f32 %v2001, %v2049
          %v2051 = vpop.f32.mrf.mxu0
          %v2052 = vpop.f32.mrf.mxu0
          %v2053 = vadd.f32 %v2001, %v2052
          %v2054 = vpop.f32.mrf.mxu0
          %2055 = vmatprep.mubr.bf16.mxu0 0
          %2056 = vmatmul.mubr.bf16.gmra.mxu0 %v2013
          %v2057 = vpop.f32.mrf.mxu0
          %v2058 = vadd.f32 %v2001, %v2057
          %v2059 = vpop.f32.mrf.mxu0
          %v2060 = vpop.f32.mrf.mxu0
          %v2061 = vadd.f32 %v2001, %v2060
          %v2062 = vpop.f32.mrf.mxu0
          %2063 = vdwg.mxu0
          %v2064 = vmul.f32 %v1814, %v1873
          %v2065 = vmul.f32 %v1817, %v1876
          %v2066 = vmul.f32 %v1822, %v1881
          %v2067 = vmul.f32 %v1825, %v1884
          %v2068 = vld [vmem:[%s13] sm:$0xff]
          %v2069 = vld [vmem:[%s13 + $0x8] sm:$0xff]
          %v2070 = vld [vmem:[%s13 + $0x10] sm:$0xff]
          %v2071 = vld [vmem:[%s13 + $0x18] sm:$0xff]
          %vm2072 = vcmask 261120
          %v2074 = vsel %vm2072, %v2064, 0
          %v2077 = vsel %vm2072, %v2065, 0
          %v2080 = vsel %vm2072, %v2066, 0
          %v2083 = vsel %vm2072, %v2067, 0
          %2085 = vmatprep.subr.mxu0 0.0
          %2086 = vmatpush1.msra.mxu0 0.0
          %2087 = vmatprep.subr.mxu0 0.0
          %2088 = vmatpush1.msra.mxu0 0.0
          %2089 = vmatprep.subr.mxu0 0.0
          %2090 = vmatpush1.msra.mxu0 0.0
          %2091 = vmatprep.subr.mxu0 0.0
          %2092 = vmatpush1.msra.mxu0 0.0
          %2093 = vmatprep.subr.mxu0 0.0
          %2094 = vmatpush1.msra.mxu0 0.0
          %2095 = vmatprep.subr.mxu0 0.0
          %2096 = vmatpush1.msra.mxu0 0.0
          %2097 = vmatprep.subr.mxu0 0.0
          %2098 = vmatpush1.msra.mxu0 0.0
          %2099 = vmatprep.subr.mxu0 0.0
          %2100 = vmatpush1.msra.mxu0 0.0
          %2101 = vmatprep.subr.mxu0 0.0
          %2102 = vmatpush1.msra.mxu0 0.0
          %2103 = vmatprep.subr.mxu0 0.0
          %2104 = vmatpush1.msra.mxu0 0.0
          %2105 = vmatprep.subr.mxu0 0.0
          %2106 = vmatpush1.msra.mxu0 0.0
          %2107 = vmatprep.subr.mxu0 0.0
          %2108 = vmatpush1.msra.mxu0 0.0
          %2109 = vmatprep.subr.mxu0 0.0
          %2110 = vmatpush1.msra.mxu0 %v2071
          %2111 = vmatprep.subr.mxu0 0.0
          %2112 = vmatpush1.msra.mxu0 %v2070
          %2113 = vmatprep.subr.mxu0 0.0
          %2114 = vmatpush1.msra.mxu0 %v2069
          %2115 = vmatprep.subr.mxu0 0.0
          %2116 = vmatpush1.msra.mxu0 %v2068
          %2117 = vmatprep.subr.mxu0 0.0
          %2118 = vmatpush2.msra.mxu0 0.0
          %2119 = vmatprep.subr.mxu0 0.0
          %2120 = vmatpush2.msra.mxu0 0.0
          %2121 = vmatprep.subr.mxu0 0.0
          %2122 = vmatpush2.msra.mxu0 0.0
          %2123 = vmatprep.subr.mxu0 0.0
          %2124 = vmatpush2.msra.mxu0 0.0
          %2125 = vmatprep.subr.mxu0 0.0
          %2126 = vmatpush2.msra.mxu0 0.0
          %2127 = vmatprep.subr.mxu0 0.0
          %2128 = vmatpush2.msra.mxu0 0.0
          %2129 = vmatprep.subr.mxu0 0.0
          %2130 = vmatpush2.msra.mxu0 0.0
          %2131 = vmatprep.subr.mxu0 0.0
          %2132 = vmatpush2.msra.mxu0 0.0
          %2133 = vmatprep.subr.mxu0 0.0
          %2134 = vmatpush2.msra.mxu0 0.0
          %2135 = vmatprep.subr.mxu0 0.0
          %2136 = vmatpush2.msra.mxu0 0.0
          %2137 = vmatprep.subr.mxu0 0.0
          %2138 = vmatpush2.msra.mxu0 0.0
          %2139 = vmatprep.subr.mxu0 0.0
          %2140 = vmatpush2.msra.mxu0 0.0
          %2141 = vmatprep.subr.mxu0 0.0
          %2142 = vmatpush2.msra.mxu0 0.0
          %2143 = vmatprep.subr.mxu0 0.0
          %2144 = vmatpush2.msra.mxu0 0.0
          %2145 = vmatprep.subr.mxu0 0.0
          %2146 = vmatpush2.msra.mxu0 0.0
          %2147 = vmatprep.subr.mxu0 0.0
          %2148 = vmatpush2.msra.mxu0 0.0
          %2149 = vmatprep.mubr.f32.mxu0 0.0
          %2150 = vmatmul.mubr.f32.gmra.mxu0 %v2074
          %v2151 = vpop.f32.mrf.mxu0
          %v2152 = vadd.f32 0.0, %v2151
          %v2153 = vpop.f32.mrf.mxu0
          %2154 = vmatprep.mubr.f32.mxu0 0.0
          %2155 = vmatmul.mubr.f32.gmra.mxu0 %v2077
          %v2156 = vpop.f32.mrf.mxu0
          %v2157 = vadd.f32 0.0, %v2156
          %v2158 = vpop.f32.mrf.mxu0
          %2159 = vmatprep.mubr.f32.mxu0 0.0
          %2160 = vmatmul.mubr.f32.gmra.mxu0 %v2080
          %v2161 = vpop.f32.mrf.mxu0
          %v2162 = vadd.f32 0.0, %v2161
          %v2163 = vpop.f32.mrf.mxu0
          %2164 = vmatprep.mubr.f32.mxu0 0.0
          %2165 = vmatmul.mubr.f32.gmra.mxu0 %v2083
          %v2166 = vpop.f32.mrf.mxu0
          %v2167 = vadd.f32 0.0, %v2166
          %v2168 = vpop.f32.mrf.mxu0
          %2169 = vdwg.mxu0
          %v2170 = vmul.f32 %v2152, 0.35355338
          %v2171 = vmul.f32 %v2157, 0.35355338
          %v2172 = vmul.f32 %v2162, 0.35355338
          %v2173 = vmul.f32 %v2167, 0.35355338
          %v2174 = vld [vmem:[%s1357] sm:$0xff]
          %v2175 = vld [vmem:[%s1357 + $0x8] sm:$0xff]
          %v2176 = vld [vmem:[%s1357 + $0x10] sm:$0xff]
          %v2177 = vld [vmem:[%s1357 + $0x18] sm:$0xff]
          %2179 = vset.pattern.permute.xlu0 0
          %2180 = vperm.xlu0 %2179, %v2174
          %v2181 = vpop.permute.xlu0 %2180
          %2184 = vset.pattern.permute.xlu0 0
          %2185 = vperm.xlu0 %2184, %v2175
          %v2186 = vpop.permute.xlu0 %2185
          %2189 = vset.pattern.permute.xlu0 0
          %2190 = vperm.xlu0 %2189, %v2176
          %v2191 = vpop.permute.xlu0 %2190
          %2194 = vset.pattern.permute.xlu0 0
          %2195 = vperm.xlu0 %2194, %v2177
          %v2196 = vpop.permute.xlu0 %2195
          %v2198 = vsub.f32 %v2170, %v2181
          %v2199 = vsub.f32 %v2171, %v2186
          %v2200 = vsub.f32 %v2172, %v2191
          %v2201 = vsub.f32 %v2173, %v2196
          %v2202 = vadd.f32 %v2198, %v2050
          %v2203 = vadd.f32 %v2199, %v2053
          %v2204 = vadd.f32 %v2200, %v2058
          %v2205 = vadd.f32 %v2201, %v2061
          %s2206 = scalar_lea.vmem [#allocation10], %s1422
          %vm2207 = vcmask 31744
          %2208 = vst.msk [vmem:[%s2206] sm:$0xff] %vm2207, %v2202
          %2209 = vst.msk [vmem:[%s2206 + $0x8] sm:$0xff] %vm2207, %v2203
          %2210 = vst.msk [vmem:[%s2206 + $0x10] sm:$0xff] %vm2207, %v2204
          %2211 = vst.msk [vmem:[%s2206 + $0x18] sm:$0xff] %vm2207, %v2205
          %v2212 = vsel %vm2207, %v2202, -inf
          %2213 = vmax.xlane.f32.xlu0 %v2212
          %v2214 = vpop.xlane.xlu0 %2213
          %v2215 = vsel %vm2207, %v2203, -inf
          %2216 = vmax.xlane.f32.xlu0 %v2215
          %v2217 = vpop.xlane.xlu0 %2216
          %v2218 = vsel %vm2207, %v2204, -inf
          %2219 = vmax.xlane.f32.xlu0 %v2218
          %v2220 = vpop.xlane.xlu0 %2219
          %v2221 = vsel %vm2207, %v2205, -inf
          %2222 = vmax.xlane.f32.xlu0 %v2221
          %v2223 = vpop.xlane.xlu0 %2222
          %v2224 = vsel %vm1408, %v2214, -1e+30
          %v2225 = vsel %vm1409, %v2217, -1e+30
          %v2226 = vsel %vm1410, %v2220, -1e+30
          %v2227 = vsel %vm1411, %v2223, -1e+30
          %v2228 = vld [vmem:[#allocation6] sm:$0x1]
          %v2229 = vsel %vm1768, %v2224, -inf
          %v2230 = vsel %vm1768, %v2225, -inf
          %v2231 = vsel %vm1768, %v2226, -inf
          %v2232 = vsel %vm1768, %v2227, -inf
          %v2233 = vmax.f32 %v2229, %v2230
          %v2234 = vmax.f32 %v2231, %v2232
          %v2235 = vmax.f32 %v2233, %v2234
          %v2236 = vrot.slane %v2235, 4
          %v2237 = vmax.f32 %v2235, %v2236
          %v2238 = vrot.slane %v2237, 2
          %v2239 = vmax.f32 %v2237, %v2238
          %v2240 = vrot.slane %v2239, 1
          %v2241 = vmax.f32 %v2239, %v2240
          %v2242 = vmax.f32 %v2228, %v2241
          %vm2243 = vcmask 57344
          %2244 = vst.msk [vmem:[#allocation6] sm:$0x1] %vm2243, %v2242
        $region196: #{_lambda_.1} parent=187 // pred_fallthru
          _
        %p2245 = scmp.eq.s32.totalorder %s104, 1
        // Predicated region
        $region197: #{_lambda_.1} parent=187 // pred_check
          %p2246 = pneg %p2245
        $region198: #{_lambda_.1} parent=187 // pred_check_branch
          %2248 = sbr.rel (%p2246) target = $region200
        $region199: #{_lambda_.1} parent=187 // pred_region
          %s2249 = scalar_lea.vmem [#allocation10], %s1422
          %v2250 = vld [vmem:[%s2249] sm:$0xff]
          %v2251 = vld [vmem:[%s2249 + $0x8] sm:$0xff]
          %v2252 = vld [vmem:[%s2249 + $0x10] sm:$0xff]
          %v2253 = vld [vmem:[%s2249 + $0x18] sm:$0xff]
          %v2254 = vld [vmem:[#allocation6] sm:$0x1]
          %v2256 = vlaneseq
          %v2257 = vshrl.u32 %v2256, 7
          %v2258 = vsub.s32 0, %v2257
          %v2259 = vrot.slane %v2254, %v2258
          %v2261 = vmul.f32 %v1416, %v2259
          %v2262 = vmul.f32 %v1417, %v2259
          %v2263 = vmul.f32 %v1418, %v2259
          %v2264 = vmul.f32 %v1419, %v2259
          %vm2265 = vcmask 64512
          %v2266 = vsel %vm2265, %v2261, 0.0
          %2267 = vadd.xlane.f32.xlu0 %v2266
          %v2268 = vpop.xlane.xlu0 %2267
          %v2269 = vsel %vm2265, %v2262, 0.0
          %2270 = vadd.xlane.f32.xlu0 %v2269
          %v2271 = vpop.xlane.xlu0 %2270
          %v2272 = vsel %vm2265, %v2263, 0.0
          %2273 = vadd.xlane.f32.xlu0 %v2272
          %v2274 = vpop.xlane.xlu0 %2273
          %v2275 = vsel %vm2265, %v2264, 0.0
          %2276 = vadd.xlane.f32.xlu0 %v2275
          %v2277 = vpop.xlane.xlu0 %2276
          %v2278 = vsub.f32 %v2250, %v2268
          %v2279 = vsub.f32 %v2251, %v2271
          %v2280 = vsub.f32 %v2252, %v2274
          %v2281 = vsub.f32 %v2253, %v2277
          %v2282 = vmul.f32 %v2278, 1.442695
          %v2283 = vpow.pop %v2282
          %v2284 = vmul.f32 %v2279, 1.442695
          %v2285 = vpow.pop %v2284
          %v2286 = vmul.f32 %v2280, 1.442695
          %v2287 = vpow.pop %v2286
          %v2288 = vmul.f32 %v2281, 1.442695
          %v2289 = vpow.pop %v2288
          %v2290 = vld [vmem:[#allocation7] sm:$0xff]
          %2291 = vxpose.xlu0.b32.start [1/16] %v1416, 128
          %2292 = vxpose.xlu0.b32.cont [2/16] %v1417, 128
          %2293 = vxpose.xlu0.b32.cont [3/16] %v1418, 128
          %2294 = vxpose.xlu0.b32.cont [4/16] %v1419, 128
          %2295 = vxpose.xlu0.b32.cont [5/16] 0.0, 128
          %2296 = vxpose.xlu0.b32.cont [6/16] 0.0, 128
          %2297 = vxpose.xlu0.b32.cont [7/16] 0.0, 128
          %2298 = vxpose.xlu0.b32.cont [8/16] 0.0, 128
          %2299 = vxpose.xlu0.b32.cont [9/16] 0.0, 128
          %2300 = vxpose.xlu0.b32.cont [10/16] 0.0, 128
          %2301 = vxpose.xlu0.b32.cont [11/16] 0.0, 128
          %2302 = vxpose.xlu0.b32.cont [12/16] 0.0, 128
          %2303 = vxpose.xlu0.b32.cont [13/16] 0.0, 128
          %2304 = vxpose.xlu0.b32.cont [14/16] 0.0, 128
          %2305 = vxpose.xlu0.b32.cont [15/16] 0.0, 128
          %2306 = vxpose.xlu0.b32.end [16/16] 0.0, 128
          %v2307 = vpop.trf.xlu0
          %v2308 = vpop.trf.xlu0
          %v2309 = vpop.trf.xlu0
          %v2310 = vpop.trf.xlu0
          %v2311 = vpop.trf.xlu0
          %v2312 = vpop.trf.xlu0
          %v2313 = vpop.trf.xlu0
          %v2314 = vpop.trf.xlu0
          %v2315 = vpop.trf.xlu0
          %v2316 = vpop.trf.xlu0
          %v2317 = vpop.trf.xlu0
          %v2318 = vpop.trf.xlu0
          %v2319 = vpop.trf.xlu0
          %v2320 = vpop.trf.xlu0
          %v2321 = vpop.trf.xlu0
          %v2322 = vpop.trf.xlu0
          %vm2323 = vcmask 261120
          %v2325 = vsel %vm2323, %v2307, 0
          %2327 = vmatprep.subr.mxu0 0.0
          %2328 = vmatpush1.msra.mxu0 0.0
          %2329 = vmatprep.subr.mxu0 0.0
          %2330 = vmatpush1.msra.mxu0 0.0
          %2331 = vmatprep.subr.mxu0 0.0
          %2332 = vmatpush1.msra.mxu0 0.0
          %2333 = vmatprep.subr.mxu0 0.0
          %2334 = vmatpush1.msra.mxu0 0.0
          %2335 = vmatprep.subr.mxu0 0.0
          %2336 = vmatpush1.msra.mxu0 0.0
          %2337 = vmatprep.subr.mxu0 0.0
          %2338 = vmatpush1.msra.mxu0 0.0
          %2339 = vmatprep.subr.mxu0 0.0
          %2340 = vmatpush1.msra.mxu0 0.0
          %2341 = vmatprep.subr.mxu0 0.0
          %2342 = vmatpush1.msra.mxu0 0.0
          %2343 = vmatprep.subr.mxu0 0.0
          %2344 = vmatpush1.msra.mxu0 0.0
          %2345 = vmatprep.subr.mxu0 0.0
          %2346 = vmatpush1.msra.mxu0 0.0
          %2347 = vmatprep.subr.mxu0 0.0
          %2348 = vmatpush1.msra.mxu0 0.0
          %2349 = vmatprep.subr.mxu0 0.0
          %2350 = vmatpush1.msra.mxu0 0.0
          %2351 = vmatprep.subr.mxu0 0.0
          %2352 = vmatpush1.msra.mxu0 %v2289
          %2353 = vmatprep.subr.mxu0 0.0
          %2354 = vmatpush1.msra.mxu0 %v2287
          %2355 = vmatprep.subr.mxu0 0.0
          %2356 = vmatpush1.msra.mxu0 %v2285
          %2357 = vmatprep.subr.mxu0 0.0
          %2358 = vmatpush1.msra.mxu0 %v2283
          %2359 = vmatprep.subr.mxu0 0.0
          %2360 = vmatpush2.msra.mxu0 0.0
          %2361 = vmatprep.subr.mxu0 0.0
          %2362 = vmatpush2.msra.mxu0 0.0
          %2363 = vmatprep.subr.mxu0 0.0
          %2364 = vmatpush2.msra.mxu0 0.0
          %2365 = vmatprep.subr.mxu0 0.0
          %2366 = vmatpush2.msra.mxu0 0.0
          %2367 = vmatprep.subr.mxu0 0.0
          %2368 = vmatpush2.msra.mxu0 0.0
          %2369 = vmatprep.subr.mxu0 0.0
          %2370 = vmatpush2.msra.mxu0 0.0
          %2371 = vmatprep.subr.mxu0 0.0
          %2372 = vmatpush2.msra.mxu0 0.0
          %2373 = vmatprep.subr.mxu0 0.0
          %2374 = vmatpush2.msra.mxu0 0.0
          %2375 = vmatprep.subr.mxu0 0.0
          %2376 = vmatpush2.msra.mxu0 0.0
          %2377 = vmatprep.subr.mxu0 0.0
          %2378 = vmatpush2.msra.mxu0 0.0
          %2379 = vmatprep.subr.mxu0 0.0
          %2380 = vmatpush2.msra.mxu0 0.0
          %2381 = vmatprep.subr.mxu0 0.0
          %2382 = vmatpush2.msra.mxu0 0.0
          %2383 = vmatprep.subr.mxu0 0.0
          %2384 = vmatpush2.msra.mxu0 0.0
          %2385 = vmatprep.subr.mxu0 0.0
          %2386 = vmatpush2.msra.mxu0 0.0
          %2387 = vmatprep.subr.mxu0 0.0
          %2388 = vmatpush2.msra.mxu0 0.0
          %2389 = vmatprep.subr.mxu0 0.0
          %2390 = vmatpush2.msra.mxu0 0.0
          %2391 = vmatprep.mubr.f32.mxu0 0.0
          %2392 = vmatmul.mubr.f32.gmra.mxu0 %v2325
          %v2393 = vpop.f32.mrf.mxu0
          %v2394 = vadd.f32 0.0, %v2393
          %v2395 = vpop.f32.mrf.mxu0
          %2396 = vdwg.mxu0
          %v2397 = vadd.f32 %v2290, %v2394
          %vm2398 = vcmask 31744
          %2399 = vst.msk [vmem:[#allocation7] sm:$0xff] %vm2398, %v2397
          %v2400 = vld [vmem:[#allocation4] sm:$0xf]
          %v2402 = vsel %vm2265, %v1390, 0
          %v2405 = vsel %vm2265, %v1391, 0
          %vm2407 = vcmask 1043456
          %v2409 = vsel %vm2407, %v2400, 0
          %2411 = vmatprep.subr.bf16.mxu0 0
          %2412 = vmatpush1.bf16.msra.mxu0 0
          %2413 = vmatprep.subr.bf16.mxu0 0
          %2414 = vmatpush1.bf16.msra.mxu0 0
          %2415 = vmatprep.subr.bf16.mxu0 0
          %2416 = vmatpush1.bf16.msra.mxu0 0
          %2417 = vmatprep.subr.bf16.mxu0 0
          %2418 = vmatpush1.bf16.msra.mxu0 0
          %2419 = vmatprep.subr.bf16.mxu0 0
          %2420 = vmatpush1.bf16.msra.mxu0 0
          %2421 = vmatprep.subr.bf16.mxu0 0
          %2422 = vmatpush1.bf16.msra.mxu0 0
          %2423 = vmatprep.subr.bf16.mxu0 0
          %2424 = vmatpush1.bf16.msra.mxu0 0
          %2425 = vmatprep.subr.bf16.mxu0 0
          %2426 = vmatpush1.bf16.msra.mxu0 %v2409
          %2427 = vmatprep.subr.bf16.mxu0 0
          %2428 = vmatpush2.bf16.msra.mxu0 0
          %2429 = vmatprep.subr.bf16.mxu0 0
          %2430 = vmatpush2.bf16.msra.mxu0 0
          %2431 = vmatprep.subr.bf16.mxu0 0
          %2432 = vmatpush2.bf16.msra.mxu0 0
          %2433 = vmatprep.subr.bf16.mxu0 0
          %2434 = vmatpush2.bf16.msra.mxu0 0
          %2435 = vmatprep.subr.bf16.mxu0 0
          %2436 = vmatpush2.bf16.msra.mxu0 0
          %2437 = vmatprep.subr.bf16.mxu0 0
          %2438 = vmatpush2.bf16.msra.mxu0 0
          %2439 = vmatprep.subr.bf16.mxu0 0
          %2440 = vmatpush2.bf16.msra.mxu0 0
          %2441 = vmatprep.subr.bf16.mxu0 0
          %2442 = vmatpush2.bf16.msra.mxu0 0
          %2443 = vmatprep.mubr.bf16.mxu0 0
          %2444 = vmatmul.mubr.bf16.gmra.mxu0 %v2402
          %v2445 = vpop.f32.mrf.mxu0
          %v2446 = vadd.f32 0.0, %v2445
          %v2447 = vpop.f32.mrf.mxu0
          %v2448 = vpop.f32.mrf.mxu0
          %v2449 = vadd.f32 0.0, %v2448
          %v2450 = vpop.f32.mrf.mxu0
          %2451 = vmatprep.mubr.bf16.mxu0 0
          %2452 = vmatmul.mubr.bf16.gmra.mxu0 %v2405
          %v2453 = vpop.f32.mrf.mxu0
          %v2454 = vadd.f32 0.0, %v2453
          %v2455 = vpop.f32.mrf.mxu0
          %v2456 = vpop.f32.mrf.mxu0
          %v2457 = vadd.f32 0.0, %v2456
          %v2458 = vpop.f32.mrf.mxu0
          %2459 = vdwg.mxu0
          %v2460 = vld [vmem:[#allocation5] sm:$0xf]
          %v2462 = vsel %vm2407, %v2460, 0
          %2464 = vmatprep.subr.bf16.mxu0 0
          %2465 = vmatpush1.bf16.msra.mxu0 0
          %2466 = vmatprep.subr.bf16.mxu0 0
          %2467 = vmatpush1.bf16.msra.mxu0 0
          %2468 = vmatprep.subr.bf16.mxu0 0
          %2469 = vmatpush1.bf16.msra.mxu0 0
          %2470 = vmatprep.subr.bf16.mxu0 0
          %2471 = vmatpush1.bf16.msra.mxu0 0
          %2472 = vmatprep.subr.bf16.mxu0 0
          %2473 = vmatpush1.bf16.msra.mxu0 0
          %2474 = vmatprep.subr.bf16.mxu0 0
          %2475 = vmatpush1.bf16.msra.mxu0 0
          %2476 = vmatprep.subr.bf16.mxu0 0
          %2477 = vmatpush1.bf16.msra.mxu0 0
          %2478 = vmatprep.subr.bf16.mxu0 0
          %2479 = vmatpush1.bf16.msra.mxu0 %v2462
          %2480 = vmatprep.subr.bf16.mxu0 0
          %2481 = vmatpush2.bf16.msra.mxu0 0
          %2482 = vmatprep.subr.bf16.mxu0 0
          %2483 = vmatpush2.bf16.msra.mxu0 0
          %2484 = vmatprep.subr.bf16.mxu0 0
          %2485 = vmatpush2.bf16.msra.mxu0 0
          %2486 = vmatprep.subr.bf16.mxu0 0
          %2487 = vmatpush2.bf16.msra.mxu0 0
          %2488 = vmatprep.subr.bf16.mxu0 0
          %2489 = vmatpush2.bf16.msra.mxu0 0
          %2490 = vmatprep.subr.bf16.mxu0 0
          %2491 = vmatpush2.bf16.msra.mxu0 0
          %2492 = vmatprep.subr.bf16.mxu0 0
          %2493 = vmatpush2.bf16.msra.mxu0 0
          %2494 = vmatprep.subr.bf16.mxu0 0
          %2495 = vmatpush2.bf16.msra.mxu0 0
          %2496 = vmatprep.mubr.bf16.mxu0 0
          %2497 = vmatmul.mubr.bf16.gmra.mxu0 %v2402
          %v2498 = vpop.f32.mrf.mxu0
          %v2499 = vadd.f32 0.0, %v2498
          %v2500 = vpop.f32.mrf.mxu0
          %v2501 = vpop.f32.mrf.mxu0
          %v2502 = vadd.f32 0.0, %v2501
          %v2503 = vpop.f32.mrf.mxu0
          %2504 = vmatprep.mubr.bf16.mxu0 0
          %2505 = vmatmul.mubr.bf16.gmra.mxu0 %v2405
          %v2506 = vpop.f32.mrf.mxu0
          %v2507 = vadd.f32 0.0, %v2506
          %v2508 = vpop.f32.mrf.mxu0
          %v2509 = vpop.f32.mrf.mxu0
          %v2510 = vadd.f32 0.0, %v2509
          %v2511 = vpop.f32.mrf.mxu0
          %2512 = vdwg.mxu0
          %v2513 = vld [vmem:[%s15] sm:$0xf]
          %v2515 = vsel %vm2398, %v2283, 0
          %v2518 = vsel %vm2398, %v2285, 0
          %v2521 = vsel %vm2398, %v2287, 0
          %v2524 = vsel %vm2398, %v2289, 0
          %v2527 = vsel %vm2407, %v2513, 0
          %2529 = vmatprep.subr.mxu0 0.0
          %2530 = vmatpush1.msra.mxu0 0.0
          %2531 = vmatprep.subr.mxu0 0.0
          %2532 = vmatpush1.msra.mxu0 0.0
          %2533 = vmatprep.subr.mxu0 0.0
          %2534 = vmatpush1.msra.mxu0 0.0
          %2535 = vmatprep.subr.mxu0 0.0
          %2536 = vmatpush1.msra.mxu0 0.0
          %2537 = vmatprep.subr.mxu0 0.0
          %2538 = vmatpush1.msra.mxu0 0.0
          %2539 = vmatprep.subr.mxu0 0.0
          %2540 = vmatpush1.msra.mxu0 0.0
          %2541 = vmatprep.subr.mxu0 0.0
          %2542 = vmatpush1.msra.mxu0 0.0
          %2543 = vmatprep.subr.mxu0 0.0
          %2544 = vmatpush1.msra.mxu0 0.0
          %2545 = vmatprep.subr.mxu0 0.0
          %2546 = vmatpush1.msra.mxu0 0.0
          %2547 = vmatprep.subr.mxu0 0.0
          %2548 = vmatpush1.msra.mxu0 0.0
          %2549 = vmatprep.subr.mxu0 0.0
          %2550 = vmatpush1.msra.mxu0 0.0
          %2551 = vmatprep.subr.mxu0 0.0
          %2552 = vmatpush1.msra.mxu0 0.0
          %2553 = vmatprep.subr.mxu0 0.0
          %2554 = vmatpush1.msra.mxu0 0.0
          %2555 = vmatprep.subr.mxu0 0.0
          %2556 = vmatpush1.msra.mxu0 0.0
          %2557 = vmatprep.subr.mxu0 0.0
          %2558 = vmatpush1.msra.mxu0 0.0
          %2559 = vmatprep.subr.mxu0 0.0
          %2560 = vmatpush1.msra.mxu0 %v2527
          %2561 = vmatprep.subr.mxu0 0.0
          %2562 = vmatpush2.msra.mxu0 0.0
          %2563 = vmatprep.subr.mxu0 0.0
          %2564 = vmatpush2.msra.mxu0 0.0
          %2565 = vmatprep.subr.mxu0 0.0
          %2566 = vmatpush2.msra.mxu0 0.0
          %2567 = vmatprep.subr.mxu0 0.0
          %2568 = vmatpush2.msra.mxu0 0.0
          %2569 = vmatprep.subr.mxu0 0.0
          %2570 = vmatpush2.msra.mxu0 0.0
          %2571 = vmatprep.subr.mxu0 0.0
          %2572 = vmatpush2.msra.mxu0 0.0
          %2573 = vmatprep.subr.mxu0 0.0
          %2574 = vmatpush2.msra.mxu0 0.0
          %2575 = vmatprep.subr.mxu0 0.0
          %2576 = vmatpush2.msra.mxu0 0.0
          %2577 = vmatprep.subr.mxu0 0.0
          %2578 = vmatpush2.msra.mxu0 0.0
          %2579 = vmatprep.subr.mxu0 0.0
          %2580 = vmatpush2.msra.mxu0 0.0
          %2581 = vmatprep.subr.mxu0 0.0
          %2582 = vmatpush2.msra.mxu0 0.0
          %2583 = vmatprep.subr.mxu0 0.0
          %2584 = vmatpush2.msra.mxu0 0.0
          %2585 = vmatprep.subr.mxu0 0.0
          %2586 = vmatpush2.msra.mxu0 0.0
          %2587 = vmatprep.subr.mxu0 0.0
          %2588 = vmatpush2.msra.mxu0 0.0
          %2589 = vmatprep.subr.mxu0 0.0
          %2590 = vmatpush2.msra.mxu0 0.0
          %2591 = vmatprep.subr.mxu0 0.0
          %2592 = vmatpush2.msra.mxu0 0.0
          %2593 = vmatprep.mubr.f32.mxu0 0.0
          %2594 = vmatmul.mubr.f32.gmra.mxu0 %v2515
          %v2595 = vpop.f32.mrf.mxu0
          %v2596 = vadd.f32 0.0, %v2595
          %v2597 = vpop.f32.mrf.mxu0
          %2598 = vmatprep.mubr.f32.mxu0 0.0
          %2599 = vmatmul.mubr.f32.gmra.mxu0 %v2518
          %v2600 = vpop.f32.mrf.mxu0
          %v2601 = vadd.f32 0.0, %v2600
          %v2602 = vpop.f32.mrf.mxu0
          %2603 = vmatprep.mubr.f32.mxu0 0.0
          %2604 = vmatmul.mubr.f32.gmra.mxu0 %v2521
          %v2605 = vpop.f32.mrf.mxu0
          %v2606 = vadd.f32 0.0, %v2605
          %v2607 = vpop.f32.mrf.mxu0
          %2608 = vmatprep.mubr.f32.mxu0 0.0
          %2609 = vmatmul.mubr.f32.gmra.mxu0 %v2524
          %v2610 = vpop.f32.mrf.mxu0
          %v2611 = vadd.f32 0.0, %v2610
          %v2612 = vpop.f32.mrf.mxu0
          %2613 = vdwg.mxu0
          %v2614 = vld [vmem:[%s17] sm:$0xf]
          %v2616 = vsel %vm2407, %v2614, 0
          %2618 = vmatprep.subr.mxu0 0.0
          %2619 = vmatpush1.msra.mxu0 0.0
          %2620 = vmatprep.subr.mxu0 0.0
          %2621 = vmatpush1.msra.mxu0 0.0
          %2622 = vmatprep.subr.mxu0 0.0
          %2623 = vmatpush1.msra.mxu0 0.0
          %2624 = vmatprep.subr.mxu0 0.0
          %2625 = vmatpush1.msra.mxu0 0.0
          %2626 = vmatprep.subr.mxu0 0.0
          %2627 = vmatpush1.msra.mxu0 0.0
          %2628 = vmatprep.subr.mxu0 0.0
          %2629 = vmatpush1.msra.mxu0 0.0
          %2630 = vmatprep.subr.mxu0 0.0
          %2631 = vmatpush1.msra.mxu0 0.0
          %2632 = vmatprep.subr.mxu0 0.0
          %2633 = vmatpush1.msra.mxu0 0.0
          %2634 = vmatprep.subr.mxu0 0.0
          %2635 = vmatpush1.msra.mxu0 0.0
          %2636 = vmatprep.subr.mxu0 0.0
          %2637 = vmatpush1.msra.mxu0 0.0
          %2638 = vmatprep.subr.mxu0 0.0
          %2639 = vmatpush1.msra.mxu0 0.0
          %2640 = vmatprep.subr.mxu0 0.0
          %2641 = vmatpush1.msra.mxu0 0.0
          %2642 = vmatprep.subr.mxu0 0.0
          %2643 = vmatpush1.msra.mxu0 0.0
          %2644 = vmatprep.subr.mxu0 0.0
          %2645 = vmatpush1.msra.mxu0 0.0
          %2646 = vmatprep.subr.mxu0 0.0
          %2647 = vmatpush1.msra.mxu0 0.0
          %2648 = vmatprep.subr.mxu0 0.0
          %2649 = vmatpush1.msra.mxu0 %v2616
          %2650 = vmatprep.subr.mxu0 0.0
          %2651 = vmatpush2.msra.mxu0 0.0
          %2652 = vmatprep.subr.mxu0 0.0
          %2653 = vmatpush2.msra.mxu0 0.0
          %2654 = vmatprep.subr.mxu0 0.0
          %2655 = vmatpush2.msra.mxu0 0.0
          %2656 = vmatprep.subr.mxu0 0.0
          %2657 = vmatpush2.msra.mxu0 0.0
          %2658 = vmatprep.subr.mxu0 0.0
          %2659 = vmatpush2.msra.mxu0 0.0
          %2660 = vmatprep.subr.mxu0 0.0
          %2661 = vmatpush2.msra.mxu0 0.0
          %2662 = vmatprep.subr.mxu0 0.0
          %2663 = vmatpush2.msra.mxu0 0.0
          %2664 = vmatprep.subr.mxu0 0.0
          %2665 = vmatpush2.msra.mxu0 0.0
          %2666 = vmatprep.subr.mxu0 0.0
          %2667 = vmatpush2.msra.mxu0 0.0
          %2668 = vmatprep.subr.mxu0 0.0
          %2669 = vmatpush2.msra.mxu0 0.0
          %2670 = vmatprep.subr.mxu0 0.0
          %2671 = vmatpush2.msra.mxu0 0.0
          %2672 = vmatprep.subr.mxu0 0.0
          %2673 = vmatpush2.msra.mxu0 0.0
          %2674 = vmatprep.subr.mxu0 0.0
          %2675 = vmatpush2.msra.mxu0 0.0
          %2676 = vmatprep.subr.mxu0 0.0
          %2677 = vmatpush2.msra.mxu0 0.0
          %2678 = vmatprep.subr.mxu0 0.0
          %2679 = vmatpush2.msra.mxu0 0.0
          %2680 = vmatprep.subr.mxu0 0.0
          %2681 = vmatpush2.msra.mxu0 0.0
          %2682 = vmatprep.mubr.f32.mxu0 0.0
          %2683 = vmatmul.mubr.f32.gmra.mxu0 %v2515
          %v2684 = vpop.f32.mrf.mxu0
          %v2685 = vadd.f32 0.0, %v2684
          %v2686 = vpop.f32.mrf.mxu0
          %2687 = vmatprep.mubr.f32.mxu0 0.0
          %2688 = vmatmul.mubr.f32.gmra.mxu0 %v2518
          %v2689 = vpop.f32.mrf.mxu0
          %v2690 = vadd.f32 0.0, %v2689
          %v2691 = vpop.f32.mrf.mxu0
          %2692 = vmatprep.mubr.f32.mxu0 0.0
          %2693 = vmatmul.mubr.f32.gmra.mxu0 %v2521
          %v2694 = vpop.f32.mrf.mxu0
          %v2695 = vadd.f32 0.0, %v2694
          %v2696 = vpop.f32.mrf.mxu0
          %2697 = vmatprep.mubr.f32.mxu0 0.0
          %2698 = vmatmul.mubr.f32.gmra.mxu0 %v2524
          %v2699 = vpop.f32.mrf.mxu0
          %v2700 = vadd.f32 0.0, %v2699
          %v2701 = vpop.f32.mrf.mxu0
          %2702 = vdwg.mxu0
          %v2703 = vld [vmem:[#allocation8] sm:$0xff]
          %v2704 = vmul.f32 %v2596, %v2446
          %v2705 = vmul.f32 %v2601, %v2449
          %v2706 = vmul.f32 %v2606, %v2454
          %v2707 = vmul.f32 %v2611, %v2457
          %v2708 = vpack.c.bf16 %v2705, %v2704
          %v2709 = vpack.c.bf16 %v2707, %v2706
          %2710 = vxpose.xlu0.c.b16.start [1/8] %v1420, 128
          %2711 = vxpose.xlu0.c.b16.cont [2/8] %v1421, 128
          %2712 = vxpose.xlu0.c.b16.cont [3/8] 0, 128
          %2713 = vxpose.xlu0.c.b16.cont [4/8] 0, 128
          %2714 = vxpose.xlu0.c.b16.cont [5/8] 0, 128
          %2715 = vxpose.xlu0.c.b16.cont [6/8] 0, 128
          %2716 = vxpose.xlu0.c.b16.cont [7/8] 0, 128
          %2717 = vxpose.xlu0.c.b16.end [8/8] 0, 128
          %v2718 = vpop.trf.xlu0
          %v2719 = vpop.trf.xlu0
          %v2720 = vpop.trf.xlu0
          %v2721 = vpop.trf.xlu0
          %v2722 = vpop.trf.xlu0
          %v2723 = vpop.trf.xlu0
          %v2724 = vpop.trf.xlu0
          %v2725 = vpop.trf.xlu0
          %v2727 = vsel %vm2323, %v2718, 0
          %2729 = vmatprep.subr.bf16.mxu0 0
          %2730 = vmatpush1.bf16.msra.mxu0 0
          %2731 = vmatprep.subr.bf16.mxu0 0
          %2732 = vmatpush1.bf16.msra.mxu0 0
          %2733 = vmatprep.subr.bf16.mxu0 0
          %2734 = vmatpush1.bf16.msra.mxu0 0
          %2735 = vmatprep.subr.bf16.mxu0 0
          %2736 = vmatpush1.bf16.msra.mxu0 0
          %2737 = vmatprep.subr.bf16.mxu0 0
          %2738 = vmatpush1.bf16.msra.mxu0 0
          %2739 = vmatprep.subr.bf16.mxu0 0
          %2740 = vmatpush1.bf16.msra.mxu0 0
          %2741 = vmatprep.subr.bf16.mxu0 0
          %2742 = vmatpush1.bf16.msra.mxu0 %v2709
          %2743 = vmatprep.subr.bf16.mxu0 0
          %2744 = vmatpush1.bf16.msra.mxu0 %v2708
          %2745 = vmatprep.subr.bf16.mxu0 0
          %2746 = vmatpush2.bf16.msra.mxu0 0
          %2747 = vmatprep.subr.bf16.mxu0 0
          %2748 = vmatpush2.bf16.msra.mxu0 0
          %2749 = vmatprep.subr.bf16.mxu0 0
          %2750 = vmatpush2.bf16.msra.mxu0 0
          %2751 = vmatprep.subr.bf16.mxu0 0
          %2752 = vmatpush2.bf16.msra.mxu0 0
          %2753 = vmatprep.subr.bf16.mxu0 0
          %2754 = vmatpush2.bf16.msra.mxu0 0
          %2755 = vmatprep.subr.bf16.mxu0 0
          %2756 = vmatpush2.bf16.msra.mxu0 0
          %2757 = vmatprep.subr.bf16.mxu0 0
          %2758 = vmatpush2.bf16.msra.mxu0 0
          %2759 = vmatprep.subr.bf16.mxu0 0
          %2760 = vmatpush2.bf16.msra.mxu0 0
          %2761 = vmatprep.mubr.bf16.mxu0 0
          %2762 = vmatmul.mubr.bf16.gmra.mxu0 %v2727
          %v2763 = vpop.f32.mrf.mxu0
          %v2764 = vadd.f32 0.0, %v2763
          %v2765 = vpop.f32.mrf.mxu0
          %v2766 = vpop.f32.mrf.mxu0
          %v2767 = vpop.f32.mrf.mxu0
          %2768 = vdwg.mxu0
          %v2769 = vadd.f32 %v2703, %v2764
          %2770 = vst.msk [vmem:[#allocation8] sm:$0xff] %vm2323, %v2769
          %v2771 = vld [vmem:[#allocation9] sm:$0xff]
          %v2772 = vmul.f32 %v2685, %v2499
          %v2773 = vmul.f32 %v2690, %v2502
          %v2774 = vmul.f32 %v2695, %v2507
          %v2775 = vmul.f32 %v2700, %v2510
          %v2776 = vpack.c.bf16 %v2773, %v2772
          %v2777 = vpack.c.bf16 %v2775, %v2774
          %2778 = vmatprep.subr.bf16.mxu0 0
          %2779 = vmatpush1.bf16.msra.mxu0 0
          %2780 = vmatprep.subr.bf16.mxu0 0
          %2781 = vmatpush1.bf16.msra.mxu0 0
          %2782 = vmatprep.subr.bf16.mxu0 0
          %2783 = vmatpush1.bf16.msra.mxu0 0
          %2784 = vmatprep.subr.bf16.mxu0 0
          %2785 = vmatpush1.bf16.msra.mxu0 0
          %2786 = vmatprep.subr.bf16.mxu0 0
          %2787 = vmatpush1.bf16.msra.mxu0 0
          %2788 = vmatprep.subr.bf16.mxu0 0
          %2789 = vmatpush1.bf16.msra.mxu0 0
          %2790 = vmatprep.subr.bf16.mxu0 0
          %2791 = vmatpush1.bf16.msra.mxu0 %v2777
          %2792 = vmatprep.subr.bf16.mxu0 0
          %2793 = vmatpush1.bf16.msra.mxu0 %v2776
          %2794 = vmatprep.subr.bf16.mxu0 0
          %2795 = vmatpush2.bf16.msra.mxu0 0
          %2796 = vmatprep.subr.bf16.mxu0 0
          %2797 = vmatpush2.bf16.msra.mxu0 0
          %2798 = vmatprep.subr.bf16.mxu0 0
          %2799 = vmatpush2.bf16.msra.mxu0 0
          %2800 = vmatprep.subr.bf16.mxu0 0
          %2801 = vmatpush2.bf16.msra.mxu0 0
          %2802 = vmatprep.subr.bf16.mxu0 0
          %2803 = vmatpush2.bf16.msra.mxu0 0
          %2804 = vmatprep.subr.bf16.mxu0 0
          %2805 = vmatpush2.bf16.msra.mxu0 0
          %2806 = vmatprep.subr.bf16.mxu0 0
          %2807 = vmatpush2.bf16.msra.mxu0 0
          %2808 = vmatprep.subr.bf16.mxu0 0
          %2809 = vmatpush2.bf16.msra.mxu0 0
          %2810 = vmatprep.mubr.bf16.mxu0 0
          %2811 = vmatmul.mubr.bf16.gmra.mxu0 %v2727
          %v2812 = vpop.f32.mrf.mxu0
          %v2813 = vadd.f32 0.0, %v2812
          %v2814 = vpop.f32.mrf.mxu0
          %v2815 = vpop.f32.mrf.mxu0
          %v2816 = vpop.f32.mrf.mxu0
          %2817 = vdwg.mxu0
          %v2818 = vadd.f32 %v2771, %v2813
          %vm2819 = vcmask 785408
          %2820 = vst.msk [vmem:[#allocation9] sm:$0xff] %vm2819, %v2818
        $region200: #{_lambda_.1} parent=187 // pred_fallthru
          _
        %p2821 = scmp.eq.s32.totalorder %s105, 1
        %p2822 = pnand %p2245, %p2821
        %p2823 = pneg %p2822
        // Predicated region
        $region201: #{_lambda_.1} parent=187 // pred_check
          _
        $region202: #{_lambda_.1} parent=187 // pred_check_branch
          %2825 = sbr.rel (%p2822) target = $region204
        $region203: #{_lambda_.1} parent=187 // pred_region
          %v2826 = vld [vmem:[%s9] sm:$0xff]
          %v2827 = vld [vmem:[%s11] sm:$0xff]
          %v2828 = vld [vmem:[#allocation7] sm:$0xff]
          %vm2829 = vcmp.gt.f32.partialorder %v2828, 0.0
          %v2830 = vsel %vm2829, %v2828, 1.0
          %v2831 = vrcp.pop %v2830
          %v2832 = vld [vmem:[#allocation8] sm:$0xff]
          %v2833 = vld [vmem:[%s15] sm:$0xf]
          %vm2834 = vcmask 31744
          %v2836 = vsel %vm2834, %v2831, 0
          %vm2838 = vcmask 1043456
          %v2840 = vsel %vm2838, %v2833, 0
          %2842 = vmatprep.subr.mxu0 0.0
          %2843 = vmatpush1.msra.mxu0 0.0
          %2844 = vmatprep.subr.mxu0 0.0
          %2845 = vmatpush1.msra.mxu0 0.0
          %2846 = vmatprep.subr.mxu0 0.0
          %2847 = vmatpush1.msra.mxu0 0.0
          %2848 = vmatprep.subr.mxu0 0.0
          %2849 = vmatpush1.msra.mxu0 0.0
          %2850 = vmatprep.subr.mxu0 0.0
          %2851 = vmatpush1.msra.mxu0 0.0
          %2852 = vmatprep.subr.mxu0 0.0
          %2853 = vmatpush1.msra.mxu0 0.0
          %2854 = vmatprep.subr.mxu0 0.0
          %2855 = vmatpush1.msra.mxu0 0.0
          %2856 = vmatprep.subr.mxu0 0.0
          %2857 = vmatpush1.msra.mxu0 0.0
          %2858 = vmatprep.subr.mxu0 0.0
          %2859 = vmatpush1.msra.mxu0 0.0
          %2860 = vmatprep.subr.mxu0 0.0
          %2861 = vmatpush1.msra.mxu0 0.0
          %2862 = vmatprep.subr.mxu0 0.0
          %2863 = vmatpush1.msra.mxu0 0.0
          %2864 = vmatprep.subr.mxu0 0.0
          %2865 = vmatpush1.msra.mxu0 0.0
          %2866 = vmatprep.subr.mxu0 0.0
          %2867 = vmatpush1.msra.mxu0 0.0
          %2868 = vmatprep.subr.mxu0 0.0
          %2869 = vmatpush1.msra.mxu0 0.0
          %2870 = vmatprep.subr.mxu0 0.0
          %2871 = vmatpush1.msra.mxu0 0.0
          %2872 = vmatprep.subr.mxu0 0.0
          %2873 = vmatpush1.msra.mxu0 %v2840
          %2874 = vmatprep.subr.mxu0 0.0
          %2875 = vmatpush2.msra.mxu0 0.0
          %2876 = vmatprep.subr.mxu0 0.0
          %2877 = vmatpush2.msra.mxu0 0.0
          %2878 = vmatprep.subr.mxu0 0.0
          %2879 = vmatpush2.msra.mxu0 0.0
          %2880 = vmatprep.subr.mxu0 0.0
          %2881 = vmatpush2.msra.mxu0 0.0
          %2882 = vmatprep.subr.mxu0 0.0
          %2883 = vmatpush2.msra.mxu0 0.0
          %2884 = vmatprep.subr.mxu0 0.0
          %2885 = vmatpush2.msra.mxu0 0.0
          %2886 = vmatprep.subr.mxu0 0.0
          %2887 = vmatpush2.msra.mxu0 0.0
          %2888 = vmatprep.subr.mxu0 0.0
          %2889 = vmatpush2.msra.mxu0 0.0
          %2890 = vmatprep.subr.mxu0 0.0
          %2891 = vmatpush2.msra.mxu0 0.0
          %2892 = vmatprep.subr.mxu0 0.0
          %2893 = vmatpush2.msra.mxu0 0.0
          %2894 = vmatprep.subr.mxu0 0.0
          %2895 = vmatpush2.msra.mxu0 0.0
          %2896 = vmatprep.subr.mxu0 0.0
          %2897 = vmatpush2.msra.mxu0 0.0
          %2898 = vmatprep.subr.mxu0 0.0
          %2899 = vmatpush2.msra.mxu0 0.0
          %2900 = vmatprep.subr.mxu0 0.0
          %2901 = vmatpush2.msra.mxu0 0.0
          %2902 = vmatprep.subr.mxu0 0.0
          %2903 = vmatpush2.msra.mxu0 0.0
          %2904 = vmatprep.subr.mxu0 0.0
          %2905 = vmatpush2.msra.mxu0 0.0
          %2906 = vmatprep.mubr.f32.mxu0 0.0
          %2907 = vmatmul.mubr.f32.gmra.mxu0 %v2836
          %v2908 = vpop.f32.mrf.mxu0
          %v2909 = vadd.f32 0.0, %v2908
          %v2910 = vpop.f32.mrf.mxu0
          %2911 = vdwg.mxu0
          %v2912 = vmul.f32 %v2832, %v2909
          %v2913 = vld [vmem:[#allocation9] sm:$0xff]
          %v2914 = vld [vmem:[%s17] sm:$0xf]
          %v2916 = vsel %vm2838, %v2914, 0
          %2918 = vmatprep.subr.mxu0 0.0
          %2919 = vmatpush1.msra.mxu0 0.0
          %2920 = vmatprep.subr.mxu0 0.0
          %2921 = vmatpush1.msra.mxu0 0.0
          %2922 = vmatprep.subr.mxu0 0.0
          %2923 = vmatpush1.msra.mxu0 0.0
          %2924 = vmatprep.subr.mxu0 0.0
          %2925 = vmatpush1.msra.mxu0 0.0
          %2926 = vmatprep.subr.mxu0 0.0
          %2927 = vmatpush1.msra.mxu0 0.0
          %2928 = vmatprep.subr.mxu0 0.0
          %2929 = vmatpush1.msra.mxu0 0.0
          %2930 = vmatprep.subr.mxu0 0.0
          %2931 = vmatpush1.msra.mxu0 0.0
          %2932 = vmatprep.subr.mxu0 0.0
          %2933 = vmatpush1.msra.mxu0 0.0
          %2934 = vmatprep.subr.mxu0 0.0
          %2935 = vmatpush1.msra.mxu0 0.0
          %2936 = vmatprep.subr.mxu0 0.0
          %2937 = vmatpush1.msra.mxu0 0.0
          %2938 = vmatprep.subr.mxu0 0.0
          %2939 = vmatpush1.msra.mxu0 0.0
          %2940 = vmatprep.subr.mxu0 0.0
          %2941 = vmatpush1.msra.mxu0 0.0
          %2942 = vmatprep.subr.mxu0 0.0
          %2943 = vmatpush1.msra.mxu0 0.0
          %2944 = vmatprep.subr.mxu0 0.0
          %2945 = vmatpush1.msra.mxu0 0.0
          %2946 = vmatprep.subr.mxu0 0.0
          %2947 = vmatpush1.msra.mxu0 0.0
          %2948 = vmatprep.subr.mxu0 0.0
          %2949 = vmatpush1.msra.mxu0 %v2916
          %2950 = vmatprep.subr.mxu0 0.0
          %2951 = vmatpush2.msra.mxu0 0.0
          %2952 = vmatprep.subr.mxu0 0.0
          %2953 = vmatpush2.msra.mxu0 0.0
          %2954 = vmatprep.subr.mxu0 0.0
          %2955 = vmatpush2.msra.mxu0 0.0
          %2956 = vmatprep.subr.mxu0 0.0
          %2957 = vmatpush2.msra.mxu0 0.0
          %2958 = vmatprep.subr.mxu0 0.0
          %2959 = vmatpush2.msra.mxu0 0.0
          %2960 = vmatprep.subr.mxu0 0.0
          %2961 = vmatpush2.msra.mxu0 0.0
          %2962 = vmatprep.subr.mxu0 0.0
          %2963 = vmatpush2.msra.mxu0 0.0
          %2964 = vmatprep.subr.mxu0 0.0
          %2965 = vmatpush2.msra.mxu0 0.0
          %2966 = vmatprep.subr.mxu0 0.0
          %2967 = vmatpush2.msra.mxu0 0.0
          %2968 = vmatprep.subr.mxu0 0.0
          %2969 = vmatpush2.msra.mxu0 0.0
          %2970 = vmatprep.subr.mxu0 0.0
          %2971 = vmatpush2.msra.mxu0 0.0
          %2972 = vmatprep.subr.mxu0 0.0
          %2973 = vmatpush2.msra.mxu0 0.0
          %2974 = vmatprep.subr.mxu0 0.0
          %2975 = vmatpush2.msra.mxu0 0.0
          %2976 = vmatprep.subr.mxu0 0.0
          %2977 = vmatpush2.msra.mxu0 0.0
          %2978 = vmatprep.subr.mxu0 0.0
          %2979 = vmatpush2.msra.mxu0 0.0
          %2980 = vmatprep.subr.mxu0 0.0
          %2981 = vmatpush2.msra.mxu0 0.0
          %2982 = vmatprep.mubr.f32.mxu0 0.0
          %2983 = vmatmul.mubr.f32.gmra.mxu0 %v2836
          %v2984 = vpop.f32.mrf.mxu0
          %v2985 = vadd.f32 0.0, %v2984
          %v2986 = vpop.f32.mrf.mxu0
          %2987 = vdwg.mxu0
          %v2988 = vmul.f32 %v2913, %v2985
          %v2989 = vpack.c.bf16 %v2912, %v2912
          %v2990 = vld [vmem:[%s49] sm:$0xf]
          %v2991 = vld [vmem:[%s49 + $0x4] sm:$0xf]
          %v2992 = vld [vmem:[%s49 + $0x8] sm:$0xf]
          %v2993 = vld [vmem:[%s49 + $0xc] sm:$0xf]
          %v2998 = vunpack.c.l.b16 %v2990
          %v2999 = vunpack.c.l.b16 %v2991
          %v3000 = vunpack.c.l.b16 %v2992
          %v3001 = vunpack.c.l.b16 %v2993
          %v3002 = vpack.c.b16 %v2999, %v2998
          %v3003 = vpack.c.b16 %v3001, %v3000
          %vm3006 = vcmask 261120
          %v3008 = vsel %vm3006, %v2989, 0
          %3010 = vmatprep.subr.bf16.mxu0 0
          %3011 = vmatpush1.bf16.msra.mxu0 0
          %3012 = vmatprep.subr.bf16.mxu0 0
          %3013 = vmatpush1.bf16.msra.mxu0 0
          %3014 = vmatprep.subr.bf16.mxu0 0
          %3015 = vmatpush1.bf16.msra.mxu0 0
          %3016 = vmatprep.subr.bf16.mxu0 0
          %3017 = vmatpush1.bf16.msra.mxu0 0
          %3018 = vmatprep.subr.bf16.mxu0 0
          %3019 = vmatpush1.bf16.msra.mxu0 0
          %3020 = vmatprep.subr.bf16.mxu0 0
          %3021 = vmatpush1.bf16.msra.mxu0 0
          %3022 = vmatprep.subr.bf16.mxu0 0
          %3023 = vmatpush1.bf16.msra.mxu0 %v3003
          %3024 = vmatprep.subr.bf16.mxu0 0
          %3025 = vmatpush1.bf16.msra.mxu0 %v3002
          %3026 = vmatprep.subr.bf16.mxu0 0
          %3027 = vmatpush2.bf16.msra.mxu0 0
          %3028 = vmatprep.subr.bf16.mxu0 0
          %3029 = vmatpush2.bf16.msra.mxu0 0
          %3030 = vmatprep.subr.bf16.mxu0 0
          %3031 = vmatpush2.bf16.msra.mxu0 0
          %3032 = vmatprep.subr.bf16.mxu0 0
          %3033 = vmatpush2.bf16.msra.mxu0 0
          %3034 = vmatprep.subr.bf16.mxu0 0
          %3035 = vmatpush2.bf16.msra.mxu0 0
          %3036 = vmatprep.subr.bf16.mxu0 0
          %3037 = vmatpush2.bf16.msra.mxu0 0
          %3038 = vmatprep.subr.bf16.mxu0 0
          %3039 = vmatpush2.bf16.msra.mxu0 0
          %3040 = vmatprep.subr.bf16.mxu0 0
          %3041 = vmatpush2.bf16.msra.mxu0 0
          %3042 = vmatprep.mubr.bf16.mxu0 0
          %3043 = vmatmul.mubr.bf16.gmra.mxu0 %v3008
          %v3044 = vpop.f32.mrf.mxu0
          %v3045 = vadd.f32 0.0, %v3044
          %v3046 = vpop.f32.mrf.mxu0
          %v3047 = vpop.f32.mrf.mxu0
          %v3048 = vpop.f32.mrf.mxu0
          %3049 = vdwg.mxu0
          %v3050 = vadd.f32 %v2826, %v3045
          %v3051 = vpack.c.bf16 %v2988, %v2988
          %v3052 = vld [vmem:[%s51] sm:$0xf]
          %v3053 = vld [vmem:[%s51 + $0x4] sm:$0xf]
          %v3054 = vld [vmem:[%s51 + $0x8] sm:$0xf]
          %v3055 = vld [vmem:[%s51 + $0xc] sm:$0xf]
          %v3056 = vld [vmem:[%s51 + $0x10] sm:$0xf]
          %v3057 = vld [vmem:[%s51 + $0x14] sm:$0xf]
          %v3058 = vld [vmem:[%s51 + $0x18] sm:$0xf]
          %v3059 = vld [vmem:[%s51 + $0x1c] sm:$0xf]
          %v3060 = vld [vmem:[%s51 + $0x20] sm:$0xf]
          %v3061 = vld [vmem:[%s51 + $0x24] sm:$0xf]
          %v3062 = vld [vmem:[%s51 + $0x28] sm:$0xf]
          %v3063 = vld [vmem:[%s51 + $0x2c] sm:$0xf]
          %v3076 = vunpack.c.l.b16 %v3052
          %v3077 = vunpack.c.l.b16 %v3053
          %v3078 = vunpack.c.l.b16 %v3054
          %v3079 = vunpack.c.l.b16 %v3055
          %v3080 = vunpack.c.l.b16 %v3056
          %v3081 = vunpack.c.l.b16 %v3057
          %v3082 = vunpack.c.l.b16 %v3058
          %v3083 = vunpack.c.l.b16 %v3059
          %v3084 = vunpack.c.l.b16 %v3060
          %v3085 = vunpack.c.l.b16 %v3061
          %v3086 = vunpack.c.l.b16 %v3062
          %v3087 = vunpack.c.l.b16 %v3063
          %v3088 = vpack.c.b16 %v3077, %v3076
          %v3089 = vpack.c.b16 %v3079, %v3078
          %v3090 = vpack.c.b16 %v3081, %v3080
          %v3091 = vpack.c.b16 %v3083, %v3082
          %v3092 = vpack.c.b16 %v3085, %v3084
          %v3093 = vpack.c.b16 %v3087, %v3086
          %vm3100 = vcmask 785408
          %v3102 = vsel %vm3100, %v3051, 0
          %3104 = vmatprep.subr.bf16.mxu0 0
          %3105 = vmatpush1.bf16.msra.mxu0 0
          %3106 = vmatprep.subr.bf16.mxu0 0
          %3107 = vmatpush1.bf16.msra.mxu0 0
          %3108 = vmatprep.subr.bf16.mxu0 0
          %3109 = vmatpush1.bf16.msra.mxu0 %v3093
          %3110 = vmatprep.subr.bf16.mxu0 0
          %3111 = vmatpush1.bf16.msra.mxu0 %v3092
          %3112 = vmatprep.subr.bf16.mxu0 0
          %3113 = vmatpush1.bf16.msra.mxu0 %v3091
          %3114 = vmatprep.subr.bf16.mxu0 0
          %3115 = vmatpush1.bf16.msra.mxu0 %v3090
          %3116 = vmatprep.subr.bf16.mxu0 0
          %3117 = vmatpush1.bf16.msra.mxu0 %v3089
          %3118 = vmatprep.subr.bf16.mxu0 0
          %3119 = vmatpush1.bf16.msra.mxu0 %v3088
          %3120 = vmatprep.subr.bf16.mxu0 0
          %3121 = vmatpush2.bf16.msra.mxu0 0
          %3122 = vmatprep.subr.bf16.mxu0 0
          %3123 = vmatpush2.bf16.msra.mxu0 0
          %3124 = vmatprep.subr.bf16.mxu0 0
          %3125 = vmatpush2.bf16.msra.mxu0 0
          %3126 = vmatprep.subr.bf16.mxu0 0
          %3127 = vmatpush2.bf16.msra.mxu0 0
          %3128 = vmatprep.subr.bf16.mxu0 0
          %3129 = vmatpush2.bf16.msra.mxu0 0
          %3130 = vmatprep.subr.bf16.mxu0 0
          %3131 = vmatpush2.bf16.msra.mxu0 0
          %3132 = vmatprep.subr.bf16.mxu0 0
          %3133 = vmatpush2.bf16.msra.mxu0 0
          %3134 = vmatprep.subr.bf16.mxu0 0
          %3135 = vmatpush2.bf16.msra.mxu0 0
          %3136 = vmatprep.mubr.bf16.mxu0 0
          %3137 = vmatmul.mubr.bf16.gmra.mxu0 %v3102
          %v3138 = vpop.f32.mrf.mxu0
          %v3139 = vadd.f32 0.0, %v3138
          %v3140 = vpop.f32.mrf.mxu0
          %v3141 = vpop.f32.mrf.mxu0
          %v3142 = vpop.f32.mrf.mxu0
          %3143 = vdwg.mxu0
          %v3144 = vadd.f32 %v2827, %v3139
          %v3145 = vld [vmem:[%s27] sm:$0x1]
          %v3146 = vld [vmem:[%s29] sm:$0x1]
          %v3147 = vsel %vm3006, %v3050, 0.0
          %3148 = vadd.xlane.f32.xlu0 %v3147
          %v3149 = vpop.xlane.xlu0 %3148
          %v3150 = vrcp.pop 32.0
          %v3151 = vmul.f32 %v3149, %v3150
          %v3152 = vsub.f32 %v3050, %v3151
          %v3153 = vmul.f32 %v3152, %v3152
          %v3154 = vsel %vm3006, %v3153, 0.0
          %3155 = vadd.xlane.f32.xlu0 %v3154
          %v3156 = vpop.xlane.xlu0 %3155
          %v3157 = vmul.f32 %v3156, %v3150
          %v3158 = vadd.f32 %v3157, 1e-05
          %v3159 = vrsqrt.pop %v3158
          %v3160 = vmul.f32 %v3152, %v3159
          %v3162 = vlaneseq
          %v3163 = vshrl.u32 %v3162, 7
          %v3164 = vsub.s32 0, %v3163
          %v3165 = vrot.slane %v3145, %v3164
          %v3167 = vmul.f32 %v3160, %v3165
          %v3169 = vlaneseq
          %v3170 = vshrl.u32 %v3169, 7
          %v3171 = vsub.s32 0, %v3170
          %v3172 = vrot.slane %v3146, %v3171
          %v3174 = vadd.f32 %v3167, %v3172
          %v3175 = vpack.c.bf16 %v3174, %v3174
          %v3176 = vpack.c.bf16 %v3144, %v3144
          %v3177 = vld [vmem:[%s61] sm:$0xf]
          %v3178 = vld [vmem:[%s61 + $0x4] sm:$0xf]
          %v3179 = vld [vmem:[%s61 + $0x8] sm:$0xf]
          %v3180 = vld [vmem:[%s61 + $0xc] sm:$0xf]
          %v3181 = vld [vmem:[%s61 + $0x10] sm:$0xf]
          %v3182 = vld [vmem:[%s61 + $0x14] sm:$0xf]
          %v3183 = vld [vmem:[%s61 + $0x18] sm:$0xf]
          %v3184 = vld [vmem:[%s61 + $0x1c] sm:$0xf]
          %v3185 = vld [vmem:[%s61 + $0x20] sm:$0xf]
          %v3186 = vld [vmem:[%s61 + $0x24] sm:$0xf]
          %v3187 = vld [vmem:[%s61 + $0x28] sm:$0xf]
          %v3188 = vld [vmem:[%s61 + $0x2c] sm:$0xf]
          %v3201 = vunpack.c.l.b16 %v3177
          %v3202 = vunpack.c.l.b16 %v3178
          %v3203 = vunpack.c.l.b16 %v3179
          %v3204 = vunpack.c.l.b16 %v3180
          %v3205 = vunpack.c.l.b16 %v3181
          %v3206 = vunpack.c.l.b16 %v3182
          %v3207 = vunpack.c.l.b16 %v3183
          %v3208 = vunpack.c.l.b16 %v3184
          %v3209 = vunpack.c.l.b16 %v3185
          %v3210 = vunpack.c.l.b16 %v3186
          %v3211 = vunpack.c.l.b16 %v3187
          %v3212 = vunpack.c.l.b16 %v3188
          %v3213 = vpack.c.b16 %v3202, %v3201
          %v3214 = vpack.c.b16 %v3204, %v3203
          %v3215 = vpack.c.b16 %v3206, %v3205
          %v3216 = vpack.c.b16 %v3208, %v3207
          %v3217 = vpack.c.b16 %v3210, %v3209
          %v3218 = vpack.c.b16 %v3212, %v3211
          %v3226 = vsel %vm3100, %v3176, 0
          %3228 = vmatprep.subr.bf16.mxu0 0
          %3229 = vmatpush1.bf16.msra.mxu0 0
          %3230 = vmatprep.subr.bf16.mxu0 0
          %3231 = vmatpush1.bf16.msra.mxu0 0
          %3232 = vmatprep.subr.bf16.mxu0 0
          %3233 = vmatpush1.bf16.msra.mxu0 %v3218
          %3234 = vmatprep.subr.bf16.mxu0 0
          %3235 = vmatpush1.bf16.msra.mxu0 %v3217
          %3236 = vmatprep.subr.bf16.mxu0 0
          %3237 = vmatpush1.bf16.msra.mxu0 %v3216
          %3238 = vmatprep.subr.bf16.mxu0 0
          %3239 = vmatpush1.bf16.msra.mxu0 %v3215
          %3240 = vmatprep.subr.bf16.mxu0 0
          %3241 = vmatpush1.bf16.msra.mxu0 %v3214
          %3242 = vmatprep.subr.bf16.mxu0 0
          %3243 = vmatpush1.bf16.msra.mxu0 %v3213
          %3244 = vmatprep.subr.bf16.mxu0 0
          %3245 = vmatpush2.bf16.msra.mxu0 0
          %3246 = vmatprep.subr.bf16.mxu0 0
          %3247 = vmatpush2.bf16.msra.mxu0 0
          %3248 = vmatprep.subr.bf16.mxu0 0
          %3249 = vmatpush2.bf16.msra.mxu0 0
          %3250 = vmatprep.subr.bf16.mxu0 0
          %3251 = vmatpush2.bf16.msra.mxu0 0
          %3252 = vmatprep.subr.bf16.mxu0 0
          %3253 = vmatpush2.bf16.msra.mxu0 0
          %3254 = vmatprep.subr.bf16.mxu0 0
          %3255 = vmatpush2.bf16.msra.mxu0 0
          %3256 = vmatprep.subr.bf16.mxu0 0
          %3257 = vmatpush2.bf16.msra.mxu0 0
          %3258 = vmatprep.subr.bf16.mxu0 0
          %3259 = vmatpush2.bf16.msra.mxu0 0
          %3260 = vmatprep.mubr.bf16.mxu0 0
          %3261 = vmatmul.mubr.bf16.gmra.mxu0 %v3226
          %v3262 = vpop.f32.mrf.mxu0
          %v3263 = vadd.f32 0.0, %v3262
          %v3264 = vpop.f32.mrf.mxu0
          %v3265 = vpop.f32.mrf.mxu0
          %v3266 = vpop.f32.mrf.mxu0
          %3267 = vdwg.mxu0
          %v3268 = vld [vmem:[%s63] sm:$0xf]
          %v3269 = vld [vmem:[%s63 + $0x4] sm:$0xf]
          %v3270 = vld [vmem:[%s63 + $0x8] sm:$0xf]
          %v3271 = vld [vmem:[%s63 + $0xc] sm:$0xf]
          %v3272 = vld [vmem:[%s63 + $0x10] sm:$0xf]
          %v3273 = vld [vmem:[%s63 + $0x14] sm:$0xf]
          %v3274 = vld [vmem:[%s63 + $0x18] sm:$0xf]
          %v3275 = vld [vmem:[%s63 + $0x1c] sm:$0xf]
          %v3276 = vld [vmem:[%s63 + $0x20] sm:$0xf]
          %v3277 = vld [vmem:[%s63 + $0x24] sm:$0xf]
          %v3278 = vld [vmem:[%s63 + $0x28] sm:$0xf]
          %v3279 = vld [vmem:[%s63 + $0x2c] sm:$0xf]
          %v3292 = vunpack.c.l.b16 %v3268
          %v3293 = vunpack.c.l.b16 %v3269
          %v3294 = vunpack.c.l.b16 %v3270
          %v3295 = vunpack.c.l.b16 %v3271
          %v3296 = vunpack.c.l.b16 %v3272
          %v3297 = vunpack.c.l.b16 %v3273
          %v3298 = vunpack.c.l.b16 %v3274
          %v3299 = vunpack.c.l.b16 %v3275
          %v3300 = vunpack.c.l.b16 %v3276
          %v3301 = vunpack.c.l.b16 %v3277
          %v3302 = vunpack.c.l.b16 %v3278
          %v3303 = vunpack.c.l.b16 %v3279
          %v3304 = vpack.c.b16 %v3293, %v3292
          %v3305 = vpack.c.b16 %v3295, %v3294
          %v3306 = vpack.c.b16 %v3297, %v3296
          %v3307 = vpack.c.b16 %v3299, %v3298
          %v3308 = vpack.c.b16 %v3301, %v3300
          %v3309 = vpack.c.b16 %v3303, %v3302
          %3316 = vmatprep.subr.bf16.mxu0 0
          %3317 = vmatpush1.bf16.msra.mxu0 0
          %3318 = vmatprep.subr.bf16.mxu0 0
          %3319 = vmatpush1.bf16.msra.mxu0 0
          %3320 = vmatprep.subr.bf16.mxu0 0
          %3321 = vmatpush1.bf16.msra.mxu0 %v3309
          %3322 = vmatprep.subr.bf16.mxu0 0
          %3323 = vmatpush1.bf16.msra.mxu0 %v3308
          %3324 = vmatprep.subr.bf16.mxu0 0
          %3325 = vmatpush1.bf16.msra.mxu0 %v3307
          %3326 = vmatprep.subr.bf16.mxu0 0
          %3327 = vmatpush1.bf16.msra.mxu0 %v3306
          %3328 = vmatprep.subr.bf16.mxu0 0
          %3329 = vmatpush1.bf16.msra.mxu0 %v3305
          %3330 = vmatprep.subr.bf16.mxu0 0
          %3331 = vmatpush1.bf16.msra.mxu0 %v3304
          %3332 = vmatprep.subr.bf16.mxu0 0
          %3333 = vmatpush2.bf16.msra.mxu0 0
          %3334 = vmatprep.subr.bf16.mxu0 0
          %3335 = vmatpush2.bf16.msra.mxu0 0
          %3336 = vmatprep.subr.bf16.mxu0 0
          %3337 = vmatpush2.bf16.msra.mxu0 0
          %3338 = vmatprep.subr.bf16.mxu0 0
          %3339 = vmatpush2.bf16.msra.mxu0 0
          %3340 = vmatprep.subr.bf16.mxu0 0
          %3341 = vmatpush2.bf16.msra.mxu0 0
          %3342 = vmatprep.subr.bf16.mxu0 0
          %3343 = vmatpush2.bf16.msra.mxu0 0
          %3344 = vmatprep.subr.bf16.mxu0 0
          %3345 = vmatpush2.bf16.msra.mxu0 0
          %3346 = vmatprep.subr.bf16.mxu0 0
          %3347 = vmatpush2.bf16.msra.mxu0 0
          %3348 = vmatprep.mubr.bf16.mxu0 0
          %3349 = vmatmul.mubr.bf16.gmra.mxu0 %v3226
          %v3350 = vpop.f32.mrf.mxu0
          %v3351 = vadd.f32 0.0, %v3350
          %v3352 = vpop.f32.mrf.mxu0
          %v3353 = vpop.f32.mrf.mxu0
          %v3354 = vpop.f32.mrf.mxu0
          %3355 = vdwg.mxu0
          %v3356 = vmul.f32 %v3263, %v3263
          %v3357 = vld [vmem:[%s19] sm:$0xff]
          %v3358 = vld [vmem:[%s19 + $0x8] sm:$0xff]
          %v3359 = vld [vmem:[%s19 + $0x10] sm:$0xff]
          %v3360 = vld [vmem:[%s19 + $0x18] sm:$0xff]
          %v3361 = vld [vmem:[%s19 + $0x20] sm:$0xff]
          %v3362 = vld [vmem:[%s19 + $0x28] sm:$0xff]
          %v3363 = vld [vmem:[%s19 + $0x30] sm:$0xff]
          %v3364 = vld [vmem:[%s19 + $0x38] sm:$0xff]
          %v3365 = vld [vmem:[%s19 + $0x40] sm:$0xff]
          %v3366 = vld [vmem:[%s19 + $0x48] sm:$0xff]
          %v3367 = vld [vmem:[%s19 + $0x50] sm:$0xff]
          %v3368 = vld [vmem:[%s19 + $0x58] sm:$0xff]
          %v3370 = vsel %vm3100, %v3356, 0
          %3372 = vmatprep.subr.mxu0 0.0
          %3373 = vmatpush1.msra.mxu0 0.0
          %3374 = vmatprep.subr.mxu0 0.0
          %3375 = vmatpush1.msra.mxu0 0.0
          %3376 = vmatprep.subr.mxu0 0.0
          %3377 = vmatpush1.msra.mxu0 0.0
          %3378 = vmatprep.subr.mxu0 0.0
          %3379 = vmatpush1.msra.mxu0 0.0
          %3380 = vmatprep.subr.mxu0 0.0
          %3381 = vmatpush1.msra.mxu0 %v3368
          %3382 = vmatprep.subr.mxu0 0.0
          %3383 = vmatpush1.msra.mxu0 %v3367
          %3384 = vmatprep.subr.mxu0 0.0
          %3385 = vmatpush1.msra.mxu0 %v3366
          %3386 = vmatprep.subr.mxu0 0.0
          %3387 = vmatpush1.msra.mxu0 %v3365
          %3388 = vmatprep.subr.mxu0 0.0
          %3389 = vmatpush1.msra.mxu0 %v3364
          %3390 = vmatprep.subr.mxu0 0.0
          %3391 = vmatpush1.msra.mxu0 %v3363
          %3392 = vmatprep.subr.mxu0 0.0
          %3393 = vmatpush1.msra.mxu0 %v3362
          %3394 = vmatprep.subr.mxu0 0.0
          %3395 = vmatpush1.msra.mxu0 %v3361
          %3396 = vmatprep.subr.mxu0 0.0
          %3397 = vmatpush1.msra.mxu0 %v3360
          %3398 = vmatprep.subr.mxu0 0.0
          %3399 = vmatpush1.msra.mxu0 %v3359
          %3400 = vmatprep.subr.mxu0 0.0
          %3401 = vmatpush1.msra.mxu0 %v3358
          %3402 = vmatprep.subr.mxu0 0.0
          %3403 = vmatpush1.msra.mxu0 %v3357
          %3404 = vmatprep.subr.mxu0 0.0
          %3405 = vmatpush2.msra.mxu0 0.0
          %3406 = vmatprep.subr.mxu0 0.0
          %3407 = vmatpush2.msra.mxu0 0.0
          %3408 = vmatprep.subr.mxu0 0.0
          %3409 = vmatpush2.msra.mxu0 0.0
          %3410 = vmatprep.subr.mxu0 0.0
          %3411 = vmatpush2.msra.mxu0 0.0
          %3412 = vmatprep.subr.mxu0 0.0
          %3413 = vmatpush2.msra.mxu0 0.0
          %3414 = vmatprep.subr.mxu0 0.0
          %3415 = vmatpush2.msra.mxu0 0.0
          %3416 = vmatprep.subr.mxu0 0.0
          %3417 = vmatpush2.msra.mxu0 0.0
          %3418 = vmatprep.subr.mxu0 0.0
          %3419 = vmatpush2.msra.mxu0 0.0
          %3420 = vmatprep.subr.mxu0 0.0
          %3421 = vmatpush2.msra.mxu0 0.0
          %3422 = vmatprep.subr.mxu0 0.0
          %3423 = vmatpush2.msra.mxu0 0.0
          %3424 = vmatprep.subr.mxu0 0.0
          %3425 = vmatpush2.msra.mxu0 0.0
          %3426 = vmatprep.subr.mxu0 0.0
          %3427 = vmatpush2.msra.mxu0 0.0
          %3428 = vmatprep.subr.mxu0 0.0
          %3429 = vmatpush2.msra.mxu0 0.0
          %3430 = vmatprep.subr.mxu0 0.0
          %3431 = vmatpush2.msra.mxu0 0.0
          %3432 = vmatprep.subr.mxu0 0.0
          %3433 = vmatpush2.msra.mxu0 0.0
          %3434 = vmatprep.subr.mxu0 0.0
          %3435 = vmatpush2.msra.mxu0 0.0
          %3436 = vmatprep.mubr.f32.mxu0 0.0
          %3437 = vmatmul.mubr.f32.gmra.mxu0 %v3370
          %v3438 = vpop.f32.mrf.mxu0
          %v3439 = vadd.f32 0.0, %v3438
          %v3440 = vpop.f32.mrf.mxu0
          %3441 = vdwg.mxu0
          %v3442 = vrsqrt.pop %v3439
          %v3443 = vmul.f32 %v3439, %v3442
          %vm3444 = vcmp.eq.f32.partialorder %v3439, inf
          %v3445 = vsel %vm3444, %v3439, %v3443
          %vm3446 = vcmp.eq.f32.partialorder %v3439, 0.0
          %v3447 = vand.u32 %v3439, 2147483648
          %v3448 = vsel %vm3446, %v3447, %v3445
          %v3449 = vpack.c.bf16 %v3448, %v3448
          %v3450 = vld [vmem:[%s65] sm:$0xf]
          %v3451 = vld [vmem:[%s65 + $0x4] sm:$0xf]
          %v3452 = vld [vmem:[%s65 + $0x8] sm:$0xf]
          %v3453 = vld [vmem:[%s65 + $0xc] sm:$0xf]
          %v3454 = vld [vmem:[%s67] sm:$0xf]
          %v3455 = vld [vmem:[%s67 + $0x4] sm:$0xf]
          %v3456 = vld [vmem:[%s67 + $0x8] sm:$0xf]
          %v3457 = vld [vmem:[%s67 + $0xc] sm:$0xf]
          %v3462 = vunpack.c.l.b16 %v3454
          %v3463 = vunpack.c.l.b16 %v3455
          %v3464 = vunpack.c.l.b16 %v3456
          %v3465 = vunpack.c.l.b16 %v3457
          %v3466 = vpack.c.b16 %v3463, %v3462
          %v3467 = vpack.c.b16 %v3465, %v3464
          %v3471 = vsel %vm3006, %v3449, 0
          %3473 = vmatprep.subr.bf16.mxu0 0
          %3474 = vmatpush1.bf16.msra.mxu0 0
          %3475 = vmatprep.subr.bf16.mxu0 0
          %3476 = vmatpush1.bf16.msra.mxu0 0
          %3477 = vmatprep.subr.bf16.mxu0 0
          %3478 = vmatpush1.bf16.msra.mxu0 0
          %3479 = vmatprep.subr.bf16.mxu0 0
          %3480 = vmatpush1.bf16.msra.mxu0 0
          %3481 = vmatprep.subr.bf16.mxu0 0
          %3482 = vmatpush1.bf16.msra.mxu0 0
          %3483 = vmatprep.subr.bf16.mxu0 0
          %3484 = vmatpush1.bf16.msra.mxu0 0
          %3485 = vmatprep.subr.bf16.mxu0 0
          %3486 = vmatpush1.bf16.msra.mxu0 %v3467
          %3487 = vmatprep.subr.bf16.mxu0 0
          %3488 = vmatpush1.bf16.msra.mxu0 %v3466
          %3489 = vmatprep.subr.bf16.mxu0 0
          %3490 = vmatpush2.bf16.msra.mxu0 0
          %3491 = vmatprep.subr.bf16.mxu0 0
          %3492 = vmatpush2.bf16.msra.mxu0 0
          %3493 = vmatprep.subr.bf16.mxu0 0
          %3494 = vmatpush2.bf16.msra.mxu0 0
          %3495 = vmatprep.subr.bf16.mxu0 0
          %3496 = vmatpush2.bf16.msra.mxu0 0
          %3497 = vmatprep.subr.bf16.mxu0 0
          %3498 = vmatpush2.bf16.msra.mxu0 0
          %3499 = vmatprep.subr.bf16.mxu0 0
          %3500 = vmatpush2.bf16.msra.mxu0 0
          %3501 = vmatprep.subr.bf16.mxu0 0
          %3502 = vmatpush2.bf16.msra.mxu0 0
          %3503 = vmatprep.subr.bf16.mxu0 0
          %3504 = vmatpush2.bf16.msra.mxu0 0
          %3505 = vmatprep.mubr.bf16.mxu0 0
          %3506 = vmatmul.mubr.bf16.gmra.mxu0 %v3471
          %v3507 = vpop.f32.mrf.mxu0
          %v3508 = vadd.f32 0.0, %v3507
          %v3509 = vpop.f32.mrf.mxu0
          %v3510 = vpop.f32.mrf.mxu0
          %v3511 = vpop.f32.mrf.mxu0
          %3512 = vdwg.mxu0
          %v3517 = vunpack.c.l.b16 %v3450
          %v3518 = vunpack.c.l.b16 %v3451
          %v3519 = vunpack.c.l.b16 %v3452
          %v3520 = vunpack.c.l.b16 %v3453
          %v3521 = vpack.c.b16 %v3518, %v3517
          %v3522 = vpack.c.b16 %v3520, %v3519
          %v3526 = vsel %vm3006, %v3175, 0
          %3528 = vmatprep.subr.bf16.mxu0 0
          %3529 = vmatpush1.bf16.msra.mxu0 0
          %3530 = vmatprep.subr.bf16.mxu0 0
          %3531 = vmatpush1.bf16.msra.mxu0 0
          %3532 = vmatprep.subr.bf16.mxu0 0
          %3533 = vmatpush1.bf16.msra.mxu0 0
          %3534 = vmatprep.subr.bf16.mxu0 0
          %3535 = vmatpush1.bf16.msra.mxu0 0
          %3536 = vmatprep.subr.bf16.mxu0 0
          %3537 = vmatpush1.bf16.msra.mxu0 0
          %3538 = vmatprep.subr.bf16.mxu0 0
          %3539 = vmatpush1.bf16.msra.mxu0 0
          %3540 = vmatprep.subr.bf16.mxu0 0
          %3541 = vmatpush1.bf16.msra.mxu0 %v3522
          %3542 = vmatprep.subr.bf16.mxu0 0
          %3543 = vmatpush1.bf16.msra.mxu0 %v3521
          %3544 = vmatprep.subr.bf16.mxu0 0
          %3545 = vmatpush2.bf16.msra.mxu0 0
          %3546 = vmatprep.subr.bf16.mxu0 0
          %3547 = vmatpush2.bf16.msra.mxu0 0
          %3548 = vmatprep.subr.bf16.mxu0 0
          %3549 = vmatpush2.bf16.msra.mxu0 0
          %3550 = vmatprep.subr.bf16.mxu0 0
          %3551 = vmatpush2.bf16.msra.mxu0 0
          %3552 = vmatprep.subr.bf16.mxu0 0
          %3553 = vmatpush2.bf16.msra.mxu0 0
          %3554 = vmatprep.subr.bf16.mxu0 0
          %3555 = vmatpush2.bf16.msra.mxu0 0
          %3556 = vmatprep.subr.bf16.mxu0 0
          %3557 = vmatpush2.bf16.msra.mxu0 0
          %3558 = vmatprep.subr.bf16.mxu0 0
          %3559 = vmatpush2.bf16.msra.mxu0 0
          %3560 = vmatprep.mubr.bf16.mxu0 0
          %3561 = vmatmul.mubr.bf16.gmra.mxu0 %v3526
          %v3562 = vpop.f32.mrf.mxu0
          %v3563 = vadd.f32 %v3508, %v3562
          %v3564 = vpop.f32.mrf.mxu0
          %v3565 = vpop.f32.mrf.mxu0
          %v3566 = vpop.f32.mrf.mxu0
          %3567 = vdwg.mxu0
          %v3568 = vld [vmem:[%s69] sm:$0x1]
          %v3570 = vlaneseq
          %v3571 = vshrl.u32 %v3570, 7
          %v3572 = vsub.s32 0, %v3571
          %v3573 = vrot.slane %v3568, %v3572
          %v3575 = vadd.f32 %v3563, %v3573
          %v3576 = vxor.u32 %v3575, 2147483648
          %v3577 = vmul.f32 %v3576, 1.442695
          %v3578 = vpow.pop %v3577
          %v3579 = vadd.f32 %v3578, 1.0
          %v3580 = vrcp.pop %v3579
          %v3581 = vmul.f32 1.0, %v3580
          %v3582 = vmul.f32 %v3575, %v3581
          %v3583 = vpack.c.bf16 %v3582, %v3582
          %v3584 = vld [vmem:[%s71] sm:$0xf]
          %v3585 = vld [vmem:[%s71 + $0x4] sm:$0xf]
          %v3586 = vld [vmem:[%s71 + $0x8] sm:$0xf]
          %v3587 = vld [vmem:[%s71 + $0xc] sm:$0xf]
          %v3588 = vld [vmem:[%s71 + $0x10] sm:$0xf]
          %v3589 = vld [vmem:[%s71 + $0x14] sm:$0xf]
          %v3590 = vld [vmem:[%s71 + $0x18] sm:$0xf]
          %v3591 = vld [vmem:[%s71 + $0x1c] sm:$0xf]
          %v3592 = vld [vmem:[%s73] sm:$0x1]
          %v3594 = vlaneseq
          %v3595 = vshrl.u32 %v3594, 7
          %v3596 = vsub.s32 0, %v3595
          %v3597 = vrot.slane %v3592, %v3596
          %v3607 = vunpack.c.l.b16 %v3584
          %v3608 = vunpack.c.l.b16 %v3585
          %v3609 = vunpack.c.l.b16 %v3586
          %v3610 = vunpack.c.l.b16 %v3587
          %v3611 = vunpack.c.l.b16 %v3588
          %v3612 = vunpack.c.l.b16 %v3589
          %v3613 = vunpack.c.l.b16 %v3590
          %v3614 = vunpack.c.l.b16 %v3591
          %v3615 = vpack.c.b16 %v3608, %v3607
          %v3616 = vpack.c.b16 %v3610, %v3609
          %v3617 = vpack.c.b16 %v3612, %v3611
          %v3618 = vpack.c.b16 %v3614, %v3613
          %vm3623 = vcmask 523264
          %v3625 = vsel %vm3623, %v3583, 0
          %3627 = vmatprep.subr.bf16.mxu0 0
          %3628 = vmatpush1.bf16.msra.mxu0 0
          %3629 = vmatprep.subr.bf16.mxu0 0
          %3630 = vmatpush1.bf16.msra.mxu0 0
          %3631 = vmatprep.subr.bf16.mxu0 0
          %3632 = vmatpush1.bf16.msra.mxu0 0
          %3633 = vmatprep.subr.bf16.mxu0 0
          %3634 = vmatpush1.bf16.msra.mxu0 0
          %3635 = vmatprep.subr.bf16.mxu0 0
          %3636 = vmatpush1.bf16.msra.mxu0 %v3618
          %3637 = vmatprep.subr.bf16.mxu0 0
          %3638 = vmatpush1.bf16.msra.mxu0 %v3617
          %3639 = vmatprep.subr.bf16.mxu0 0
          %3640 = vmatpush1.bf16.msra.mxu0 %v3616
          %3641 = vmatprep.subr.bf16.mxu0 0
          %3642 = vmatpush1.bf16.msra.mxu0 %v3615
          %3643 = vmatprep.subr.bf16.mxu0 0
          %3644 = vmatpush2.bf16.msra.mxu0 0
          %3645 = vmatprep.subr.bf16.mxu0 0
          %3646 = vmatpush2.bf16.msra.mxu0 0
          %3647 = vmatprep.subr.bf16.mxu0 0
          %3648 = vmatpush2.bf16.msra.mxu0 0
          %3649 = vmatprep.subr.bf16.mxu0 0
          %3650 = vmatpush2.bf16.msra.mxu0 0
          %3651 = vmatprep.subr.bf16.mxu0 0
          %3652 = vmatpush2.bf16.msra.mxu0 0
          %3653 = vmatprep.subr.bf16.mxu0 0
          %3654 = vmatpush2.bf16.msra.mxu0 0
          %3655 = vmatprep.subr.bf16.mxu0 0
          %3656 = vmatpush2.bf16.msra.mxu0 0
          %3657 = vmatprep.subr.bf16.mxu0 0
          %3658 = vmatpush2.bf16.msra.mxu0 0
          %3659 = vmatprep.mubr.bf16.mxu0 0
          %3660 = vmatmul.mubr.bf16.gmra.mxu0 %v3625
          %v3661 = vpop.f32.mrf.mxu0
          %v3662 = vadd.f32 %v3597, %v3661
          %v3663 = vpop.f32.mrf.mxu0
          %v3664 = vpop.f32.mrf.mxu0
          %v3665 = vpop.f32.mrf.mxu0
          %3666 = vdwg.mxu0
          %v3667 = vld [vmem:[%s75] sm:$0xf]
          %v3668 = vld [vmem:[%s75 + $0x4] sm:$0xf]
          %v3669 = vld [vmem:[%s75 + $0x8] sm:$0xf]
          %v3670 = vld [vmem:[%s75 + $0xc] sm:$0xf]
          %v3671 = vld [vmem:[%s77] sm:$0xf]
          %v3672 = vld [vmem:[%s77 + $0x4] sm:$0xf]
          %v3673 = vld [vmem:[%s77 + $0x8] sm:$0xf]
          %v3674 = vld [vmem:[%s77 + $0xc] sm:$0xf]
          %v3679 = vunpack.c.l.b16 %v3671
          %v3680 = vunpack.c.l.b16 %v3672
          %v3681 = vunpack.c.l.b16 %v3673
          %v3682 = vunpack.c.l.b16 %v3674
          %v3683 = vpack.c.b16 %v3680, %v3679
          %v3684 = vpack.c.b16 %v3682, %v3681
          %3687 = vmatprep.subr.bf16.mxu0 0
          %3688 = vmatpush1.bf16.msra.mxu0 0
          %3689 = vmatprep.subr.bf16.mxu0 0
          %3690 = vmatpush1.bf16.msra.mxu0 0
          %3691 = vmatprep.subr.bf16.mxu0 0
          %3692 = vmatpush1.bf16.msra.mxu0 0
          %3693 = vmatprep.subr.bf16.mxu0 0
          %3694 = vmatpush1.bf16.msra.mxu0 0
          %3695 = vmatprep.subr.bf16.mxu0 0
          %3696 = vmatpush1.bf16.msra.mxu0 0
          %3697 = vmatprep.subr.bf16.mxu0 0
          %3698 = vmatpush1.bf16.msra.mxu0 0
          %3699 = vmatprep.subr.bf16.mxu0 0
          %3700 = vmatpush1.bf16.msra.mxu0 %v3684
          %3701 = vmatprep.subr.bf16.mxu0 0
          %3702 = vmatpush1.bf16.msra.mxu0 %v3683
          %3703 = vmatprep.subr.bf16.mxu0 0
          %3704 = vmatpush2.bf16.msra.mxu0 0
          %3705 = vmatprep.subr.bf16.mxu0 0
          %3706 = vmatpush2.bf16.msra.mxu0 0
          %3707 = vmatprep.subr.bf16.mxu0 0
          %3708 = vmatpush2.bf16.msra.mxu0 0
          %3709 = vmatprep.subr.bf16.mxu0 0
          %3710 = vmatpush2.bf16.msra.mxu0 0
          %3711 = vmatprep.subr.bf16.mxu0 0
          %3712 = vmatpush2.bf16.msra.mxu0 0
          %3713 = vmatprep.subr.bf16.mxu0 0
          %3714 = vmatpush2.bf16.msra.mxu0 0
          %3715 = vmatprep.subr.bf16.mxu0 0
          %3716 = vmatpush2.bf16.msra.mxu0 0
          %3717 = vmatprep.subr.bf16.mxu0 0
          %3718 = vmatpush2.bf16.msra.mxu0 0
          %3719 = vmatprep.mubr.bf16.mxu0 0
          %3720 = vmatmul.mubr.bf16.gmra.mxu0 %v3471
          %v3721 = vpop.f32.mrf.mxu0
          %v3722 = vadd.f32 0.0, %v3721
          %v3723 = vpop.f32.mrf.mxu0
          %v3724 = vpop.f32.mrf.mxu0
          %v3725 = vpop.f32.mrf.mxu0
          %3726 = vdwg.mxu0
          %v3731 = vunpack.c.l.b16 %v3667
          %v3732 = vunpack.c.l.b16 %v3668
          %v3733 = vunpack.c.l.b16 %v3669
          %v3734 = vunpack.c.l.b16 %v3670
          %v3735 = vpack.c.b16 %v3732, %v3731
          %v3736 = vpack.c.b16 %v3734, %v3733
          %3739 = vmatprep.subr.bf16.mxu0 0
          %3740 = vmatpush1.bf16.msra.mxu0 0
          %3741 = vmatprep.subr.bf16.mxu0 0
          %3742 = vmatpush1.bf16.msra.mxu0 0
          %3743 = vmatprep.subr.bf16.mxu0 0
          %3744 = vmatpush1.bf16.msra.mxu0 0
          %3745 = vmatprep.subr.bf16.mxu0 0
          %3746 = vmatpush1.bf16.msra.mxu0 0
          %3747 = vmatprep.subr.bf16.mxu0 0
          %3748 = vmatpush1.bf16.msra.mxu0 0
          %3749 = vmatprep.subr.bf16.mxu0 0
          %3750 = vmatpush1.bf16.msra.mxu0 0
          %3751 = vmatprep.subr.bf16.mxu0 0
          %3752 = vmatpush1.bf16.msra.mxu0 %v3736
          %3753 = vmatprep.subr.bf16.mxu0 0
          %3754 = vmatpush1.bf16.msra.mxu0 %v3735
          %3755 = vmatprep.subr.bf16.mxu0 0
          %3756 = vmatpush2.bf16.msra.mxu0 0
          %3757 = vmatprep.subr.bf16.mxu0 0
          %3758 = vmatpush2.bf16.msra.mxu0 0
          %3759 = vmatprep.subr.bf16.mxu0 0
          %3760 = vmatpush2.bf16.msra.mxu0 0
          %3761 = vmatprep.subr.bf16.mxu0 0
          %3762 = vmatpush2.bf16.msra.mxu0 0
          %3763 = vmatprep.subr.bf16.mxu0 0
          %3764 = vmatpush2.bf16.msra.mxu0 0
          %3765 = vmatprep.subr.bf16.mxu0 0
          %3766 = vmatpush2.bf16.msra.mxu0 0
          %3767 = vmatprep.subr.bf16.mxu0 0
          %3768 = vmatpush2.bf16.msra.mxu0 0
          %3769 = vmatprep.subr.bf16.mxu0 0
          %3770 = vmatpush2.bf16.msra.mxu0 0
          %3771 = vmatprep.mubr.bf16.mxu0 0
          %3772 = vmatmul.mubr.bf16.gmra.mxu0 %v3526
          %v3773 = vpop.f32.mrf.mxu0
          %v3774 = vadd.f32 %v3722, %v3773
          %v3775 = vpop.f32.mrf.mxu0
          %v3776 = vpop.f32.mrf.mxu0
          %v3777 = vpop.f32.mrf.mxu0
          %3778 = vdwg.mxu0
          %v3779 = vld [vmem:[%s79] sm:$0x1]
          %v3781 = vlaneseq
          %v3782 = vshrl.u32 %v3781, 7
          %v3783 = vsub.s32 0, %v3782
          %v3784 = vrot.slane %v3779, %v3783
          %v3786 = vadd.f32 %v3774, %v3784
          %v3787 = vxor.u32 %v3786, 2147483648
          %v3788 = vmul.f32 %v3787, 1.442695
          %v3789 = vpow.pop %v3788
          %v3790 = vadd.f32 %v3789, 1.0
          %v3791 = vrcp.pop %v3790
          %v3792 = vmul.f32 1.0, %v3791
          %v3793 = vmul.f32 %v3786, %v3792
          %v3794 = vpack.c.bf16 %v3793, %v3793
          %v3795 = vld [vmem:[%s81] sm:$0xf]
          %v3796 = vld [vmem:[%s81 + $0x4] sm:$0xf]
          %v3797 = vld [vmem:[%s81 + $0x8] sm:$0xf]
          %v3798 = vld [vmem:[%s81 + $0xc] sm:$0xf]
          %v3799 = vld [vmem:[%s81 + $0x10] sm:$0xf]
          %v3800 = vld [vmem:[%s81 + $0x14] sm:$0xf]
          %v3801 = vld [vmem:[%s81 + $0x18] sm:$0xf]
          %v3802 = vld [vmem:[%s81 + $0x1c] sm:$0xf]
          %v3803 = vld [vmem:[%s83] sm:$0x1]
          %v3805 = vlaneseq
          %v3806 = vshrl.u32 %v3805, 7
          %v3807 = vsub.s32 0, %v3806
          %v3808 = vrot.slane %v3803, %v3807
          %v3818 = vunpack.c.l.b16 %v3795
          %v3819 = vunpack.c.l.b16 %v3796
          %v3820 = vunpack.c.l.b16 %v3797
          %v3821 = vunpack.c.l.b16 %v3798
          %v3822 = vunpack.c.l.b16 %v3799
          %v3823 = vunpack.c.l.b16 %v3800
          %v3824 = vunpack.c.l.b16 %v3801
          %v3825 = vunpack.c.l.b16 %v3802
          %v3826 = vpack.c.b16 %v3819, %v3818
          %v3827 = vpack.c.b16 %v3821, %v3820
          %v3828 = vpack.c.b16 %v3823, %v3822
          %v3829 = vpack.c.b16 %v3825, %v3824
          %v3835 = vsel %vm3623, %v3794, 0
          %3837 = vmatprep.subr.bf16.mxu0 0
          %3838 = vmatpush1.bf16.msra.mxu0 0
          %3839 = vmatprep.subr.bf16.mxu0 0
          %3840 = vmatpush1.bf16.msra.mxu0 0
          %3841 = vmatprep.subr.bf16.mxu0 0
          %3842 = vmatpush1.bf16.msra.mxu0 0
          %3843 = vmatprep.subr.bf16.mxu0 0
          %3844 = vmatpush1.bf16.msra.mxu0 0
          %3845 = vmatprep.subr.bf16.mxu0 0
          %3846 = vmatpush1.bf16.msra.mxu0 %v3829
          %3847 = vmatprep.subr.bf16.mxu0 0
          %3848 = vmatpush1.bf16.msra.mxu0 %v3828
          %3849 = vmatprep.subr.bf16.mxu0 0
          %3850 = vmatpush1.bf16.msra.mxu0 %v3827
          %3851 = vmatprep.subr.bf16.mxu0 0
          %3852 = vmatpush1.bf16.msra.mxu0 %v3826
          %3853 = vmatprep.subr.bf16.mxu0 0
          %3854 = vmatpush2.bf16.msra.mxu0 0
          %3855 = vmatprep.subr.bf16.mxu0 0
          %3856 = vmatpush2.bf16.msra.mxu0 0
          %3857 = vmatprep.subr.bf16.mxu0 0
          %3858 = vmatpush2.bf16.msra.mxu0 0
          %3859 = vmatprep.subr.bf16.mxu0 0
          %3860 = vmatpush2.bf16.msra.mxu0 0
          %3861 = vmatprep.subr.bf16.mxu0 0
          %3862 = vmatpush2.bf16.msra.mxu0 0
          %3863 = vmatprep.subr.bf16.mxu0 0
          %3864 = vmatpush2.bf16.msra.mxu0 0
          %3865 = vmatprep.subr.bf16.mxu0 0
          %3866 = vmatpush2.bf16.msra.mxu0 0
          %3867 = vmatprep.subr.bf16.mxu0 0
          %3868 = vmatpush2.bf16.msra.mxu0 0
          %3869 = vmatprep.mubr.bf16.mxu0 0
          %3870 = vmatmul.mubr.bf16.gmra.mxu0 %v3835
          %v3871 = vpop.f32.mrf.mxu0
          %v3872 = vadd.f32 %v3808, %v3871
          %v3873 = vpop.f32.mrf.mxu0
          %v3874 = vpop.f32.mrf.mxu0
          %v3875 = vpop.f32.mrf.mxu0
          %3876 = vdwg.mxu0
          %v3877 = vld [vmem:[%s31] sm:$0x1]
          %v3878 = vld [vmem:[%s33] sm:$0x1]
          %v3879 = vsel %vm3006, %v3872, 0.0
          %3880 = vadd.xlane.f32.xlu0 %v3879
          %v3881 = vpop.xlane.xlu0 %3880
          %v3882 = vmul.f32 %v3881, %v3150
          %v3883 = vsub.f32 %v3872, %v3882
          %v3884 = vmul.f32 %v3883, %v3883
          %v3885 = vsel %vm3006, %v3884, 0.0
          %3886 = vadd.xlane.f32.xlu0 %v3885
          %v3887 = vpop.xlane.xlu0 %3886
          %v3888 = vmul.f32 %v3887, %v3150
          %v3889 = vadd.f32 %v3888, 1e-05
          %v3890 = vrsqrt.pop %v3889
          %v3891 = vmul.f32 %v3883, %v3890
          %v3893 = vlaneseq
          %v3894 = vshrl.u32 %v3893, 7
          %v3895 = vsub.s32 0, %v3894
          %v3896 = vrot.slane %v3877, %v3895
          %v3898 = vmul.f32 %v3891, %v3896
          %v3900 = vlaneseq
          %v3901 = vshrl.u32 %v3900, 7
          %v3902 = vsub.s32 0, %v3901
          %v3903 = vrot.slane %v3878, %v3902
          %v3905 = vadd.f32 %v3898, %v3903
          %v3906 = vld [vmem:[%s21] sm:$0xff]
          %v3907 = vld [vmem:[%s21 + $0x8] sm:$0xff]
          %v3908 = vld [vmem:[%s21 + $0x10] sm:$0xff]
          %v3909 = vld [vmem:[%s21 + $0x18] sm:$0xff]
          %v3911 = vsel %vm3006, %v3905, 0
          %3913 = vmatprep.subr.mxu0 0.0
          %3914 = vmatpush1.msra.mxu0 0.0
          %3915 = vmatprep.subr.mxu0 0.0
          %3916 = vmatpush1.msra.mxu0 0.0
          %3917 = vmatprep.subr.mxu0 0.0
          %3918 = vmatpush1.msra.mxu0 0.0
          %3919 = vmatprep.subr.mxu0 0.0
          %3920 = vmatpush1.msra.mxu0 0.0
          %3921 = vmatprep.subr.mxu0 0.0
          %3922 = vmatpush1.msra.mxu0 0.0
          %3923 = vmatprep.subr.mxu0 0.0
          %3924 = vmatpush1.msra.mxu0 0.0
          %3925 = vmatprep.subr.mxu0 0.0
          %3926 = vmatpush1.msra.mxu0 0.0
          %3927 = vmatprep.subr.mxu0 0.0
          %3928 = vmatpush1.msra.mxu0 0.0
          %3929 = vmatprep.subr.mxu0 0.0
          %3930 = vmatpush1.msra.mxu0 0.0
          %3931 = vmatprep.subr.mxu0 0.0
          %3932 = vmatpush1.msra.mxu0 0.0
          %3933 = vmatprep.subr.mxu0 0.0
          %3934 = vmatpush1.msra.mxu0 0.0
          %3935 = vmatprep.subr.mxu0 0.0
          %3936 = vmatpush1.msra.mxu0 0.0
          %3937 = vmatprep.subr.mxu0 0.0
          %3938 = vmatpush1.msra.mxu0 %v3909
          %3939 = vmatprep.subr.mxu0 0.0
          %3940 = vmatpush1.msra.mxu0 %v3908
          %3941 = vmatprep.subr.mxu0 0.0
          %3942 = vmatpush1.msra.mxu0 %v3907
          %3943 = vmatprep.subr.mxu0 0.0
          %3944 = vmatpush1.msra.mxu0 %v3906
          %3945 = vmatprep.subr.mxu0 0.0
          %3946 = vmatpush2.msra.mxu0 0.0
          %3947 = vmatprep.subr.mxu0 0.0
          %3948 = vmatpush2.msra.mxu0 0.0
          %3949 = vmatprep.subr.mxu0 0.0
          %3950 = vmatpush2.msra.mxu0 0.0
          %3951 = vmatprep.subr.mxu0 0.0
          %3952 = vmatpush2.msra.mxu0 0.0
          %3953 = vmatprep.subr.mxu0 0.0
          %3954 = vmatpush2.msra.mxu0 0.0
          %3955 = vmatprep.subr.mxu0 0.0
          %3956 = vmatpush2.msra.mxu0 0.0
          %3957 = vmatprep.subr.mxu0 0.0
          %3958 = vmatpush2.msra.mxu0 0.0
          %3959 = vmatprep.subr.mxu0 0.0
          %3960 = vmatpush2.msra.mxu0 0.0
          %3961 = vmatprep.subr.mxu0 0.0
          %3962 = vmatpush2.msra.mxu0 0.0
          %3963 = vmatprep.subr.mxu0 0.0
          %3964 = vmatpush2.msra.mxu0 0.0
          %3965 = vmatprep.subr.mxu0 0.0
          %3966 = vmatpush2.msra.mxu0 0.0
          %3967 = vmatprep.subr.mxu0 0.0
          %3968 = vmatpush2.msra.mxu0 0.0
          %3969 = vmatprep.subr.mxu0 0.0
          %3970 = vmatpush2.msra.mxu0 0.0
          %3971 = vmatprep.subr.mxu0 0.0
          %3972 = vmatpush2.msra.mxu0 0.0
          %3973 = vmatprep.subr.mxu0 0.0
          %3974 = vmatpush2.msra.mxu0 0.0
          %3975 = vmatprep.subr.mxu0 0.0
          %3976 = vmatpush2.msra.mxu0 0.0
          %3977 = vmatprep.mubr.f32.mxu0 0.0
          %3978 = vmatmul.mubr.f32.gmra.mxu0 %v3911
          %v3979 = vpop.f32.mrf.mxu0
          %v3980 = vadd.f32 0.0, %v3979
          %v3981 = vpop.f32.mrf.mxu0
          %3982 = vdwg.mxu0
          %v3983 = vadd.f32 %v3050, %v3662
          %3984 = vst.msk [vmem:[#allocation11] sm:$0xff] %vm3006, %v3983
          %v3985 = vmul.f32 %v3980, %v3351
          %v3986 = vadd.f32 %v3144, %v3985
          %3987 = vst.msk [vmem:[%s87] sm:$0xff] %vm3100, %v3986
        $region204: #{_lambda_.1} parent=187 // pred_fallthru
          _
        // Predicated region
        $region205: #{_lambda_.1} parent=187 // pred_check
          %p3988 = pneg %p1027
        $region206: #{_lambda_.1} parent=187 // pred_check_branch
          %3990 = sbr.rel (%p3988) target = $region208
        $region207: #{_lambda_.1} parent=187 // pred_region
          %s3992 = ssub.s32 128, 128
          %3993 = vsyncadd [#allocation12], %s3992
          %s3995 = sshll.u32 [#allocation11], 4
          %s3996 = int_to_ptr.vmem [resolvable:$true] %s3995
          %3998 = dma.vmem_to_hbm [thread:$0]  %s3996, 128, %s85, [#allocation12]
        $region208: #{_lambda_.1} parent=187 // pred_fallthru
          _
        // Predicated region
        $region209: #{_lambda_.1} parent=187 // pred_check
          %p3999 = pneg %p1048
        $region210: #{_lambda_.1} parent=187 // pred_check_branch
          %4001 = sbr.rel (%p3999) target = $region212
        $region211: #{_lambda_.1} parent=187 // pred_region
          _
        $region212: #{_lambda_.1} parent=187 // pred_fallthru
          _
        // Predicated region
        $region213: #{_lambda_.1} parent=187 // pred_check
          %p4002 = pneg %p1027
        $region214: #{_lambda_.1} parent=187 // pred_check_branch
          %4004 = sbr.rel (%p4002) target = $region216
        $region215: #{_lambda_.1} parent=187 // pred_region
          %4005 = dma.done [#allocation12], 128
        $region216: #{_lambda_.1} parent=187 // pred_fallthru
          _
        // Predicated region
        $region217: #{_lambda_.1} parent=187 // pred_check
          %p4006 = pneg %p1048
        $region218: #{_lambda_.1} parent=187 // pred_check_branch
          %4008 = sbr.rel (%p4006) target = $region220
        $region219: #{_lambda_.1} parent=187 // pred_region
          _
        $region220: #{_lambda_.1} parent=187 // pred_fallthru
          _
      $region188: #{_lambda_.1} parent=5 // pred_fallthru
        _
      %p4009 = scmp.le.s32.totalorder 2, %s95
      // Predicated region
      $region221: #{_lambda_.1} parent=5 // pred_check
        %p4010 = pneg %p4009
      $region222: #{_lambda_.1} parent=5 // pred_check_branch
        %4012 = sbr.rel (%p4010) target = $region224
      $region223: #{_lambda_.1} parent=5 // pred_region
        %s4013 = ssub.s32 %s95, 2
      $region224: #{_lambda_.1} parent=5 // pred_fallthru
        _
    $region6: #{_lambda_.1} parent=1 // loop_footer
      %s99 = sadd.s32 1, %s95
    $region7: #{_lambda_.1} parent=1 // loop_footer_branch
      %94 = sbr.rel target = $region3
    $region8: #{_lambda_.1} parent=1 // loop_exit
      _
    %4014 = vsyncpa [#allocation12], 1
    %s4015 = scalar_lea.sflag [#allocation12], 1
    %4016 = vsyncpa %s4015, 1

</llo_original>
